<compile_context>
chip_gen: v6e
topology: v6e:2x2x1
jax: 0.10.0
libtpu: 0.0.40
codegen_flags: <defaults>
</compile_context>

<pallas_src>
import functools
import math

import jax
import jax.numpy as jnp
import numpy as np
from jax.experimental import pallas as pl
from jax.experimental.pallas import tpu as pltpu


# -----------------------------------------------------------------------------
# Group setup (plain Python glue, mirrors GeneratorGroup)
# -----------------------------------------------------------------------------
class GeneratorGroup:
    def __init__(self, generators, table, relations):
        self.generators = generators
        self.table = table
        self.relations = relations
        self.size = len(table)


# -----------------------------------------------------------------------------
# Pallas kernel: batched, block-diagonal-packed chain matmul.
#
# Kernel arg order (PrefetchScalarGridSpec):
#   prod_ref : SMEM (B_pad, L) int32 generator indices (padded with id G)
#   w_ref    : VMEM (G+1, m, m) generator matrices (+ identity block at G)
#   o_ref    : VMEM (1, m, chunk*m) lane-dense output slab for this chunk
#   rhs_ref  : VMEM (chunk*m, chunk*m) f32 scratch (block-diagonal RHS)
#   acc_ref  : VMEM (m, chunk*m)      f32 scratch (running accumulators)
# -----------------------------------------------------------------------------
def _chain_kernel(prod_ref, w_ref, o_ref, rhs_ref, acc_ref, *, chunk, m):
    c = pl.program_id(0)
    n_steps = prod_ref.shape[1]          # bucketed -> static trace-time const
    base = c * chunk                     # first chain handled by this step

    # Zero the block-diag scratch every grid step (off-diagonal blocks are
    # only ever read; unconditional zeroing is safe under "parallel" sharding
    # where each TensorCore gets its own scratch with stale contents).
    rhs_ref[...] = jnp.zeros_like(rhs_ref)

    # Seed from step 0 (no identity seed -> one fewer matmul on the serial
    # MXU dependence chain, and no iota/compare/select work for jnp.eye).
    for b in range(chunk):
        g0 = prod_ref[base + b, 0]
        acc_ref[:, pl.ds(b * m, m)] = w_ref[g0].astype(jnp.float32)

    if n_steps > 1:
        @pl.loop(1, n_steps, unroll=(n_steps <= 16))
        def _(step):
            # Gather this step's generator matrix of each chain onto the block
            # diagonal; these small masked stores hide under the MXU latency
            # of the serial chain.
            for b in range(chunk):
                g = prod_ref[base + b, step]
                rhs_ref[pl.ds(b * m, m), pl.ds(b * m, m)] = (
                    w_ref[g].astype(jnp.float32))
            # One wide matmul advances all `chunk` chains by one step.
            acc_ref[...] = jnp.dot(acc_ref[...], rhs_ref[...],
                                   preferred_element_type=jnp.float32)

    # Lane-dense store: (m, chunk*m) slab (128 lanes for m=8).
    o_ref[0] = acc_ref[...].astype(o_ref.dtype)


@functools.partial(jax.jit, static_argnames=("m", "chunk", "out_dtype"))
def _batched_chain_call(prod_idx, w_ext, *, m, chunk, out_dtype):
    """prod_idx: (B_pad, L) int32, B_pad % chunk == 0, padded with id index G.
    w_ext: (G+1, m, m) generator matrices with identity block appended.
    Returns (B_pad, m, m)."""
    b_pad = prod_idx.shape[0]
    num_chunks = b_pad // chunk
    num_w = w_ext.shape[0]

    kernel = functools.partial(_chain_kernel, chunk=chunk, m=m)
    out = pl.pallas_call(
        kernel,
        out_shape=jax.ShapeDtypeStruct((num_chunks, m, chunk * m), out_dtype),
        grid_spec=pltpu.PrefetchScalarGridSpec(
            num_scalar_prefetch=1,
            grid=(num_chunks,),
            in_specs=[
                # whole (G+1, m, m) weight tensor VMEM-resident
                pl.BlockSpec((num_w, m, m), lambda c, prod: (0, 0, 0)),
            ],
            out_specs=pl.BlockSpec((1, m, chunk * m),
                                   lambda c, prod: (c, 0, 0)),
            scratch_shapes=[
                pltpu.VMEM((chunk * m, chunk * m), jnp.float32),  # rhs blkdiag
                pltpu.VMEM((m, chunk * m), jnp.float32),          # accumulators
            ],
        ),
        compiler_params=pltpu.CompilerParams(
            # chunks of chains are independent -> shard across v7x's 2 TCs
            dimension_semantics=("parallel",),
        ),
    )(prod_idx, w_ext)

    # Lane-dense (nc, m, chunk*m) -> (nc*chunk, m, m): free layout plumbing
    # outside the kernel.
    out = out.reshape(num_chunks, m, chunk, m).transpose(0, 2, 1, 3)
    return out.reshape(num_chunks * chunk, m, m)


# -----------------------------------------------------------------------------
# GeneratorModel (JAX/Pallas version)
# -----------------------------------------------------------------------------
class GeneratorModelPallas:
    def __init__(self, group, matrix_size, init_hint=None, key=None):
        self.group = group
        self.m_size = matrix_size
        if init_hint is None:
            if key is None:
                key = jax.random.PRNGKey(0)
            # torch.distributions.Normal(0.0, 0.1).sample((m, G*m))
            self.weights = 0.1 * jax.random.normal(
                key, (matrix_size, len(group.generators) * matrix_size),
                dtype=jnp.float32,
            )
        else:
            init_hint = jnp.asarray(init_hint)
            assert init_hint.shape[0] == matrix_size
            assert init_hint.shape[1] % matrix_size == 0, (
                "init_hint width must be a multiple of matrix_size")
            self.weights = init_hint

        self.num_gen = self.weights.shape[1] // matrix_size

        # (G, m, m) contiguous per-generator blocks, built once; an identity
        # block is appended at index G and used to pad bucketed chain lengths
        # (so padding steps multiply by I and never change the result).
        w_blocks = jnp.transpose(
            self.weights.reshape(matrix_size, self.num_gen, matrix_size),
            (1, 0, 2))
        self.w_blocks_ext = jnp.concatenate(
            [w_blocks,
             jnp.eye(matrix_size, dtype=self.weights.dtype)[None]], axis=0)

        # Chains packed per grid step so the MXU/store tile is >=128 lanes.
        self.chunk = max(1, math.ceil(128 / matrix_size))

    # forward is the identity in the PyTorch module: true no-op here.
    def forward(self, xs):
        return xs

    def get_matrix_for_element(self, element):
        return self.weights[:, element * self.m_size:(element + 1) * self.m_size]

    def get_matrices_of_products(self, products):
        """Batch MANY product chains into ONE pallas_call. Returns (B, m, m)."""
        b = len(products)
        if b == 0:
            return jnp.zeros((0, self.m_size, self.m_size),
                             dtype=self.weights.dtype)
        # Validate generator indices: VMEM reads have no runtime OOB check.
        for p in products:
            for g in p:
                if not (0 <= int(g) < self.num_gen):
                    raise ValueError(
                        f"generator index {g} out of range [0, {self.num_gen})")

        ident = self.num_gen                      # padding index -> identity
        max_len = max((len(p) for p in products), default=0)
        # Bucket length to a power of two so distinct lengths do not recompile.
        l_bucket = int(pl.next_power_of_2(max(1, max_len)))
        b_pad = int(math.ceil(b / self.chunk)) * self.chunk

        idx = np.full((b_pad, l_bucket), ident, dtype=np.int32)
        for i, p in enumerate(products):
            if p:
                idx[i, :len(p)] = np.asarray(p, dtype=np.int32)

        out = _batched_chain_call(
            jnp.asarray(idx), self.w_blocks_ext,
            m=self.m_size, chunk=self.chunk, out_dtype=self.weights.dtype)
        return out[:b]

    def get_matrix_of_product(self, product):
        if not product:
            return jnp.eye(self.m_size, dtype=self.weights.dtype)
        return self.get_matrices_of_products([list(product)])[0]


# -----------------------------------------------------------------------------
# main
# -----------------------------------------------------------------------------
if __name__ == "__main__":
    key = jax.random.PRNGKey(0)
    k_w, k_x = jax.random.split(key)

    # Small synthetic group with 2 generators.
    group = GeneratorGroup(
        generators=[(0,), (1,)],
        table=[[0, 1], [1, 0]],
        relations=[[0, 0], [1, 1, 1]],
    )
    m_size = 8
    model = GeneratorModelPallas(group, m_size, key=k_w)

    # forward: identity on an NCHW-shaped input (true no-op).
    xs = jax.random.normal(k_x, (2, 4, 16, 16), dtype=jnp.float32)
    out = jax.block_until_ready(model.forward(xs))
    assert out.shape == xs.shape and out.dtype == xs.dtype
    np.testing.assert_allclose(np.asarray(out), np.asarray(xs), rtol=0, atol=0)

    # Reference (plain JAX, mirrors get_matrix_of_element_static).
    def ref_product(p):
        r = jnp.eye(m_size, dtype=jnp.float32)
        for e in p:
            r = r @ model.get_matrix_for_element(e)
        return r

    # Single product through the batched kernel.
    product = [0, 1, 0, 1, 1]
    mat = jax.block_until_ready(model.get_matrix_of_product(product))
    np.testing.assert_allclose(np.asarray(mat), np.asarray(ref_product(product)),
                               rtol=1e-5, atol=1e-6)

    # Many products (mixed lengths incl. empty & single) in ONE launch.
    products = [
        [0, 1, 0, 1, 1],
        [1],
        [],
        [0, 0],
        [1, 1, 1],
        [0, 1],
        [1, 0, 1, 0],
        [0, 1, 1, 0, 1, 0, 1],
    ]
    mats = jax.block_until_ready(model.get_matrices_of_products(products))
    assert mats.shape == (len(products), m_size, m_size)
    for i, p in enumerate(products):
        np.testing.assert_allclose(np.asarray(mats[i]),
                                   np.asarray(ref_product(p)),
                                   rtol=1e-5, atol=1e-6)

    # Empty product -> identity (wrapper fast path, no kernel launch).
    mat_empty = jax.block_until_ready(model.get_matrix_of_product([]))
    np.testing.assert_allclose(np.asarray(mat_empty), np.eye(m_size), atol=0)

    print("KERNEL_OK")
</pallas_src>

<mosaic_0001>
module attributes {stable_mosaic.version = 11 : i64} {
  func.func @_chain_kernel(%arg0: i32, %arg1: memref<16x8xi32, #tpu.memory_space<smem>>, %arg2: memref<3x8x8xf32, #tpu.memory_space<vmem>>, %arg3: memref<1x8x128xf32, #tpu.memory_space<vmem>>, %arg4: memref<128x128xf32, #tpu.memory_space<vmem>>, %arg5: memref<8x128xf32, #tpu.memory_space<vmem>>) attributes {dimension_semantics = [#tpu.dimension_semantics<parallel>], iteration_bounds = array<i64: 1>, scalar_prefetch = 1 : i64, scratch_operands = 2 : i64, tpu.core_type = #tpu.core_type<tc>, window_params = [{pipeline_mode = #tpu.pipeline_mode<synchronous>, transform_indices = @transform_0, window_bounds = array<i64: 3, 8, 8>}, {transform_indices = @transform_1, window_bounds = array<i64: 1, 8, 128>}]} {
    %c16_i32 = arith.constant 16 : i32
    %0 = arith.muli %arg0, %c16_i32 : i32
    %cst = arith.constant 0.000000e+00 : f32
    %1 = vector.broadcast %cst : f32 to vector<128x128xf32>
    %c0 = arith.constant 0 : index
    %c0_0 = arith.constant 0 : index
    %2 = vector.load %arg4[%c0, %c0_0] : memref<128x128xf32, #tpu.memory_space<vmem>>, vector<128x128xf32>
    tpu.vector_store %arg4[%c0, %c0_0], %1 {strides = array<i32>} : memref<128x128xf32, #tpu.memory_space<vmem>>, vector<128x128xf32>,
    %c0_i32 = arith.constant 0 : i32
    %3 = arith.addi %0, %c0_i32 : i32
    %4 = arith.index_cast %3 : i32 to index
    %c0_1 = arith.constant 0 : index
    %5 = memref.load %arg1[%4, %c0_1] : memref<16x8xi32, #tpu.memory_space<smem>>
    %6 = arith.index_cast %5 : i32 to index
    %c0_2 = arith.constant 0 : index
    %c0_3 = arith.constant 0 : index
    %7 = vector.load %arg2[%6, %c0_2, %c0_3] : memref<3x8x8xf32, #tpu.memory_space<vmem>>, vector<1x8x8xf32>
    %8 = vector.shape_cast %7 : vector<1x8x8xf32> to vector<8x8xf32>
    %c0_4 = arith.constant 0 : index
    %c0_5 = arith.constant 0 : index
    %9 = vector.load %arg5[%c0_4, %c0_5] : memref<8x128xf32, #tpu.memory_space<vmem>>, vector<8x8xf32>
    tpu.vector_store %arg5[%c0_4, %c0_5], %8 {strides = array<i32>} : memref<8x128xf32, #tpu.memory_space<vmem>>, vector<8x8xf32>,
    %c1_i32 = arith.constant 1 : i32
    %10 = arith.addi %0, %c1_i32 : i32
    %11 = arith.index_cast %10 : i32 to index
    %c0_6 = arith.constant 0 : index
    %12 = memref.load %arg1[%11, %c0_6] : memref<16x8xi32, #tpu.memory_space<smem>>
    %13 = arith.index_cast %12 : i32 to index
    %c0_7 = arith.constant 0 : index
    %c0_8 = arith.constant 0 : index
    %14 = vector.load %arg2[%13, %c0_7, %c0_8] : memref<3x8x8xf32, #tpu.memory_space<vmem>>, vector<1x8x8xf32>
    %15 = vector.shape_cast %14 : vector<1x8x8xf32> to vector<8x8xf32>
    %c0_9 = arith.constant 0 : index
    %c8 = arith.constant 8 : index
    %16 = vector.load %arg5[%c0_9, %c8] : memref<8x128xf32, #tpu.memory_space<vmem>>, vector<8x8xf32>
    tpu.vector_store %arg5[%c0_9, %c8], %15 {strides = array<i32>} : memref<8x128xf32, #tpu.memory_space<vmem>>, vector<8x8xf32>,
    %c2_i32 = arith.constant 2 : i32
    %17 = arith.addi %0, %c2_i32 : i32
    %18 = arith.index_cast %17 : i32 to index
    %c0_10 = arith.constant 0 : index
    %19 = memref.load %arg1[%18, %c0_10] : memref<16x8xi32, #tpu.memory_space<smem>>
    %20 = arith.index_cast %19 : i32 to index
    %c0_11 = arith.constant 0 : index
    %c0_12 = arith.constant 0 : index
    %21 = vector.load %arg2[%20, %c0_11, %c0_12] : memref<3x8x8xf32, #tpu.memory_space<vmem>>, vector<1x8x8xf32>
    %22 = vector.shape_cast %21 : vector<1x8x8xf32> to vector<8x8xf32>
    %c0_13 = arith.constant 0 : index
    %c16 = arith.constant 16 : index
    %23 = vector.load %arg5[%c0_13, %c16] : memref<8x128xf32, #tpu.memory_space<vmem>>, vector<8x8xf32>
    tpu.vector_store %arg5[%c0_13, %c16], %22 {strides = array<i32>} : memref<8x128xf32, #tpu.memory_space<vmem>>, vector<8x8xf32>,
    %c3_i32 = arith.constant 3 : i32
    %24 = arith.addi %0, %c3_i32 : i32
    %25 = arith.index_cast %24 : i32 to index
    %c0_14 = arith.constant 0 : index
    %26 = memref.load %arg1[%25, %c0_14] : memref<16x8xi32, #tpu.memory_space<smem>>
    %27 = arith.index_cast %26 : i32 to index
    %c0_15 = arith.constant 0 : index
    %c0_16 = arith.constant 0 : index
    %28 = vector.load %arg2[%27, %c0_15, %c0_16] : memref<3x8x8xf32, #tpu.memory_space<vmem>>, vector<1x8x8xf32>
    %29 = vector.shape_cast %28 : vector<1x8x8xf32> to vector<8x8xf32>
    %c0_17 = arith.constant 0 : index
    %c24 = arith.constant 24 : index
    %30 = vector.load %arg5[%c0_17, %c24] : memref<8x128xf32, #tpu.memory_space<vmem>>, vector<8x8xf32>
    tpu.vector_store %arg5[%c0_17, %c24], %29 {strides = array<i32>} : memref<8x128xf32, #tpu.memory_space<vmem>>, vector<8x8xf32>,
    %c4_i32 = arith.constant 4 : i32
    %31 = arith.addi %0, %c4_i32 : i32
    %32 = arith.index_cast %31 : i32 to index
    %c0_18 = arith.constant 0 : index
    %33 = memref.load %arg1[%32, %c0_18] : memref<16x8xi32, #tpu.memory_space<smem>>
    %34 = arith.index_cast %33 : i32 to index
    %c0_19 = arith.constant 0 : index
    %c0_20 = arith.constant 0 : index
    %35 = vector.load %arg2[%34, %c0_19, %c0_20] : memref<3x8x8xf32, #tpu.memory_space<vmem>>, vector<1x8x8xf32>
    %36 = vector.shape_cast %35 : vector<1x8x8xf32> to vector<8x8xf32>
    %c0_21 = arith.constant 0 : index
    %c32 = arith.constant 32 : index
    %37 = vector.load %arg5[%c0_21, %c32] : memref<8x128xf32, #tpu.memory_space<vmem>>, vector<8x8xf32>
    tpu.vector_store %arg5[%c0_21, %c32], %36 {strides = array<i32>} : memref<8x128xf32, #tpu.memory_space<vmem>>, vector<8x8xf32>,
    %c5_i32 = arith.constant 5 : i32
    %38 = arith.addi %0, %c5_i32 : i32
    %39 = arith.index_cast %38 : i32 to index
    %c0_22 = arith.constant 0 : index
    %40 = memref.load %arg1[%39, %c0_22] : memref<16x8xi32, #tpu.memory_space<smem>>
    %41 = arith.index_cast %40 : i32 to index
    %c0_23 = arith.constant 0 : index
    %c0_24 = arith.constant 0 : index
    %42 = vector.load %arg2[%41, %c0_23, %c0_24] : memref<3x8x8xf32, #tpu.memory_space<vmem>>, vector<1x8x8xf32>
    %43 = vector.shape_cast %42 : vector<1x8x8xf32> to vector<8x8xf32>
    %c0_25 = arith.constant 0 : index
    %c40 = arith.constant 40 : index
    %44 = vector.load %arg5[%c0_25, %c40] : memref<8x128xf32, #tpu.memory_space<vmem>>, vector<8x8xf32>
    tpu.vector_store %arg5[%c0_25, %c40], %43 {strides = array<i32>} : memref<8x128xf32, #tpu.memory_space<vmem>>, vector<8x8xf32>,
    %c6_i32 = arith.constant 6 : i32
    %45 = arith.addi %0, %c6_i32 : i32
    %46 = arith.index_cast %45 : i32 to index
    %c0_26 = arith.constant 0 : index
    %47 = memref.load %arg1[%46, %c0_26] : memref<16x8xi32, #tpu.memory_space<smem>>
    %48 = arith.index_cast %47 : i32 to index
    %c0_27 = arith.constant 0 : index
    %c0_28 = arith.constant 0 : index
    %49 = vector.load %arg2[%48, %c0_27, %c0_28] : memref<3x8x8xf32, #tpu.memory_space<vmem>>, vector<1x8x8xf32>
    %50 = vector.shape_cast %49 : vector<1x8x8xf32> to vector<8x8xf32>
    %c0_29 = arith.constant 0 : index
    %c48 = arith.constant 48 : index
    %51 = vector.load %arg5[%c0_29, %c48] : memref<8x128xf32, #tpu.memory_space<vmem>>, vector<8x8xf32>
    tpu.vector_store %arg5[%c0_29, %c48], %50 {strides = array<i32>} : memref<8x128xf32, #tpu.memory_space<vmem>>, vector<8x8xf32>,
    %c7_i32 = arith.constant 7 : i32
    %52 = arith.addi %0, %c7_i32 : i32
    %53 = arith.index_cast %52 : i32 to index
    %c0_30 = arith.constant 0 : index
    %54 = memref.load %arg1[%53, %c0_30] : memref<16x8xi32, #tpu.memory_space<smem>>
    %55 = arith.index_cast %54 : i32 to index
    %c0_31 = arith.constant 0 : index
    %c0_32 = arith.constant 0 : index
    %56 = vector.load %arg2[%55, %c0_31, %c0_32] : memref<3x8x8xf32, #tpu.memory_space<vmem>>, vector<1x8x8xf32>
    %57 = vector.shape_cast %56 : vector<1x8x8xf32> to vector<8x8xf32>
    %c0_33 = arith.constant 0 : index
    %c56 = arith.constant 56 : index
    %58 = vector.load %arg5[%c0_33, %c56] : memref<8x128xf32, #tpu.memory_space<vmem>>, vector<8x8xf32>
    tpu.vector_store %arg5[%c0_33, %c56], %57 {strides = array<i32>} : memref<8x128xf32, #tpu.memory_space<vmem>>, vector<8x8xf32>,
    %c8_i32 = arith.constant 8 : i32
    %59 = arith.addi %0, %c8_i32 : i32
    %60 = arith.index_cast %59 : i32 to index
    %c0_34 = arith.constant 0 : index
    %61 = memref.load %arg1[%60, %c0_34] : memref<16x8xi32, #tpu.memory_space<smem>>
    %62 = arith.index_cast %61 : i32 to index
    %c0_35 = arith.constant 0 : index
    %c0_36 = arith.constant 0 : index
    %63 = vector.load %arg2[%62, %c0_35, %c0_36] : memref<3x8x8xf32, #tpu.memory_space<vmem>>, vector<1x8x8xf32>
    %64 = vector.shape_cast %63 : vector<1x8x8xf32> to vector<8x8xf32>
    %c0_37 = arith.constant 0 : index
    %c64 = arith.constant 64 : index
    %65 = vector.load %arg5[%c0_37, %c64] : memref<8x128xf32, #tpu.memory_space<vmem>>, vector<8x8xf32>
    tpu.vector_store %arg5[%c0_37, %c64], %64 {strides = array<i32>} : memref<8x128xf32, #tpu.memory_space<vmem>>, vector<8x8xf32>,
    %c9_i32 = arith.constant 9 : i32
    %66 = arith.addi %0, %c9_i32 : i32
    %67 = arith.index_cast %66 : i32 to index
    %c0_38 = arith.constant 0 : index
    %68 = memref.load %arg1[%67, %c0_38] : memref<16x8xi32, #tpu.memory_space<smem>>
    %69 = arith.index_cast %68 : i32 to index
    %c0_39 = arith.constant 0 : index
    %c0_40 = arith.constant 0 : index
    %70 = vector.load %arg2[%69, %c0_39, %c0_40] : memref<3x8x8xf32, #tpu.memory_space<vmem>>, vector<1x8x8xf32>
    %71 = vector.shape_cast %70 : vector<1x8x8xf32> to vector<8x8xf32>
    %c0_41 = arith.constant 0 : index
    %c72 = arith.constant 72 : index
    %72 = vector.load %arg5[%c0_41, %c72] : memref<8x128xf32, #tpu.memory_space<vmem>>, vector<8x8xf32>
    tpu.vector_store %arg5[%c0_41, %c72], %71 {strides = array<i32>} : memref<8x128xf32, #tpu.memory_space<vmem>>, vector<8x8xf32>,
    %c10_i32 = arith.constant 10 : i32
    %73 = arith.addi %0, %c10_i32 : i32
    %74 = arith.index_cast %73 : i32 to index
    %c0_42 = arith.constant 0 : index
    %75 = memref.load %arg1[%74, %c0_42] : memref<16x8xi32, #tpu.memory_space<smem>>
    %76 = arith.index_cast %75 : i32 to index
    %c0_43 = arith.constant 0 : index
    %c0_44 = arith.constant 0 : index
    %77 = vector.load %arg2[%76, %c0_43, %c0_44] : memref<3x8x8xf32, #tpu.memory_space<vmem>>, vector<1x8x8xf32>
    %78 = vector.shape_cast %77 : vector<1x8x8xf32> to vector<8x8xf32>
    %c0_45 = arith.constant 0 : index
    %c80 = arith.constant 80 : index
    %79 = vector.load %arg5[%c0_45, %c80] : memref<8x128xf32, #tpu.memory_space<vmem>>, vector<8x8xf32>
    tpu.vector_store %arg5[%c0_45, %c80], %78 {strides = array<i32>} : memref<8x128xf32, #tpu.memory_space<vmem>>, vector<8x8xf32>,
    %c11_i32 = arith.constant 11 : i32
    %80 = arith.addi %0, %c11_i32 : i32
    %81 = arith.index_cast %80 : i32 to index
    %c0_46 = arith.constant 0 : index
    %82 = memref.load %arg1[%81, %c0_46] : memref<16x8xi32, #tpu.memory_space<smem>>
    %83 = arith.index_cast %82 : i32 to index
    %c0_47 = arith.constant 0 : index
    %c0_48 = arith.constant 0 : index
    %84 = vector.load %arg2[%83, %c0_47, %c0_48] : memref<3x8x8xf32, #tpu.memory_space<vmem>>, vector<1x8x8xf32>
    %85 = vector.shape_cast %84 : vector<1x8x8xf32> to vector<8x8xf32>
    %c0_49 = arith.constant 0 : index
    %c88 = arith.constant 88 : index
    %86 = vector.load %arg5[%c0_49, %c88] : memref<8x128xf32, #tpu.memory_space<vmem>>, vector<8x8xf32>
    tpu.vector_store %arg5[%c0_49, %c88], %85 {strides = array<i32>} : memref<8x128xf32, #tpu.memory_space<vmem>>, vector<8x8xf32>,
    %c12_i32 = arith.constant 12 : i32
    %87 = arith.addi %0, %c12_i32 : i32
    %88 = arith.index_cast %87 : i32 to index
    %c0_50 = arith.constant 0 : index
    %89 = memref.load %arg1[%88, %c0_50] : memref<16x8xi32, #tpu.memory_space<smem>>
    %90 = arith.index_cast %89 : i32 to index
    %c0_51 = arith.constant 0 : index
    %c0_52 = arith.constant 0 : index
    %91 = vector.load %arg2[%90, %c0_51, %c0_52] : memref<3x8x8xf32, #tpu.memory_space<vmem>>, vector<1x8x8xf32>
    %92 = vector.shape_cast %91 : vector<1x8x8xf32> to vector<8x8xf32>
    %c0_53 = arith.constant 0 : index
    %c96 = arith.constant 96 : index
    %93 = vector.load %arg5[%c0_53, %c96] : memref<8x128xf32, #tpu.memory_space<vmem>>, vector<8x8xf32>
    tpu.vector_store %arg5[%c0_53, %c96], %92 {strides = array<i32>} : memref<8x128xf32, #tpu.memory_space<vmem>>, vector<8x8xf32>,
    %c13_i32 = arith.constant 13 : i32
    %94 = arith.addi %0, %c13_i32 : i32
    %95 = arith.index_cast %94 : i32 to index
    %c0_54 = arith.constant 0 : index
    %96 = memref.load %arg1[%95, %c0_54] : memref<16x8xi32, #tpu.memory_space<smem>>
    %97 = arith.index_cast %96 : i32 to index
    %c0_55 = arith.constant 0 : index
    %c0_56 = arith.constant 0 : index
    %98 = vector.load %arg2[%97, %c0_55, %c0_56] : memref<3x8x8xf32, #tpu.memory_space<vmem>>, vector<1x8x8xf32>
    %99 = vector.shape_cast %98 : vector<1x8x8xf32> to vector<8x8xf32>
    %c0_57 = arith.constant 0 : index
    %c104 = arith.constant 104 : index
    %100 = vector.load %arg5[%c0_57, %c104] : memref<8x128xf32, #tpu.memory_space<vmem>>, vector<8x8xf32>
    tpu.vector_store %arg5[%c0_57, %c104], %99 {strides = array<i32>} : memref<8x128xf32, #tpu.memory_space<vmem>>, vector<8x8xf32>,
    %c14_i32 = arith.constant 14 : i32
    %101 = arith.addi %0, %c14_i32 : i32
    %102 = arith.index_cast %101 : i32 to index
    %c0_58 = arith.constant 0 : index
    %103 = memref.load %arg1[%102, %c0_58] : memref<16x8xi32, #tpu.memory_space<smem>>
    %104 = arith.index_cast %103 : i32 to index
    %c0_59 = arith.constant 0 : index
    %c0_60 = arith.constant 0 : index
    %105 = vector.load %arg2[%104, %c0_59, %c0_60] : memref<3x8x8xf32, #tpu.memory_space<vmem>>, vector<1x8x8xf32>
    %106 = vector.shape_cast %105 : vector<1x8x8xf32> to vector<8x8xf32>
    %c0_61 = arith.constant 0 : index
    %c112 = arith.constant 112 : index
    %107 = vector.load %arg5[%c0_61, %c112] : memref<8x128xf32, #tpu.memory_space<vmem>>, vector<8x8xf32>
    tpu.vector_store %arg5[%c0_61, %c112], %106 {strides = array<i32>} : memref<8x128xf32, #tpu.memory_space<vmem>>, vector<8x8xf32>,
    %c15_i32 = arith.constant 15 : i32
    %108 = arith.addi %0, %c15_i32 : i32
    %109 = arith.index_cast %108 : i32 to index
    %c0_62 = arith.constant 0 : index
    %110 = memref.load %arg1[%109, %c0_62] : memref<16x8xi32, #tpu.memory_space<smem>>
    %111 = arith.index_cast %110 : i32 to index
    %c0_63 = arith.constant 0 : index
    %c0_64 = arith.constant 0 : index
    %112 = vector.load %arg2[%111, %c0_63, %c0_64] : memref<3x8x8xf32, #tpu.memory_space<vmem>>, vector<1x8x8xf32>
    %113 = vector.shape_cast %112 : vector<1x8x8xf32> to vector<8x8xf32>
    %c0_65 = arith.constant 0 : index
    %c120 = arith.constant 120 : index
    %114 = vector.load %arg5[%c0_65, %c120] : memref<8x128xf32, #tpu.memory_space<vmem>>, vector<8x8xf32>
    tpu.vector_store %arg5[%c0_65, %c120], %113 {strides = array<i32>} : memref<8x128xf32, #tpu.memory_space<vmem>>, vector<8x8xf32>,
    %c0_i32_66 = arith.constant 0 : i32
    %c1_i32_67 = arith.constant 1 : i32
    %115 = arith.muli %c0_i32_66, %c1_i32_67 : i32
    %c1_i32_68 = arith.constant 1 : i32
    %116 = arith.addi %c1_i32_68, %115 : i32
    %c0_i32_69 = arith.constant 0 : i32
    %117 = arith.addi %0, %c0_i32_69 : i32
    %118 = arith.index_cast %117 : i32 to index
    %119 = arith.index_cast %116 : i32 to index
    %120 = memref.load %arg1[%118, %119] : memref<16x8xi32, #tpu.memory_space<smem>>
    %121 = arith.index_cast %120 : i32 to index
    %c0_70 = arith.constant 0 : index
    %c0_71 = arith.constant 0 : index
    %122 = vector.load %arg2[%121, %c0_70, %c0_71] : memref<3x8x8xf32, #tpu.memory_space<vmem>>, vector<1x8x8xf32>
    %123 = vector.shape_cast %122 : vector<1x8x8xf32> to vector<8x8xf32>
    %c0_72 = arith.constant 0 : index
    %c0_73 = arith.constant 0 : index
    %124 = vector.load %arg4[%c0_72, %c0_73] : memref<128x128xf32, #tpu.memory_space<vmem>>, vector<8x8xf32>
    tpu.vector_store %arg4[%c0_72, %c0_73], %123 {strides = array<i32>} : memref<128x128xf32, #tpu.memory_space<vmem>>, vector<8x8xf32>,
    %c1_i32_74 = arith.constant 1 : i32
    %125 = arith.addi %0, %c1_i32_74 : i32
    %126 = arith.index_cast %125 : i32 to index
    %127 = arith.index_cast %116 : i32 to index
    %128 = memref.load %arg1[%126, %127] : memref<16x8xi32, #tpu.memory_space<smem>>
    %129 = arith.index_cast %128 : i32 to index
    %c0_75 = arith.constant 0 : index
    %c0_76 = arith.constant 0 : index
    %130 = vector.load %arg2[%129, %c0_75, %c0_76] : memref<3x8x8xf32, #tpu.memory_space<vmem>>, vector<1x8x8xf32>
    %131 = vector.shape_cast %130 : vector<1x8x8xf32> to vector<8x8xf32>
    %c8_77 = arith.constant 8 : index
    %c8_78 = arith.constant 8 : index
    %132 = vector.load %arg4[%c8_77, %c8_78] : memref<128x128xf32, #tpu.memory_space<vmem>>, vector<8x8xf32>
    tpu.vector_store %arg4[%c8_77, %c8_78], %131 {strides = array<i32>} : memref<128x128xf32, #tpu.memory_space<vmem>>, vector<8x8xf32>,
    %c2_i32_79 = arith.constant 2 : i32
    %133 = arith.addi %0, %c2_i32_79 : i32
    %134 = arith.index_cast %133 : i32 to index
    %135 = arith.index_cast %116 : i32 to index
    %136 = memref.load %arg1[%134, %135] : memref<16x8xi32, #tpu.memory_space<smem>>
    %137 = arith.index_cast %136 : i32 to index
    %c0_80 = arith.constant 0 : index
    %c0_81 = arith.constant 0 : index
    %138 = vector.load %arg2[%137, %c0_80, %c0_81] : memref<3x8x8xf32, #tpu.memory_space<vmem>>, vector<1x8x8xf32>
    %139 = vector.shape_cast %138 : vector<1x8x8xf32> to vector<8x8xf32>
    %c16_82 = arith.constant 16 : index
    %c16_83 = arith.constant 16 : index
    %140 = vector.load %arg4[%c16_82, %c16_83] : memref<128x128xf32, #tpu.memory_space<vmem>>, vector<8x8xf32>
    tpu.vector_store %arg4[%c16_82, %c16_83], %139 {strides = array<i32>} : memref<128x128xf32, #tpu.memory_space<vmem>>, vector<8x8xf32>,
    %c3_i32_84 = arith.constant 3 : i32
    %141 = arith.addi %0, %c3_i32_84 : i32
    %142 = arith.index_cast %141 : i32 to index
    %143 = arith.index_cast %116 : i32 to index
    %144 = memref.load %arg1[%142, %143] : memref<16x8xi32, #tpu.memory_space<smem>>
    %145 = arith.index_cast %144 : i32 to index
    %c0_85 = arith.constant 0 : index
    %c0_86 = arith.constant 0 : index
    %146 = vector.load %arg2[%145, %c0_85, %c0_86] : memref<3x8x8xf32, #tpu.memory_space<vmem>>, vector<1x8x8xf32>
    %147 = vector.shape_cast %146 : vector<1x8x8xf32> to vector<8x8xf32>
    %c24_87 = arith.constant 24 : index
    %c24_88 = arith.constant 24 : index
    %148 = vector.load %arg4[%c24_87, %c24_88] : memref<128x128xf32, #tpu.memory_space<vmem>>, vector<8x8xf32>
    tpu.vector_store %arg4[%c24_87, %c24_88], %147 {strides = array<i32>} : memref<128x128xf32, #tpu.memory_space<vmem>>, vector<8x8xf32>,
    %c4_i32_89 = arith.constant 4 : i32
    %149 = arith.addi %0, %c4_i32_89 : i32
    %150 = arith.index_cast %149 : i32 to index
    %151 = arith.index_cast %116 : i32 to index
    %152 = memref.load %arg1[%150, %151] : memref<16x8xi32, #tpu.memory_space<smem>>
    %153 = arith.index_cast %152 : i32 to index
    %c0_90 = arith.constant 0 : index
    %c0_91 = arith.constant 0 : index
    %154 = vector.load %arg2[%153, %c0_90, %c0_91] : memref<3x8x8xf32, #tpu.memory_space<vmem>>, vector<1x8x8xf32>
    %155 = vector.shape_cast %154 : vector<1x8x8xf32> to vector<8x8xf32>
    %c32_92 = arith.constant 32 : index
    %c32_93 = arith.constant 32 : index
    %156 = vector.load %arg4[%c32_92, %c32_93] : memref<128x128xf32, #tpu.memory_space<vmem>>, vector<8x8xf32>
    tpu.vector_store %arg4[%c32_92, %c32_93], %155 {strides = array<i32>} : memref<128x128xf32, #tpu.memory_space<vmem>>, vector<8x8xf32>,
    %c5_i32_94 = arith.constant 5 : i32
    %157 = arith.addi %0, %c5_i32_94 : i32
    %158 = arith.index_cast %157 : i32 to index
    %159 = arith.index_cast %116 : i32 to index
    %160 = memref.load %arg1[%158, %159] : memref<16x8xi32, #tpu.memory_space<smem>>
    %161 = arith.index_cast %160 : i32 to index
    %c0_95 = arith.constant 0 : index
    %c0_96 = arith.constant 0 : index
    %162 = vector.load %arg2[%161, %c0_95, %c0_96] : memref<3x8x8xf32, #tpu.memory_space<vmem>>, vector<1x8x8xf32>
    %163 = vector.shape_cast %162 : vector<1x8x8xf32> to vector<8x8xf32>
    %c40_97 = arith.constant 40 : index
    %c40_98 = arith.constant 40 : index
    %164 = vector.load %arg4[%c40_97, %c40_98] : memref<128x128xf32, #tpu.memory_space<vmem>>, vector<8x8xf32>
    tpu.vector_store %arg4[%c40_97, %c40_98], %163 {strides = array<i32>} : memref<128x128xf32, #tpu.memory_space<vmem>>, vector<8x8xf32>,
    %c6_i32_99 = arith.constant 6 : i32
    %165 = arith.addi %0, %c6_i32_99 : i32
    %166 = arith.index_cast %165 : i32 to index
    %167 = arith.index_cast %116 : i32 to index
    %168 = memref.load %arg1[%166, %167] : memref<16x8xi32, #tpu.memory_space<smem>>
    %169 = arith.index_cast %168 : i32 to index
    %c0_100 = arith.constant 0 : index
    %c0_101 = arith.constant 0 : index
    %170 = vector.load %arg2[%169, %c0_100, %c0_101] : memref<3x8x8xf32, #tpu.memory_space<vmem>>, vector<1x8x8xf32>
    %171 = vector.shape_cast %170 : vector<1x8x8xf32> to vector<8x8xf32>
    %c48_102 = arith.constant 48 : index
    %c48_103 = arith.constant 48 : index
    %172 = vector.load %arg4[%c48_102, %c48_103] : memref<128x128xf32, #tpu.memory_space<vmem>>, vector<8x8xf32>
    tpu.vector_store %arg4[%c48_102, %c48_103], %171 {strides = array<i32>} : memref<128x128xf32, #tpu.memory_space<vmem>>, vector<8x8xf32>,
    %c7_i32_104 = arith.constant 7 : i32
    %173 = arith.addi %0, %c7_i32_104 : i32
    %174 = arith.index_cast %173 : i32 to index
    %175 = arith.index_cast %116 : i32 to index
    %176 = memref.load %arg1[%174, %175] : memref<16x8xi32, #tpu.memory_space<smem>>
    %177 = arith.index_cast %176 : i32 to index
    %c0_105 = arith.constant 0 : index
    %c0_106 = arith.constant 0 : index
    %178 = vector.load %arg2[%177, %c0_105, %c0_106] : memref<3x8x8xf32, #tpu.memory_space<vmem>>, vector<1x8x8xf32>
    %179 = vector.shape_cast %178 : vector<1x8x8xf32> to vector<8x8xf32>
    %c56_107 = arith.constant 56 : index
    %c56_108 = arith.constant 56 : index
    %180 = vector.load %arg4[%c56_107, %c56_108] : memref<128x128xf32, #tpu.memory_space<vmem>>, vector<8x8xf32>
    tpu.vector_store %arg4[%c56_107, %c56_108], %179 {strides = array<i32>} : memref<128x128xf32, #tpu.memory_space<vmem>>, vector<8x8xf32>,
    %c8_i32_109 = arith.constant 8 : i32
    %181 = arith.addi %0, %c8_i32_109 : i32
    %182 = arith.index_cast %181 : i32 to index
    %183 = arith.index_cast %116 : i32 to index
    %184 = memref.load %arg1[%182, %183] : memref<16x8xi32, #tpu.memory_space<smem>>
    %185 = arith.index_cast %184 : i32 to index
    %c0_110 = arith.constant 0 : index
    %c0_111 = arith.constant 0 : index
    %186 = vector.load %arg2[%185, %c0_110, %c0_111] : memref<3x8x8xf32, #tpu.memory_space<vmem>>, vector<1x8x8xf32>
    %187 = vector.shape_cast %186 : vector<1x8x8xf32> to vector<8x8xf32>
    %c64_112 = arith.constant 64 : index
    %c64_113 = arith.constant 64 : index
    %188 = vector.load %arg4[%c64_112, %c64_113] : memref<128x128xf32, #tpu.memory_space<vmem>>, vector<8x8xf32>
    tpu.vector_store %arg4[%c64_112, %c64_113], %187 {strides = array<i32>} : memref<128x128xf32, #tpu.memory_space<vmem>>, vector<8x8xf32>,
    %c9_i32_114 = arith.constant 9 : i32
    %189 = arith.addi %0, %c9_i32_114 : i32
    %190 = arith.index_cast %189 : i32 to index
    %191 = arith.index_cast %116 : i32 to index
    %192 = memref.load %arg1[%190, %191] : memref<16x8xi32, #tpu.memory_space<smem>>
    %193 = arith.index_cast %192 : i32 to index
    %c0_115 = arith.constant 0 : index
    %c0_116 = arith.constant 0 : index
    %194 = vector.load %arg2[%193, %c0_115, %c0_116] : memref<3x8x8xf32, #tpu.memory_space<vmem>>, vector<1x8x8xf32>
    %195 = vector.shape_cast %194 : vector<1x8x8xf32> to vector<8x8xf32>
    %c72_117 = arith.constant 72 : index
    %c72_118 = arith.constant 72 : index
    %196 = vector.load %arg4[%c72_117, %c72_118] : memref<128x128xf32, #tpu.memory_space<vmem>>, vector<8x8xf32>
    tpu.vector_store %arg4[%c72_117, %c72_118], %195 {strides = array<i32>} : memref<128x128xf32, #tpu.memory_space<vmem>>, vector<8x8xf32>,
    %c10_i32_119 = arith.constant 10 : i32
    %197 = arith.addi %0, %c10_i32_119 : i32
    %198 = arith.index_cast %197 : i32 to index
    %199 = arith.index_cast %116 : i32 to index
    %200 = memref.load %arg1[%198, %199] : memref<16x8xi32, #tpu.memory_space<smem>>
    %201 = arith.index_cast %200 : i32 to index
    %c0_120 = arith.constant 0 : index
    %c0_121 = arith.constant 0 : index
    %202 = vector.load %arg2[%201, %c0_120, %c0_121] : memref<3x8x8xf32, #tpu.memory_space<vmem>>, vector<1x8x8xf32>
    %203 = vector.shape_cast %202 : vector<1x8x8xf32> to vector<8x8xf32>
    %c80_122 = arith.constant 80 : index
    %c80_123 = arith.constant 80 : index
    %204 = vector.load %arg4[%c80_122, %c80_123] : memref<128x128xf32, #tpu.memory_space<vmem>>, vector<8x8xf32>
    tpu.vector_store %arg4[%c80_122, %c80_123], %203 {strides = array<i32>} : memref<128x128xf32, #tpu.memory_space<vmem>>, vector<8x8xf32>,
    %c11_i32_124 = arith.constant 11 : i32
    %205 = arith.addi %0, %c11_i32_124 : i32
    %206 = arith.index_cast %205 : i32 to index
    %207 = arith.index_cast %116 : i32 to index
    %208 = memref.load %arg1[%206, %207] : memref<16x8xi32, #tpu.memory_space<smem>>
    %209 = arith.index_cast %208 : i32 to index
    %c0_125 = arith.constant 0 : index
    %c0_126 = arith.constant 0 : index
    %210 = vector.load %arg2[%209, %c0_125, %c0_126] : memref<3x8x8xf32, #tpu.memory_space<vmem>>, vector<1x8x8xf32>
    %211 = vector.shape_cast %210 : vector<1x8x8xf32> to vector<8x8xf32>
    %c88_127 = arith.constant 88 : index
    %c88_128 = arith.constant 88 : index
    %212 = vector.load %arg4[%c88_127, %c88_128] : memref<128x128xf32, #tpu.memory_space<vmem>>, vector<8x8xf32>
    tpu.vector_store %arg4[%c88_127, %c88_128], %211 {strides = array<i32>} : memref<128x128xf32, #tpu.memory_space<vmem>>, vector<8x8xf32>,
    %c12_i32_129 = arith.constant 12 : i32
    %213 = arith.addi %0, %c12_i32_129 : i32
    %214 = arith.index_cast %213 : i32 to index
    %215 = arith.index_cast %116 : i32 to index
    %216 = memref.load %arg1[%214, %215] : memref<16x8xi32, #tpu.memory_space<smem>>
    %217 = arith.index_cast %216 : i32 to index
    %c0_130 = arith.constant 0 : index
    %c0_131 = arith.constant 0 : index
    %218 = vector.load %arg2[%217, %c0_130, %c0_131] : memref<3x8x8xf32, #tpu.memory_space<vmem>>, vector<1x8x8xf32>
    %219 = vector.shape_cast %218 : vector<1x8x8xf32> to vector<8x8xf32>
    %c96_132 = arith.constant 96 : index
    %c96_133 = arith.constant 96 : index
    %220 = vector.load %arg4[%c96_132, %c96_133] : memref<128x128xf32, #tpu.memory_space<vmem>>, vector<8x8xf32>
    tpu.vector_store %arg4[%c96_132, %c96_133], %219 {strides = array<i32>} : memref<128x128xf32, #tpu.memory_space<vmem>>, vector<8x8xf32>,
    %c13_i32_134 = arith.constant 13 : i32
    %221 = arith.addi %0, %c13_i32_134 : i32
    %222 = arith.index_cast %221 : i32 to index
    %223 = arith.index_cast %116 : i32 to index
    %224 = memref.load %arg1[%222, %223] : memref<16x8xi32, #tpu.memory_space<smem>>
    %225 = arith.index_cast %224 : i32 to index
    %c0_135 = arith.constant 0 : index
    %c0_136 = arith.constant 0 : index
    %226 = vector.load %arg2[%225, %c0_135, %c0_136] : memref<3x8x8xf32, #tpu.memory_space<vmem>>, vector<1x8x8xf32>
    %227 = vector.shape_cast %226 : vector<1x8x8xf32> to vector<8x8xf32>
    %c104_137 = arith.constant 104 : index
    %c104_138 = arith.constant 104 : index
    %228 = vector.load %arg4[%c104_137, %c104_138] : memref<128x128xf32, #tpu.memory_space<vmem>>, vector<8x8xf32>
    tpu.vector_store %arg4[%c104_137, %c104_138], %227 {strides = array<i32>} : memref<128x128xf32, #tpu.memory_space<vmem>>, vector<8x8xf32>,
    %c14_i32_139 = arith.constant 14 : i32
    %229 = arith.addi %0, %c14_i32_139 : i32
    %230 = arith.index_cast %229 : i32 to index
    %231 = arith.index_cast %116 : i32 to index
    %232 = memref.load %arg1[%230, %231] : memref<16x8xi32, #tpu.memory_space<smem>>
    %233 = arith.index_cast %232 : i32 to index
    %c0_140 = arith.constant 0 : index
    %c0_141 = arith.constant 0 : index
    %234 = vector.load %arg2[%233, %c0_140, %c0_141] : memref<3x8x8xf32, #tpu.memory_space<vmem>>, vector<1x8x8xf32>
    %235 = vector.shape_cast %234 : vector<1x8x8xf32> to vector<8x8xf32>
    %c112_142 = arith.constant 112 : index
    %c112_143 = arith.constant 112 : index
    %236 = vector.load %arg4[%c112_142, %c112_143] : memref<128x128xf32, #tpu.memory_space<vmem>>, vector<8x8xf32>
    tpu.vector_store %arg4[%c112_142, %c112_143], %235 {strides = array<i32>} : memref<128x128xf32, #tpu.memory_space<vmem>>, vector<8x8xf32>,
    %c15_i32_144 = arith.constant 15 : i32
    %237 = arith.addi %0, %c15_i32_144 : i32
    %238 = arith.index_cast %237 : i32 to index
    %239 = arith.index_cast %116 : i32 to index
    %240 = memref.load %arg1[%238, %239] : memref<16x8xi32, #tpu.memory_space<smem>>
    %241 = arith.index_cast %240 : i32 to index
    %c0_145 = arith.constant 0 : index
    %c0_146 = arith.constant 0 : index
    %242 = vector.load %arg2[%241, %c0_145, %c0_146] : memref<3x8x8xf32, #tpu.memory_space<vmem>>, vector<1x8x8xf32>
    %243 = vector.shape_cast %242 : vector<1x8x8xf32> to vector<8x8xf32>
    %c120_147 = arith.constant 120 : index
    %c120_148 = arith.constant 120 : index
    %244 = vector.load %arg4[%c120_147, %c120_148] : memref<128x128xf32, #tpu.memory_space<vmem>>, vector<8x8xf32>
    tpu.vector_store %arg4[%c120_147, %c120_148], %243 {strides = array<i32>} : memref<128x128xf32, #tpu.memory_space<vmem>>, vector<8x8xf32>,
    %c0_149 = arith.constant 0 : index
    %c0_150 = arith.constant 0 : index
    %245 = vector.load %arg5[%c0_149, %c0_150] : memref<8x128xf32, #tpu.memory_space<vmem>>, vector<8x128xf32>
    %c0_151 = arith.constant 0 : index
    %c0_152 = arith.constant 0 : index
    %246 = vector.load %arg4[%c0_151, %c0_152] : memref<128x128xf32, #tpu.memory_space<vmem>>, vector<128x128xf32>
    %cst_153 = arith.constant dense<0.000000e+00> : vector<8x128xf32>
    %247 = tpu.matmul %245, %246, %cst_153 {dimension_numbers = #tpu.dot_dimension_numbers<[1], [0], [0], [1], [0, 0, 1, 1], [], []>} : vector<8x128xf32>, vector<128x128xf32>, vector<8x128xf32> -> vector<8x128xf32>
    %c0_154 = arith.constant 0 : index
    %c0_155 = arith.constant 0 : index
    %248 = vector.load %arg5[%c0_154, %c0_155] : memref<8x128xf32, #tpu.memory_space<vmem>>, vector<8x128xf32>
    tpu.vector_store %arg5[%c0_154, %c0_155], %247 {strides = array<i32>} : memref<8x128xf32, #tpu.memory_space<vmem>>, vector<8x128xf32>,
    %c1_i32_156 = arith.constant 1 : i32
    %c1_i32_157 = arith.constant 1 : i32
    %249 = arith.muli %c1_i32_156, %c1_i32_157 : i32
    %c1_i32_158 = arith.constant 1 : i32
    %250 = arith.addi %c1_i32_158, %249 : i32
    %c0_i32_159 = arith.constant 0 : i32
    %251 = arith.addi %0, %c0_i32_159 : i32
    %252 = arith.index_cast %251 : i32 to index
    %253 = arith.index_cast %250 : i32 to index
    %254 = memref.load %arg1[%252, %253] : memref<16x8xi32, #tpu.memory_space<smem>>
    %255 = arith.index_cast %254 : i32 to index
    %c0_160 = arith.constant 0 : index
    %c0_161 = arith.constant 0 : index
    %256 = vector.load %arg2[%255, %c0_160, %c0_161] : memref<3x8x8xf32, #tpu.memory_space<vmem>>, vector<1x8x8xf32>
    %257 = vector.shape_cast %256 : vector<1x8x8xf32> to vector<8x8xf32>
    %c0_162 = arith.constant 0 : index
    %c0_163 = arith.constant 0 : index
    %258 = vector.load %arg4[%c0_162, %c0_163] : memref<128x128xf32, #tpu.memory_space<vmem>>, vector<8x8xf32>
    tpu.vector_store %arg4[%c0_162, %c0_163], %257 {strides = array<i32>} : memref<128x128xf32, #tpu.memory_space<vmem>>, vector<8x8xf32>,
    %c1_i32_164 = arith.constant 1 : i32
    %259 = arith.addi %0, %c1_i32_164 : i32
    %260 = arith.index_cast %259 : i32 to index
    %261 = arith.index_cast %250 : i32 to index
    %262 = memref.load %arg1[%260, %261] : memref<16x8xi32, #tpu.memory_space<smem>>
    %263 = arith.index_cast %262 : i32 to index
    %c0_165 = arith.constant 0 : index
    %c0_166 = arith.constant 0 : index
    %264 = vector.load %arg2[%263, %c0_165, %c0_166] : memref<3x8x8xf32, #tpu.memory_space<vmem>>, vector<1x8x8xf32>
    %265 = vector.shape_cast %264 : vector<1x8x8xf32> to vector<8x8xf32>
    %c8_167 = arith.constant 8 : index
    %c8_168 = arith.constant 8 : index
    %266 = vector.load %arg4[%c8_167, %c8_168] : memref<128x128xf32, #tpu.memory_space<vmem>>, vector<8x8xf32>
    tpu.vector_store %arg4[%c8_167, %c8_168], %265 {strides = array<i32>} : memref<128x128xf32, #tpu.memory_space<vmem>>, vector<8x8xf32>,
    %c2_i32_169 = arith.constant 2 : i32
    %267 = arith.addi %0, %c2_i32_169 : i32
    %268 = arith.index_cast %267 : i32 to index
    %269 = arith.index_cast %250 : i32 to index
    %270 = memref.load %arg1[%268, %269] : memref<16x8xi32, #tpu.memory_space<smem>>
    %271 = arith.index_cast %270 : i32 to index
    %c0_170 = arith.constant 0 : index
    %c0_171 = arith.constant 0 : index
    %272 = vector.load %arg2[%271, %c0_170, %c0_171] : memref<3x8x8xf32, #tpu.memory_space<vmem>>, vector<1x8x8xf32>
    %273 = vector.shape_cast %272 : vector<1x8x8xf32> to vector<8x8xf32>
    %c16_172 = arith.constant 16 : index
    %c16_173 = arith.constant 16 : index
    %274 = vector.load %arg4[%c16_172, %c16_173] : memref<128x128xf32, #tpu.memory_space<vmem>>, vector<8x8xf32>
    tpu.vector_store %arg4[%c16_172, %c16_173], %273 {strides = array<i32>} : memref<128x128xf32, #tpu.memory_space<vmem>>, vector<8x8xf32>,
    %c3_i32_174 = arith.constant 3 : i32
    %275 = arith.addi %0, %c3_i32_174 : i32
    %276 = arith.index_cast %275 : i32 to index
    %277 = arith.index_cast %250 : i32 to index
    %278 = memref.load %arg1[%276, %277] : memref<16x8xi32, #tpu.memory_space<smem>>
    %279 = arith.index_cast %278 : i32 to index
    %c0_175 = arith.constant 0 : index
    %c0_176 = arith.constant 0 : index
    %280 = vector.load %arg2[%279, %c0_175, %c0_176] : memref<3x8x8xf32, #tpu.memory_space<vmem>>, vector<1x8x8xf32>
    %281 = vector.shape_cast %280 : vector<1x8x8xf32> to vector<8x8xf32>
    %c24_177 = arith.constant 24 : index
    %c24_178 = arith.constant 24 : index
    %282 = vector.load %arg4[%c24_177, %c24_178] : memref<128x128xf32, #tpu.memory_space<vmem>>, vector<8x8xf32>
    tpu.vector_store %arg4[%c24_177, %c24_178], %281 {strides = array<i32>} : memref<128x128xf32, #tpu.memory_space<vmem>>, vector<8x8xf32>,
    %c4_i32_179 = arith.constant 4 : i32
    %283 = arith.addi %0, %c4_i32_179 : i32
    %284 = arith.index_cast %283 : i32 to index
    %285 = arith.index_cast %250 : i32 to index
    %286 = memref.load %arg1[%284, %285] : memref<16x8xi32, #tpu.memory_space<smem>>
    %287 = arith.index_cast %286 : i32 to index
    %c0_180 = arith.constant 0 : index
    %c0_181 = arith.constant 0 : index
    %288 = vector.load %arg2[%287, %c0_180, %c0_181] : memref<3x8x8xf32, #tpu.memory_space<vmem>>, vector<1x8x8xf32>
    %289 = vector.shape_cast %288 : vector<1x8x8xf32> to vector<8x8xf32>
    %c32_182 = arith.constant 32 : index
    %c32_183 = arith.constant 32 : index
    %290 = vector.load %arg4[%c32_182, %c32_183] : memref<128x128xf32, #tpu.memory_space<vmem>>, vector<8x8xf32>
    tpu.vector_store %arg4[%c32_182, %c32_183], %289 {strides = array<i32>} : memref<128x128xf32, #tpu.memory_space<vmem>>, vector<8x8xf32>,
    %c5_i32_184 = arith.constant 5 : i32
    %291 = arith.addi %0, %c5_i32_184 : i32
    %292 = arith.index_cast %291 : i32 to index
    %293 = arith.index_cast %250 : i32 to index
    %294 = memref.load %arg1[%292, %293] : memref<16x8xi32, #tpu.memory_space<smem>>
    %295 = arith.index_cast %294 : i32 to index
    %c0_185 = arith.constant 0 : index
    %c0_186 = arith.constant 0 : index
    %296 = vector.load %arg2[%295, %c0_185, %c0_186] : memref<3x8x8xf32, #tpu.memory_space<vmem>>, vector<1x8x8xf32>
    %297 = vector.shape_cast %296 : vector<1x8x8xf32> to vector<8x8xf32>
    %c40_187 = arith.constant 40 : index
    %c40_188 = arith.constant 40 : index
    %298 = vector.load %arg4[%c40_187, %c40_188] : memref<128x128xf32, #tpu.memory_space<vmem>>, vector<8x8xf32>
    tpu.vector_store %arg4[%c40_187, %c40_188], %297 {strides = array<i32>} : memref<128x128xf32, #tpu.memory_space<vmem>>, vector<8x8xf32>,
    %c6_i32_189 = arith.constant 6 : i32
    %299 = arith.addi %0, %c6_i32_189 : i32
    %300 = arith.index_cast %299 : i32 to index
    %301 = arith.index_cast %250 : i32 to index
    %302 = memref.load %arg1[%300, %301] : memref<16x8xi32, #tpu.memory_space<smem>>
    %303 = arith.index_cast %302 : i32 to index
    %c0_190 = arith.constant 0 : index
    %c0_191 = arith.constant 0 : index
    %304 = vector.load %arg2[%303, %c0_190, %c0_191] : memref<3x8x8xf32, #tpu.memory_space<vmem>>, vector<1x8x8xf32>
    %305 = vector.shape_cast %304 : vector<1x8x8xf32> to vector<8x8xf32>
    %c48_192 = arith.constant 48 : index
    %c48_193 = arith.constant 48 : index
    %306 = vector.load %arg4[%c48_192, %c48_193] : memref<128x128xf32, #tpu.memory_space<vmem>>, vector<8x8xf32>
    tpu.vector_store %arg4[%c48_192, %c48_193], %305 {strides = array<i32>} : memref<128x128xf32, #tpu.memory_space<vmem>>, vector<8x8xf32>,
    %c7_i32_194 = arith.constant 7 : i32
    %307 = arith.addi %0, %c7_i32_194 : i32
    %308 = arith.index_cast %307 : i32 to index
    %309 = arith.index_cast %250 : i32 to index
    %310 = memref.load %arg1[%308, %309] : memref<16x8xi32, #tpu.memory_space<smem>>
    %311 = arith.index_cast %310 : i32 to index
    %c0_195 = arith.constant 0 : index
    %c0_196 = arith.constant 0 : index
    %312 = vector.load %arg2[%311, %c0_195, %c0_196] : memref<3x8x8xf32, #tpu.memory_space<vmem>>, vector<1x8x8xf32>
    %313 = vector.shape_cast %312 : vector<1x8x8xf32> to vector<8x8xf32>
    %c56_197 = arith.constant 56 : index
    %c56_198 = arith.constant 56 : index
    %314 = vector.load %arg4[%c56_197, %c56_198] : memref<128x128xf32, #tpu.memory_space<vmem>>, vector<8x8xf32>
    tpu.vector_store %arg4[%c56_197, %c56_198], %313 {strides = array<i32>} : memref<128x128xf32, #tpu.memory_space<vmem>>, vector<8x8xf32>,
    %c8_i32_199 = arith.constant 8 : i32
    %315 = arith.addi %0, %c8_i32_199 : i32
    %316 = arith.index_cast %315 : i32 to index
    %317 = arith.index_cast %250 : i32 to index
    %318 = memref.load %arg1[%316, %317] : memref<16x8xi32, #tpu.memory_space<smem>>
    %319 = arith.index_cast %318 : i32 to index
    %c0_200 = arith.constant 0 : index
    %c0_201 = arith.constant 0 : index
    %320 = vector.load %arg2[%319, %c0_200, %c0_201] : memref<3x8x8xf32, #tpu.memory_space<vmem>>, vector<1x8x8xf32>
    %321 = vector.shape_cast %320 : vector<1x8x8xf32> to vector<8x8xf32>
    %c64_202 = arith.constant 64 : index
    %c64_203 = arith.constant 64 : index
    %322 = vector.load %arg4[%c64_202, %c64_203] : memref<128x128xf32, #tpu.memory_space<vmem>>, vector<8x8xf32>
    tpu.vector_store %arg4[%c64_202, %c64_203], %321 {strides = array<i32>} : memref<128x128xf32, #tpu.memory_space<vmem>>, vector<8x8xf32>,
    %c9_i32_204 = arith.constant 9 : i32
    %323 = arith.addi %0, %c9_i32_204 : i32
    %324 = arith.index_cast %323 : i32 to index
    %325 = arith.index_cast %250 : i32 to index
    %326 = memref.load %arg1[%324, %325] : memref<16x8xi32, #tpu.memory_space<smem>>
    %327 = arith.index_cast %326 : i32 to index
    %c0_205 = arith.constant 0 : index
    %c0_206 = arith.constant 0 : index
    %328 = vector.load %arg2[%327, %c0_205, %c0_206] : memref<3x8x8xf32, #tpu.memory_space<vmem>>, vector<1x8x8xf32>
    %329 = vector.shape_cast %328 : vector<1x8x8xf32> to vector<8x8xf32>
    %c72_207 = arith.constant 72 : index
    %c72_208 = arith.constant 72 : index
    %330 = vector.load %arg4[%c72_207, %c72_208] : memref<128x128xf32, #tpu.memory_space<vmem>>, vector<8x8xf32>
    tpu.vector_store %arg4[%c72_207, %c72_208], %329 {strides = array<i32>} : memref<128x128xf32, #tpu.memory_space<vmem>>, vector<8x8xf32>,
    %c10_i32_209 = arith.constant 10 : i32
    %331 = arith.addi %0, %c10_i32_209 : i32
    %332 = arith.index_cast %331 : i32 to index
    %333 = arith.index_cast %250 : i32 to index
    %334 = memref.load %arg1[%332, %333] : memref<16x8xi32, #tpu.memory_space<smem>>
    %335 = arith.index_cast %334 : i32 to index
    %c0_210 = arith.constant 0 : index
    %c0_211 = arith.constant 0 : index
    %336 = vector.load %arg2[%335, %c0_210, %c0_211] : memref<3x8x8xf32, #tpu.memory_space<vmem>>, vector<1x8x8xf32>
    %337 = vector.shape_cast %336 : vector<1x8x8xf32> to vector<8x8xf32>
    %c80_212 = arith.constant 80 : index
    %c80_213 = arith.constant 80 : index
    %338 = vector.load %arg4[%c80_212, %c80_213] : memref<128x128xf32, #tpu.memory_space<vmem>>, vector<8x8xf32>
    tpu.vector_store %arg4[%c80_212, %c80_213], %337 {strides = array<i32>} : memref<128x128xf32, #tpu.memory_space<vmem>>, vector<8x8xf32>,
    %c11_i32_214 = arith.constant 11 : i32
    %339 = arith.addi %0, %c11_i32_214 : i32
    %340 = arith.index_cast %339 : i32 to index
    %341 = arith.index_cast %250 : i32 to index
    %342 = memref.load %arg1[%340, %341] : memref<16x8xi32, #tpu.memory_space<smem>>
    %343 = arith.index_cast %342 : i32 to index
    %c0_215 = arith.constant 0 : index
    %c0_216 = arith.constant 0 : index
    %344 = vector.load %arg2[%343, %c0_215, %c0_216] : memref<3x8x8xf32, #tpu.memory_space<vmem>>, vector<1x8x8xf32>
    %345 = vector.shape_cast %344 : vector<1x8x8xf32> to vector<8x8xf32>
    %c88_217 = arith.constant 88 : index
    %c88_218 = arith.constant 88 : index
    %346 = vector.load %arg4[%c88_217, %c88_218] : memref<128x128xf32, #tpu.memory_space<vmem>>, vector<8x8xf32>
    tpu.vector_store %arg4[%c88_217, %c88_218], %345 {strides = array<i32>} : memref<128x128xf32, #tpu.memory_space<vmem>>, vector<8x8xf32>,
    %c12_i32_219 = arith.constant 12 : i32
    %347 = arith.addi %0, %c12_i32_219 : i32
    %348 = arith.index_cast %347 : i32 to index
    %349 = arith.index_cast %250 : i32 to index
    %350 = memref.load %arg1[%348, %349] : memref<16x8xi32, #tpu.memory_space<smem>>
    %351 = arith.index_cast %350 : i32 to index
    %c0_220 = arith.constant 0 : index
    %c0_221 = arith.constant 0 : index
    %352 = vector.load %arg2[%351, %c0_220, %c0_221] : memref<3x8x8xf32, #tpu.memory_space<vmem>>, vector<1x8x8xf32>
    %353 = vector.shape_cast %352 : vector<1x8x8xf32> to vector<8x8xf32>
    %c96_222 = arith.constant 96 : index
    %c96_223 = arith.constant 96 : index
    %354 = vector.load %arg4[%c96_222, %c96_223] : memref<128x128xf32, #tpu.memory_space<vmem>>, vector<8x8xf32>
    tpu.vector_store %arg4[%c96_222, %c96_223], %353 {strides = array<i32>} : memref<128x128xf32, #tpu.memory_space<vmem>>, vector<8x8xf32>,
    %c13_i32_224 = arith.constant 13 : i32
    %355 = arith.addi %0, %c13_i32_224 : i32
    %356 = arith.index_cast %355 : i32 to index
    %357 = arith.index_cast %250 : i32 to index
    %358 = memref.load %arg1[%356, %357] : memref<16x8xi32, #tpu.memory_space<smem>>
    %359 = arith.index_cast %358 : i32 to index
    %c0_225 = arith.constant 0 : index
    %c0_226 = arith.constant 0 : index
    %360 = vector.load %arg2[%359, %c0_225, %c0_226] : memref<3x8x8xf32, #tpu.memory_space<vmem>>, vector<1x8x8xf32>
    %361 = vector.shape_cast %360 : vector<1x8x8xf32> to vector<8x8xf32>
    %c104_227 = arith.constant 104 : index
    %c104_228 = arith.constant 104 : index
    %362 = vector.load %arg4[%c104_227, %c104_228] : memref<128x128xf32, #tpu.memory_space<vmem>>, vector<8x8xf32>
    tpu.vector_store %arg4[%c104_227, %c104_228], %361 {strides = array<i32>} : memref<128x128xf32, #tpu.memory_space<vmem>>, vector<8x8xf32>,
    %c14_i32_229 = arith.constant 14 : i32
    %363 = arith.addi %0, %c14_i32_229 : i32
    %364 = arith.index_cast %363 : i32 to index
    %365 = arith.index_cast %250 : i32 to index
    %366 = memref.load %arg1[%364, %365] : memref<16x8xi32, #tpu.memory_space<smem>>
    %367 = arith.index_cast %366 : i32 to index
    %c0_230 = arith.constant 0 : index
    %c0_231 = arith.constant 0 : index
    %368 = vector.load %arg2[%367, %c0_230, %c0_231] : memref<3x8x8xf32, #tpu.memory_space<vmem>>, vector<1x8x8xf32>
    %369 = vector.shape_cast %368 : vector<1x8x8xf32> to vector<8x8xf32>
    %c112_232 = arith.constant 112 : index
    %c112_233 = arith.constant 112 : index
    %370 = vector.load %arg4[%c112_232, %c112_233] : memref<128x128xf32, #tpu.memory_space<vmem>>, vector<8x8xf32>
    tpu.vector_store %arg4[%c112_232, %c112_233], %369 {strides = array<i32>} : memref<128x128xf32, #tpu.memory_space<vmem>>, vector<8x8xf32>,
    %c15_i32_234 = arith.constant 15 : i32
    %371 = arith.addi %0, %c15_i32_234 : i32
    %372 = arith.index_cast %371 : i32 to index
    %373 = arith.index_cast %250 : i32 to index
    %374 = memref.load %arg1[%372, %373] : memref<16x8xi32, #tpu.memory_space<smem>>
    %375 = arith.index_cast %374 : i32 to index
    %c0_235 = arith.constant 0 : index
    %c0_236 = arith.constant 0 : index
    %376 = vector.load %arg2[%375, %c0_235, %c0_236] : memref<3x8x8xf32, #tpu.memory_space<vmem>>, vector<1x8x8xf32>
    %377 = vector.shape_cast %376 : vector<1x8x8xf32> to vector<8x8xf32>
    %c120_237 = arith.constant 120 : index
    %c120_238 = arith.constant 120 : index
    %378 = vector.load %arg4[%c120_237, %c120_238] : memref<128x128xf32, #tpu.memory_space<vmem>>, vector<8x8xf32>
    tpu.vector_store %arg4[%c120_237, %c120_238], %377 {strides = array<i32>} : memref<128x128xf32, #tpu.memory_space<vmem>>, vector<8x8xf32>,
    %c0_239 = arith.constant 0 : index
    %c0_240 = arith.constant 0 : index
    %379 = vector.load %arg5[%c0_239, %c0_240] : memref<8x128xf32, #tpu.memory_space<vmem>>, vector<8x128xf32>
    %c0_241 = arith.constant 0 : index
    %c0_242 = arith.constant 0 : index
    %380 = vector.load %arg4[%c0_241, %c0_242] : memref<128x128xf32, #tpu.memory_space<vmem>>, vector<128x128xf32>
    %cst_243 = arith.constant dense<0.000000e+00> : vector<8x128xf32>
    %381 = tpu.matmul %379, %380, %cst_243 {dimension_numbers = #tpu.dot_dimension_numbers<[1], [0], [0], [1], [0, 0, 1, 1], [], []>} : vector<8x128xf32>, vector<128x128xf32>, vector<8x128xf32> -> vector<8x128xf32>
    %c0_244 = arith.constant 0 : index
    %c0_245 = arith.constant 0 : index
    %382 = vector.load %arg5[%c0_244, %c0_245] : memref<8x128xf32, #tpu.memory_space<vmem>>, vector<8x128xf32>
    tpu.vector_store %arg5[%c0_244, %c0_245], %381 {strides = array<i32>} : memref<8x128xf32, #tpu.memory_space<vmem>>, vector<8x128xf32>,
    %c2_i32_246 = arith.constant 2 : i32
    %c1_i32_247 = arith.constant 1 : i32
    %383 = arith.muli %c2_i32_246, %c1_i32_247 : i32
    %c1_i32_248 = arith.constant 1 : i32
    %384 = arith.addi %c1_i32_248, %383 : i32
    %c0_i32_249 = arith.constant 0 : i32
    %385 = arith.addi %0, %c0_i32_249 : i32
    %386 = arith.index_cast %385 : i32 to index
    %387 = arith.index_cast %384 : i32 to index
    %388 = memref.load %arg1[%386, %387] : memref<16x8xi32, #tpu.memory_space<smem>>
    %389 = arith.index_cast %388 : i32 to index
    %c0_250 = arith.constant 0 : index
    %c0_251 = arith.constant 0 : index
    %390 = vector.load %arg2[%389, %c0_250, %c0_251] : memref<3x8x8xf32, #tpu.memory_space<vmem>>, vector<1x8x8xf32>
    %391 = vector.shape_cast %390 : vector<1x8x8xf32> to vector<8x8xf32>
    %c0_252 = arith.constant 0 : index
    %c0_253 = arith.constant 0 : index
    %392 = vector.load %arg4[%c0_252, %c0_253] : memref<128x128xf32, #tpu.memory_space<vmem>>, vector<8x8xf32>
    tpu.vector_store %arg4[%c0_252, %c0_253], %391 {strides = array<i32>} : memref<128x128xf32, #tpu.memory_space<vmem>>, vector<8x8xf32>,
    %c1_i32_254 = arith.constant 1 : i32
    %393 = arith.addi %0, %c1_i32_254 : i32
    %394 = arith.index_cast %393 : i32 to index
    %395 = arith.index_cast %384 : i32 to index
    %396 = memref.load %arg1[%394, %395] : memref<16x8xi32, #tpu.memory_space<smem>>
    %397 = arith.index_cast %396 : i32 to index
    %c0_255 = arith.constant 0 : index
    %c0_256 = arith.constant 0 : index
    %398 = vector.load %arg2[%397, %c0_255, %c0_256] : memref<3x8x8xf32, #tpu.memory_space<vmem>>, vector<1x8x8xf32>
    %399 = vector.shape_cast %398 : vector<1x8x8xf32> to vector<8x8xf32>
    %c8_257 = arith.constant 8 : index
    %c8_258 = arith.constant 8 : index
    %400 = vector.load %arg4[%c8_257, %c8_258] : memref<128x128xf32, #tpu.memory_space<vmem>>, vector<8x8xf32>
    tpu.vector_store %arg4[%c8_257, %c8_258], %399 {strides = array<i32>} : memref<128x128xf32, #tpu.memory_space<vmem>>, vector<8x8xf32>,
    %c2_i32_259 = arith.constant 2 : i32
    %401 = arith.addi %0, %c2_i32_259 : i32
    %402 = arith.index_cast %401 : i32 to index
    %403 = arith.index_cast %384 : i32 to index
    %404 = memref.load %arg1[%402, %403] : memref<16x8xi32, #tpu.memory_space<smem>>
    %405 = arith.index_cast %404 : i32 to index
    %c0_260 = arith.constant 0 : index
    %c0_261 = arith.constant 0 : index
    %406 = vector.load %arg2[%405, %c0_260, %c0_261] : memref<3x8x8xf32, #tpu.memory_space<vmem>>, vector<1x8x8xf32>
    %407 = vector.shape_cast %406 : vector<1x8x8xf32> to vector<8x8xf32>
    %c16_262 = arith.constant 16 : index
    %c16_263 = arith.constant 16 : index
    %408 = vector.load %arg4[%c16_262, %c16_263] : memref<128x128xf32, #tpu.memory_space<vmem>>, vector<8x8xf32>
    tpu.vector_store %arg4[%c16_262, %c16_263], %407 {strides = array<i32>} : memref<128x128xf32, #tpu.memory_space<vmem>>, vector<8x8xf32>,
    %c3_i32_264 = arith.constant 3 : i32
    %409 = arith.addi %0, %c3_i32_264 : i32
    %410 = arith.index_cast %409 : i32 to index
    %411 = arith.index_cast %384 : i32 to index
    %412 = memref.load %arg1[%410, %411] : memref<16x8xi32, #tpu.memory_space<smem>>
    %413 = arith.index_cast %412 : i32 to index
    %c0_265 = arith.constant 0 : index
    %c0_266 = arith.constant 0 : index
    %414 = vector.load %arg2[%413, %c0_265, %c0_266] : memref<3x8x8xf32, #tpu.memory_space<vmem>>, vector<1x8x8xf32>
    %415 = vector.shape_cast %414 : vector<1x8x8xf32> to vector<8x8xf32>
    %c24_267 = arith.constant 24 : index
    %c24_268 = arith.constant 24 : index
    %416 = vector.load %arg4[%c24_267, %c24_268] : memref<128x128xf32, #tpu.memory_space<vmem>>, vector<8x8xf32>
    tpu.vector_store %arg4[%c24_267, %c24_268], %415 {strides = array<i32>} : memref<128x128xf32, #tpu.memory_space<vmem>>, vector<8x8xf32>,
    %c4_i32_269 = arith.constant 4 : i32
    %417 = arith.addi %0, %c4_i32_269 : i32
    %418 = arith.index_cast %417 : i32 to index
    %419 = arith.index_cast %384 : i32 to index
    %420 = memref.load %arg1[%418, %419] : memref<16x8xi32, #tpu.memory_space<smem>>
    %421 = arith.index_cast %420 : i32 to index
    %c0_270 = arith.constant 0 : index
    %c0_271 = arith.constant 0 : index
    %422 = vector.load %arg2[%421, %c0_270, %c0_271] : memref<3x8x8xf32, #tpu.memory_space<vmem>>, vector<1x8x8xf32>
    %423 = vector.shape_cast %422 : vector<1x8x8xf32> to vector<8x8xf32>
    %c32_272 = arith.constant 32 : index
    %c32_273 = arith.constant 32 : index
    %424 = vector.load %arg4[%c32_272, %c32_273] : memref<128x128xf32, #tpu.memory_space<vmem>>, vector<8x8xf32>
    tpu.vector_store %arg4[%c32_272, %c32_273], %423 {strides = array<i32>} : memref<128x128xf32, #tpu.memory_space<vmem>>, vector<8x8xf32>,
    %c5_i32_274 = arith.constant 5 : i32
    %425 = arith.addi %0, %c5_i32_274 : i32
    %426 = arith.index_cast %425 : i32 to index
    %427 = arith.index_cast %384 : i32 to index
    %428 = memref.load %arg1[%426, %427] : memref<16x8xi32, #tpu.memory_space<smem>>
    %429 = arith.index_cast %428 : i32 to index
    %c0_275 = arith.constant 0 : index
    %c0_276 = arith.constant 0 : index
    %430 = vector.load %arg2[%429, %c0_275, %c0_276] : memref<3x8x8xf32, #tpu.memory_space<vmem>>, vector<1x8x8xf32>
    %431 = vector.shape_cast %430 : vector<1x8x8xf32> to vector<8x8xf32>
    %c40_277 = arith.constant 40 : index
    %c40_278 = arith.constant 40 : index
    %432 = vector.load %arg4[%c40_277, %c40_278] : memref<128x128xf32, #tpu.memory_space<vmem>>, vector<8x8xf32>
    tpu.vector_store %arg4[%c40_277, %c40_278], %431 {strides = array<i32>} : memref<128x128xf32, #tpu.memory_space<vmem>>, vector<8x8xf32>,
    %c6_i32_279 = arith.constant 6 : i32
    %433 = arith.addi %0, %c6_i32_279 : i32
    %434 = arith.index_cast %433 : i32 to index
    %435 = arith.index_cast %384 : i32 to index
    %436 = memref.load %arg1[%434, %435] : memref<16x8xi32, #tpu.memory_space<smem>>
    %437 = arith.index_cast %436 : i32 to index
    %c0_280 = arith.constant 0 : index
    %c0_281 = arith.constant 0 : index
    %438 = vector.load %arg2[%437, %c0_280, %c0_281] : memref<3x8x8xf32, #tpu.memory_space<vmem>>, vector<1x8x8xf32>
    %439 = vector.shape_cast %438 : vector<1x8x8xf32> to vector<8x8xf32>
    %c48_282 = arith.constant 48 : index
    %c48_283 = arith.constant 48 : index
    %440 = vector.load %arg4[%c48_282, %c48_283] : memref<128x128xf32, #tpu.memory_space<vmem>>, vector<8x8xf32>
    tpu.vector_store %arg4[%c48_282, %c48_283], %439 {strides = array<i32>} : memref<128x128xf32, #tpu.memory_space<vmem>>, vector<8x8xf32>,
    %c7_i32_284 = arith.constant 7 : i32
    %441 = arith.addi %0, %c7_i32_284 : i32
    %442 = arith.index_cast %441 : i32 to index
    %443 = arith.index_cast %384 : i32 to index
    %444 = memref.load %arg1[%442, %443] : memref<16x8xi32, #tpu.memory_space<smem>>
    %445 = arith.index_cast %444 : i32 to index
    %c0_285 = arith.constant 0 : index
    %c0_286 = arith.constant 0 : index
    %446 = vector.load %arg2[%445, %c0_285, %c0_286] : memref<3x8x8xf32, #tpu.memory_space<vmem>>, vector<1x8x8xf32>
    %447 = vector.shape_cast %446 : vector<1x8x8xf32> to vector<8x8xf32>
    %c56_287 = arith.constant 56 : index
    %c56_288 = arith.constant 56 : index
    %448 = vector.load %arg4[%c56_287, %c56_288] : memref<128x128xf32, #tpu.memory_space<vmem>>, vector<8x8xf32>
    tpu.vector_store %arg4[%c56_287, %c56_288], %447 {strides = array<i32>} : memref<128x128xf32, #tpu.memory_space<vmem>>, vector<8x8xf32>,
    %c8_i32_289 = arith.constant 8 : i32
    %449 = arith.addi %0, %c8_i32_289 : i32
    %450 = arith.index_cast %449 : i32 to index
    %451 = arith.index_cast %384 : i32 to index
    %452 = memref.load %arg1[%450, %451] : memref<16x8xi32, #tpu.memory_space<smem>>
    %453 = arith.index_cast %452 : i32 to index
    %c0_290 = arith.constant 0 : index
    %c0_291 = arith.constant 0 : index
    %454 = vector.load %arg2[%453, %c0_290, %c0_291] : memref<3x8x8xf32, #tpu.memory_space<vmem>>, vector<1x8x8xf32>
    %455 = vector.shape_cast %454 : vector<1x8x8xf32> to vector<8x8xf32>
    %c64_292 = arith.constant 64 : index
    %c64_293 = arith.constant 64 : index
    %456 = vector.load %arg4[%c64_292, %c64_293] : memref<128x128xf32, #tpu.memory_space<vmem>>, vector<8x8xf32>
    tpu.vector_store %arg4[%c64_292, %c64_293], %455 {strides = array<i32>} : memref<128x128xf32, #tpu.memory_space<vmem>>, vector<8x8xf32>,
    %c9_i32_294 = arith.constant 9 : i32
    %457 = arith.addi %0, %c9_i32_294 : i32
    %458 = arith.index_cast %457 : i32 to index
    %459 = arith.index_cast %384 : i32 to index
    %460 = memref.load %arg1[%458, %459] : memref<16x8xi32, #tpu.memory_space<smem>>
    %461 = arith.index_cast %460 : i32 to index
    %c0_295 = arith.constant 0 : index
    %c0_296 = arith.constant 0 : index
    %462 = vector.load %arg2[%461, %c0_295, %c0_296] : memref<3x8x8xf32, #tpu.memory_space<vmem>>, vector<1x8x8xf32>
    %463 = vector.shape_cast %462 : vector<1x8x8xf32> to vector<8x8xf32>
    %c72_297 = arith.constant 72 : index
    %c72_298 = arith.constant 72 : index
    %464 = vector.load %arg4[%c72_297, %c72_298] : memref<128x128xf32, #tpu.memory_space<vmem>>, vector<8x8xf32>
    tpu.vector_store %arg4[%c72_297, %c72_298], %463 {strides = array<i32>} : memref<128x128xf32, #tpu.memory_space<vmem>>, vector<8x8xf32>,
    %c10_i32_299 = arith.constant 10 : i32
    %465 = arith.addi %0, %c10_i32_299 : i32
    %466 = arith.index_cast %465 : i32 to index
    %467 = arith.index_cast %384 : i32 to index
    %468 = memref.load %arg1[%466, %467] : memref<16x8xi32, #tpu.memory_space<smem>>
    %469 = arith.index_cast %468 : i32 to index
    %c0_300 = arith.constant 0 : index
    %c0_301 = arith.constant 0 : index
    %470 = vector.load %arg2[%469, %c0_300, %c0_301] : memref<3x8x8xf32, #tpu.memory_space<vmem>>, vector<1x8x8xf32>
    %471 = vector.shape_cast %470 : vector<1x8x8xf32> to vector<8x8xf32>
    %c80_302 = arith.constant 80 : index
    %c80_303 = arith.constant 80 : index
    %472 = vector.load %arg4[%c80_302, %c80_303] : memref<128x128xf32, #tpu.memory_space<vmem>>, vector<8x8xf32>
    tpu.vector_store %arg4[%c80_302, %c80_303], %471 {strides = array<i32>} : memref<128x128xf32, #tpu.memory_space<vmem>>, vector<8x8xf32>,
    %c11_i32_304 = arith.constant 11 : i32
    %473 = arith.addi %0, %c11_i32_304 : i32
    %474 = arith.index_cast %473 : i32 to index
    %475 = arith.index_cast %384 : i32 to index
    %476 = memref.load %arg1[%474, %475] : memref<16x8xi32, #tpu.memory_space<smem>>
    %477 = arith.index_cast %476 : i32 to index
    %c0_305 = arith.constant 0 : index
    %c0_306 = arith.constant 0 : index
    %478 = vector.load %arg2[%477, %c0_305, %c0_306] : memref<3x8x8xf32, #tpu.memory_space<vmem>>, vector<1x8x8xf32>
    %479 = vector.shape_cast %478 : vector<1x8x8xf32> to vector<8x8xf32>
    %c88_307 = arith.constant 88 : index
    %c88_308 = arith.constant 88 : index
    %480 = vector.load %arg4[%c88_307, %c88_308] : memref<128x128xf32, #tpu.memory_space<vmem>>, vector<8x8xf32>
    tpu.vector_store %arg4[%c88_307, %c88_308], %479 {strides = array<i32>} : memref<128x128xf32, #tpu.memory_space<vmem>>, vector<8x8xf32>,
    %c12_i32_309 = arith.constant 12 : i32
    %481 = arith.addi %0, %c12_i32_309 : i32
    %482 = arith.index_cast %481 : i32 to index
    %483 = arith.index_cast %384 : i32 to index
    %484 = memref.load %arg1[%482, %483] : memref<16x8xi32, #tpu.memory_space<smem>>
    %485 = arith.index_cast %484 : i32 to index
    %c0_310 = arith.constant 0 : index
    %c0_311 = arith.constant 0 : index
    %486 = vector.load %arg2[%485, %c0_310, %c0_311] : memref<3x8x8xf32, #tpu.memory_space<vmem>>, vector<1x8x8xf32>
    %487 = vector.shape_cast %486 : vector<1x8x8xf32> to vector<8x8xf32>
    %c96_312 = arith.constant 96 : index
    %c96_313 = arith.constant 96 : index
    %488 = vector.load %arg4[%c96_312, %c96_313] : memref<128x128xf32, #tpu.memory_space<vmem>>, vector<8x8xf32>
    tpu.vector_store %arg4[%c96_312, %c96_313], %487 {strides = array<i32>} : memref<128x128xf32, #tpu.memory_space<vmem>>, vector<8x8xf32>,
    %c13_i32_314 = arith.constant 13 : i32
    %489 = arith.addi %0, %c13_i32_314 : i32
    %490 = arith.index_cast %489 : i32 to index
    %491 = arith.index_cast %384 : i32 to index
    %492 = memref.load %arg1[%490, %491] : memref<16x8xi32, #tpu.memory_space<smem>>
    %493 = arith.index_cast %492 : i32 to index
    %c0_315 = arith.constant 0 : index
    %c0_316 = arith.constant 0 : index
    %494 = vector.load %arg2[%493, %c0_315, %c0_316] : memref<3x8x8xf32, #tpu.memory_space<vmem>>, vector<1x8x8xf32>
    %495 = vector.shape_cast %494 : vector<1x8x8xf32> to vector<8x8xf32>
    %c104_317 = arith.constant 104 : index
    %c104_318 = arith.constant 104 : index
    %496 = vector.load %arg4[%c104_317, %c104_318] : memref<128x128xf32, #tpu.memory_space<vmem>>, vector<8x8xf32>
    tpu.vector_store %arg4[%c104_317, %c104_318], %495 {strides = array<i32>} : memref<128x128xf32, #tpu.memory_space<vmem>>, vector<8x8xf32>,
    %c14_i32_319 = arith.constant 14 : i32
    %497 = arith.addi %0, %c14_i32_319 : i32
    %498 = arith.index_cast %497 : i32 to index
    %499 = arith.index_cast %384 : i32 to index
    %500 = memref.load %arg1[%498, %499] : memref<16x8xi32, #tpu.memory_space<smem>>
    %501 = arith.index_cast %500 : i32 to index
    %c0_320 = arith.constant 0 : index
    %c0_321 = arith.constant 0 : index
    %502 = vector.load %arg2[%501, %c0_320, %c0_321] : memref<3x8x8xf32, #tpu.memory_space<vmem>>, vector<1x8x8xf32>
    %503 = vector.shape_cast %502 : vector<1x8x8xf32> to vector<8x8xf32>
    %c112_322 = arith.constant 112 : index
    %c112_323 = arith.constant 112 : index
    %504 = vector.load %arg4[%c112_322, %c112_323] : memref<128x128xf32, #tpu.memory_space<vmem>>, vector<8x8xf32>
    tpu.vector_store %arg4[%c112_322, %c112_323], %503 {strides = array<i32>} : memref<128x128xf32, #tpu.memory_space<vmem>>, vector<8x8xf32>,
    %c15_i32_324 = arith.constant 15 : i32
    %505 = arith.addi %0, %c15_i32_324 : i32
    %506 = arith.index_cast %505 : i32 to index
    %507 = arith.index_cast %384 : i32 to index
    %508 = memref.load %arg1[%506, %507] : memref<16x8xi32, #tpu.memory_space<smem>>
    %509 = arith.index_cast %508 : i32 to index
    %c0_325 = arith.constant 0 : index
    %c0_326 = arith.constant 0 : index
    %510 = vector.load %arg2[%509, %c0_325, %c0_326] : memref<3x8x8xf32, #tpu.memory_space<vmem>>, vector<1x8x8xf32>
    %511 = vector.shape_cast %510 : vector<1x8x8xf32> to vector<8x8xf32>
    %c120_327 = arith.constant 120 : index
    %c120_328 = arith.constant 120 : index
    %512 = vector.load %arg4[%c120_327, %c120_328] : memref<128x128xf32, #tpu.memory_space<vmem>>, vector<8x8xf32>
    tpu.vector_store %arg4[%c120_327, %c120_328], %511 {strides = array<i32>} : memref<128x128xf32, #tpu.memory_space<vmem>>, vector<8x8xf32>,
    %c0_329 = arith.constant 0 : index
    %c0_330 = arith.constant 0 : index
    %513 = vector.load %arg5[%c0_329, %c0_330] : memref<8x128xf32, #tpu.memory_space<vmem>>, vector<8x128xf32>
    %c0_331 = arith.constant 0 : index
    %c0_332 = arith.constant 0 : index
    %514 = vector.load %arg4[%c0_331, %c0_332] : memref<128x128xf32, #tpu.memory_space<vmem>>, vector<128x128xf32>
    %cst_333 = arith.constant dense<0.000000e+00> : vector<8x128xf32>
    %515 = tpu.matmul %513, %514, %cst_333 {dimension_numbers = #tpu.dot_dimension_numbers<[1], [0], [0], [1], [0, 0, 1, 1], [], []>} : vector<8x128xf32>, vector<128x128xf32>, vector<8x128xf32> -> vector<8x128xf32>
    %c0_334 = arith.constant 0 : index
    %c0_335 = arith.constant 0 : index
    %516 = vector.load %arg5[%c0_334, %c0_335] : memref<8x128xf32, #tpu.memory_space<vmem>>, vector<8x128xf32>
    tpu.vector_store %arg5[%c0_334, %c0_335], %515 {strides = array<i32>} : memref<8x128xf32, #tpu.memory_space<vmem>>, vector<8x128xf32>,
    %c3_i32_336 = arith.constant 3 : i32
    %c1_i32_337 = arith.constant 1 : i32
    %517 = arith.muli %c3_i32_336, %c1_i32_337 : i32
    %c1_i32_338 = arith.constant 1 : i32
    %518 = arith.addi %c1_i32_338, %517 : i32
    %c0_i32_339 = arith.constant 0 : i32
    %519 = arith.addi %0, %c0_i32_339 : i32
    %520 = arith.index_cast %519 : i32 to index
    %521 = arith.index_cast %518 : i32 to index
    %522 = memref.load %arg1[%520, %521] : memref<16x8xi32, #tpu.memory_space<smem>>
    %523 = arith.index_cast %522 : i32 to index
    %c0_340 = arith.constant 0 : index
    %c0_341 = arith.constant 0 : index
    %524 = vector.load %arg2[%523, %c0_340, %c0_341] : memref<3x8x8xf32, #tpu.memory_space<vmem>>, vector<1x8x8xf32>
    %525 = vector.shape_cast %524 : vector<1x8x8xf32> to vector<8x8xf32>
    %c0_342 = arith.constant 0 : index
    %c0_343 = arith.constant 0 : index
    %526 = vector.load %arg4[%c0_342, %c0_343] : memref<128x128xf32, #tpu.memory_space<vmem>>, vector<8x8xf32>
    tpu.vector_store %arg4[%c0_342, %c0_343], %525 {strides = array<i32>} : memref<128x128xf32, #tpu.memory_space<vmem>>, vector<8x8xf32>,
    %c1_i32_344 = arith.constant 1 : i32
    %527 = arith.addi %0, %c1_i32_344 : i32
    %528 = arith.index_cast %527 : i32 to index
    %529 = arith.index_cast %518 : i32 to index
    %530 = memref.load %arg1[%528, %529] : memref<16x8xi32, #tpu.memory_space<smem>>
    %531 = arith.index_cast %530 : i32 to index
    %c0_345 = arith.constant 0 : index
    %c0_346 = arith.constant 0 : index
    %532 = vector.load %arg2[%531, %c0_345, %c0_346] : memref<3x8x8xf32, #tpu.memory_space<vmem>>, vector<1x8x8xf32>
    %533 = vector.shape_cast %532 : vector<1x8x8xf32> to vector<8x8xf32>
    %c8_347 = arith.constant 8 : index
    %c8_348 = arith.constant 8 : index
    %534 = vector.load %arg4[%c8_347, %c8_348] : memref<128x128xf32, #tpu.memory_space<vmem>>, vector<8x8xf32>
    tpu.vector_store %arg4[%c8_347, %c8_348], %533 {strides = array<i32>} : memref<128x128xf32, #tpu.memory_space<vmem>>, vector<8x8xf32>,
    %c2_i32_349 = arith.constant 2 : i32
    %535 = arith.addi %0, %c2_i32_349 : i32
    %536 = arith.index_cast %535 : i32 to index
    %537 = arith.index_cast %518 : i32 to index
    %538 = memref.load %arg1[%536, %537] : memref<16x8xi32, #tpu.memory_space<smem>>
    %539 = arith.index_cast %538 : i32 to index
    %c0_350 = arith.constant 0 : index
    %c0_351 = arith.constant 0 : index
    %540 = vector.load %arg2[%539, %c0_350, %c0_351] : memref<3x8x8xf32, #tpu.memory_space<vmem>>, vector<1x8x8xf32>
    %541 = vector.shape_cast %540 : vector<1x8x8xf32> to vector<8x8xf32>
    %c16_352 = arith.constant 16 : index
    %c16_353 = arith.constant 16 : index
    %542 = vector.load %arg4[%c16_352, %c16_353] : memref<128x128xf32, #tpu.memory_space<vmem>>, vector<8x8xf32>
    tpu.vector_store %arg4[%c16_352, %c16_353], %541 {strides = array<i32>} : memref<128x128xf32, #tpu.memory_space<vmem>>, vector<8x8xf32>,
    %c3_i32_354 = arith.constant 3 : i32
    %543 = arith.addi %0, %c3_i32_354 : i32
    %544 = arith.index_cast %543 : i32 to index
    %545 = arith.index_cast %518 : i32 to index
    %546 = memref.load %arg1[%544, %545] : memref<16x8xi32, #tpu.memory_space<smem>>
    %547 = arith.index_cast %546 : i32 to index
    %c0_355 = arith.constant 0 : index
    %c0_356 = arith.constant 0 : index
    %548 = vector.load %arg2[%547, %c0_355, %c0_356] : memref<3x8x8xf32, #tpu.memory_space<vmem>>, vector<1x8x8xf32>
    %549 = vector.shape_cast %548 : vector<1x8x8xf32> to vector<8x8xf32>
    %c24_357 = arith.constant 24 : index
    %c24_358 = arith.constant 24 : index
    %550 = vector.load %arg4[%c24_357, %c24_358] : memref<128x128xf32, #tpu.memory_space<vmem>>, vector<8x8xf32>
    tpu.vector_store %arg4[%c24_357, %c24_358], %549 {strides = array<i32>} : memref<128x128xf32, #tpu.memory_space<vmem>>, vector<8x8xf32>,
    %c4_i32_359 = arith.constant 4 : i32
    %551 = arith.addi %0, %c4_i32_359 : i32
    %552 = arith.index_cast %551 : i32 to index
    %553 = arith.index_cast %518 : i32 to index
    %554 = memref.load %arg1[%552, %553] : memref<16x8xi32, #tpu.memory_space<smem>>
    %555 = arith.index_cast %554 : i32 to index
    %c0_360 = arith.constant 0 : index
    %c0_361 = arith.constant 0 : index
    %556 = vector.load %arg2[%555, %c0_360, %c0_361] : memref<3x8x8xf32, #tpu.memory_space<vmem>>, vector<1x8x8xf32>
    %557 = vector.shape_cast %556 : vector<1x8x8xf32> to vector<8x8xf32>
    %c32_362 = arith.constant 32 : index
    %c32_363 = arith.constant 32 : index
    %558 = vector.load %arg4[%c32_362, %c32_363] : memref<128x128xf32, #tpu.memory_space<vmem>>, vector<8x8xf32>
    tpu.vector_store %arg4[%c32_362, %c32_363], %557 {strides = array<i32>} : memref<128x128xf32, #tpu.memory_space<vmem>>, vector<8x8xf32>,
    %c5_i32_364 = arith.constant 5 : i32
    %559 = arith.addi %0, %c5_i32_364 : i32
    %560 = arith.index_cast %559 : i32 to index
    %561 = arith.index_cast %518 : i32 to index
    %562 = memref.load %arg1[%560, %561] : memref<16x8xi32, #tpu.memory_space<smem>>
    %563 = arith.index_cast %562 : i32 to index
    %c0_365 = arith.constant 0 : index
    %c0_366 = arith.constant 0 : index
    %564 = vector.load %arg2[%563, %c0_365, %c0_366] : memref<3x8x8xf32, #tpu.memory_space<vmem>>, vector<1x8x8xf32>
    %565 = vector.shape_cast %564 : vector<1x8x8xf32> to vector<8x8xf32>
    %c40_367 = arith.constant 40 : index
    %c40_368 = arith.constant 40 : index
    %566 = vector.load %arg4[%c40_367, %c40_368] : memref<128x128xf32, #tpu.memory_space<vmem>>, vector<8x8xf32>
    tpu.vector_store %arg4[%c40_367, %c40_368], %565 {strides = array<i32>} : memref<128x128xf32, #tpu.memory_space<vmem>>, vector<8x8xf32>,
    %c6_i32_369 = arith.constant 6 : i32
    %567 = arith.addi %0, %c6_i32_369 : i32
    %568 = arith.index_cast %567 : i32 to index
    %569 = arith.index_cast %518 : i32 to index
    %570 = memref.load %arg1[%568, %569] : memref<16x8xi32, #tpu.memory_space<smem>>
    %571 = arith.index_cast %570 : i32 to index
    %c0_370 = arith.constant 0 : index
    %c0_371 = arith.constant 0 : index
    %572 = vector.load %arg2[%571, %c0_370, %c0_371] : memref<3x8x8xf32, #tpu.memory_space<vmem>>, vector<1x8x8xf32>
    %573 = vector.shape_cast %572 : vector<1x8x8xf32> to vector<8x8xf32>
    %c48_372 = arith.constant 48 : index
    %c48_373 = arith.constant 48 : index
    %574 = vector.load %arg4[%c48_372, %c48_373] : memref<128x128xf32, #tpu.memory_space<vmem>>, vector<8x8xf32>
    tpu.vector_store %arg4[%c48_372, %c48_373], %573 {strides = array<i32>} : memref<128x128xf32, #tpu.memory_space<vmem>>, vector<8x8xf32>,
    %c7_i32_374 = arith.constant 7 : i32
    %575 = arith.addi %0, %c7_i32_374 : i32
    %576 = arith.index_cast %575 : i32 to index
    %577 = arith.index_cast %518 : i32 to index
    %578 = memref.load %arg1[%576, %577] : memref<16x8xi32, #tpu.memory_space<smem>>
    %579 = arith.index_cast %578 : i32 to index
    %c0_375 = arith.constant 0 : index
    %c0_376 = arith.constant 0 : index
    %580 = vector.load %arg2[%579, %c0_375, %c0_376] : memref<3x8x8xf32, #tpu.memory_space<vmem>>, vector<1x8x8xf32>
    %581 = vector.shape_cast %580 : vector<1x8x8xf32> to vector<8x8xf32>
    %c56_377 = arith.constant 56 : index
    %c56_378 = arith.constant 56 : index
    %582 = vector.load %arg4[%c56_377, %c56_378] : memref<128x128xf32, #tpu.memory_space<vmem>>, vector<8x8xf32>
    tpu.vector_store %arg4[%c56_377, %c56_378], %581 {strides = array<i32>} : memref<128x128xf32, #tpu.memory_space<vmem>>, vector<8x8xf32>,
    %c8_i32_379 = arith.constant 8 : i32
    %583 = arith.addi %0, %c8_i32_379 : i32
    %584 = arith.index_cast %583 : i32 to index
    %585 = arith.index_cast %518 : i32 to index
    %586 = memref.load %arg1[%584, %585] : memref<16x8xi32, #tpu.memory_space<smem>>
    %587 = arith.index_cast %586 : i32 to index
    %c0_380 = arith.constant 0 : index
    %c0_381 = arith.constant 0 : index
    %588 = vector.load %arg2[%587, %c0_380, %c0_381] : memref<3x8x8xf32, #tpu.memory_space<vmem>>, vector<1x8x8xf32>
    %589 = vector.shape_cast %588 : vector<1x8x8xf32> to vector<8x8xf32>
    %c64_382 = arith.constant 64 : index
    %c64_383 = arith.constant 64 : index
    %590 = vector.load %arg4[%c64_382, %c64_383] : memref<128x128xf32, #tpu.memory_space<vmem>>, vector<8x8xf32>
    tpu.vector_store %arg4[%c64_382, %c64_383], %589 {strides = array<i32>} : memref<128x128xf32, #tpu.memory_space<vmem>>, vector<8x8xf32>,
    %c9_i32_384 = arith.constant 9 : i32
    %591 = arith.addi %0, %c9_i32_384 : i32
    %592 = arith.index_cast %591 : i32 to index
    %593 = arith.index_cast %518 : i32 to index
    %594 = memref.load %arg1[%592, %593] : memref<16x8xi32, #tpu.memory_space<smem>>
    %595 = arith.index_cast %594 : i32 to index
    %c0_385 = arith.constant 0 : index
    %c0_386 = arith.constant 0 : index
    %596 = vector.load %arg2[%595, %c0_385, %c0_386] : memref<3x8x8xf32, #tpu.memory_space<vmem>>, vector<1x8x8xf32>
    %597 = vector.shape_cast %596 : vector<1x8x8xf32> to vector<8x8xf32>
    %c72_387 = arith.constant 72 : index
    %c72_388 = arith.constant 72 : index
    %598 = vector.load %arg4[%c72_387, %c72_388] : memref<128x128xf32, #tpu.memory_space<vmem>>, vector<8x8xf32>
    tpu.vector_store %arg4[%c72_387, %c72_388], %597 {strides = array<i32>} : memref<128x128xf32, #tpu.memory_space<vmem>>, vector<8x8xf32>,
    %c10_i32_389 = arith.constant 10 : i32
    %599 = arith.addi %0, %c10_i32_389 : i32
    %600 = arith.index_cast %599 : i32 to index
    %601 = arith.index_cast %518 : i32 to index
    %602 = memref.load %arg1[%600, %601] : memref<16x8xi32, #tpu.memory_space<smem>>
    %603 = arith.index_cast %602 : i32 to index
    %c0_390 = arith.constant 0 : index
    %c0_391 = arith.constant 0 : index
    %604 = vector.load %arg2[%603, %c0_390, %c0_391] : memref<3x8x8xf32, #tpu.memory_space<vmem>>, vector<1x8x8xf32>
    %605 = vector.shape_cast %604 : vector<1x8x8xf32> to vector<8x8xf32>
    %c80_392 = arith.constant 80 : index
    %c80_393 = arith.constant 80 : index
    %606 = vector.load %arg4[%c80_392, %c80_393] : memref<128x128xf32, #tpu.memory_space<vmem>>, vector<8x8xf32>
    tpu.vector_store %arg4[%c80_392, %c80_393], %605 {strides = array<i32>} : memref<128x128xf32, #tpu.memory_space<vmem>>, vector<8x8xf32>,
    %c11_i32_394 = arith.constant 11 : i32
    %607 = arith.addi %0, %c11_i32_394 : i32
    %608 = arith.index_cast %607 : i32 to index
    %609 = arith.index_cast %518 : i32 to index
    %610 = memref.load %arg1[%608, %609] : memref<16x8xi32, #tpu.memory_space<smem>>
    %611 = arith.index_cast %610 : i32 to index
    %c0_395 = arith.constant 0 : index
    %c0_396 = arith.constant 0 : index
    %612 = vector.load %arg2[%611, %c0_395, %c0_396] : memref<3x8x8xf32, #tpu.memory_space<vmem>>, vector<1x8x8xf32>
    %613 = vector.shape_cast %612 : vector<1x8x8xf32> to vector<8x8xf32>
    %c88_397 = arith.constant 88 : index
    %c88_398 = arith.constant 88 : index
    %614 = vector.load %arg4[%c88_397, %c88_398] : memref<128x128xf32, #tpu.memory_space<vmem>>, vector<8x8xf32>
    tpu.vector_store %arg4[%c88_397, %c88_398], %613 {strides = array<i32>} : memref<128x128xf32, #tpu.memory_space<vmem>>, vector<8x8xf32>,
    %c12_i32_399 = arith.constant 12 : i32
    %615 = arith.addi %0, %c12_i32_399 : i32
    %616 = arith.index_cast %615 : i32 to index
    %617 = arith.index_cast %518 : i32 to index
    %618 = memref.load %arg1[%616, %617] : memref<16x8xi32, #tpu.memory_space<smem>>
    %619 = arith.index_cast %618 : i32 to index
    %c0_400 = arith.constant 0 : index
    %c0_401 = arith.constant 0 : index
    %620 = vector.load %arg2[%619, %c0_400, %c0_401] : memref<3x8x8xf32, #tpu.memory_space<vmem>>, vector<1x8x8xf32>
    %621 = vector.shape_cast %620 : vector<1x8x8xf32> to vector<8x8xf32>
    %c96_402 = arith.constant 96 : index
    %c96_403 = arith.constant 96 : index
    %622 = vector.load %arg4[%c96_402, %c96_403] : memref<128x128xf32, #tpu.memory_space<vmem>>, vector<8x8xf32>
    tpu.vector_store %arg4[%c96_402, %c96_403], %621 {strides = array<i32>} : memref<128x128xf32, #tpu.memory_space<vmem>>, vector<8x8xf32>,
    %c13_i32_404 = arith.constant 13 : i32
    %623 = arith.addi %0, %c13_i32_404 : i32
    %624 = arith.index_cast %623 : i32 to index
    %625 = arith.index_cast %518 : i32 to index
    %626 = memref.load %arg1[%624, %625] : memref<16x8xi32, #tpu.memory_space<smem>>
    %627 = arith.index_cast %626 : i32 to index
    %c0_405 = arith.constant 0 : index
    %c0_406 = arith.constant 0 : index
    %628 = vector.load %arg2[%627, %c0_405, %c0_406] : memref<3x8x8xf32, #tpu.memory_space<vmem>>, vector<1x8x8xf32>
    %629 = vector.shape_cast %628 : vector<1x8x8xf32> to vector<8x8xf32>
    %c104_407 = arith.constant 104 : index
    %c104_408 = arith.constant 104 : index
    %630 = vector.load %arg4[%c104_407, %c104_408] : memref<128x128xf32, #tpu.memory_space<vmem>>, vector<8x8xf32>
    tpu.vector_store %arg4[%c104_407, %c104_408], %629 {strides = array<i32>} : memref<128x128xf32, #tpu.memory_space<vmem>>, vector<8x8xf32>,
    %c14_i32_409 = arith.constant 14 : i32
    %631 = arith.addi %0, %c14_i32_409 : i32
    %632 = arith.index_cast %631 : i32 to index
    %633 = arith.index_cast %518 : i32 to index
    %634 = memref.load %arg1[%632, %633] : memref<16x8xi32, #tpu.memory_space<smem>>
    %635 = arith.index_cast %634 : i32 to index
    %c0_410 = arith.constant 0 : index
    %c0_411 = arith.constant 0 : index
    %636 = vector.load %arg2[%635, %c0_410, %c0_411] : memref<3x8x8xf32, #tpu.memory_space<vmem>>, vector<1x8x8xf32>
    %637 = vector.shape_cast %636 : vector<1x8x8xf32> to vector<8x8xf32>
    %c112_412 = arith.constant 112 : index
    %c112_413 = arith.constant 112 : index
    %638 = vector.load %arg4[%c112_412, %c112_413] : memref<128x128xf32, #tpu.memory_space<vmem>>, vector<8x8xf32>
    tpu.vector_store %arg4[%c112_412, %c112_413], %637 {strides = array<i32>} : memref<128x128xf32, #tpu.memory_space<vmem>>, vector<8x8xf32>,
    %c15_i32_414 = arith.constant 15 : i32
    %639 = arith.addi %0, %c15_i32_414 : i32
    %640 = arith.index_cast %639 : i32 to index
    %641 = arith.index_cast %518 : i32 to index
    %642 = memref.load %arg1[%640, %641] : memref<16x8xi32, #tpu.memory_space<smem>>
    %643 = arith.index_cast %642 : i32 to index
    %c0_415 = arith.constant 0 : index
    %c0_416 = arith.constant 0 : index
    %644 = vector.load %arg2[%643, %c0_415, %c0_416] : memref<3x8x8xf32, #tpu.memory_space<vmem>>, vector<1x8x8xf32>
    %645 = vector.shape_cast %644 : vector<1x8x8xf32> to vector<8x8xf32>
    %c120_417 = arith.constant 120 : index
    %c120_418 = arith.constant 120 : index
    %646 = vector.load %arg4[%c120_417, %c120_418] : memref<128x128xf32, #tpu.memory_space<vmem>>, vector<8x8xf32>
    tpu.vector_store %arg4[%c120_417, %c120_418], %645 {strides = array<i32>} : memref<128x128xf32, #tpu.memory_space<vmem>>, vector<8x8xf32>,
    %c0_419 = arith.constant 0 : index
    %c0_420 = arith.constant 0 : index
    %647 = vector.load %arg5[%c0_419, %c0_420] : memref<8x128xf32, #tpu.memory_space<vmem>>, vector<8x128xf32>
    %c0_421 = arith.constant 0 : index
    %c0_422 = arith.constant 0 : index
    %648 = vector.load %arg4[%c0_421, %c0_422] : memref<128x128xf32, #tpu.memory_space<vmem>>, vector<128x128xf32>
    %cst_423 = arith.constant dense<0.000000e+00> : vector<8x128xf32>
    %649 = tpu.matmul %647, %648, %cst_423 {dimension_numbers = #tpu.dot_dimension_numbers<[1], [0], [0], [1], [0, 0, 1, 1], [], []>} : vector<8x128xf32>, vector<128x128xf32>, vector<8x128xf32> -> vector<8x128xf32>
    %c0_424 = arith.constant 0 : index
    %c0_425 = arith.constant 0 : index
    %650 = vector.load %arg5[%c0_424, %c0_425] : memref<8x128xf32, #tpu.memory_space<vmem>>, vector<8x128xf32>
    tpu.vector_store %arg5[%c0_424, %c0_425], %649 {strides = array<i32>} : memref<8x128xf32, #tpu.memory_space<vmem>>, vector<8x128xf32>,
    %c4_i32_426 = arith.constant 4 : i32
    %c1_i32_427 = arith.constant 1 : i32
    %651 = arith.muli %c4_i32_426, %c1_i32_427 : i32
    %c1_i32_428 = arith.constant 1 : i32
    %652 = arith.addi %c1_i32_428, %651 : i32
    %c0_i32_429 = arith.constant 0 : i32
    %653 = arith.addi %0, %c0_i32_429 : i32
    %654 = arith.index_cast %653 : i32 to index
    %655 = arith.index_cast %652 : i32 to index
    %656 = memref.load %arg1[%654, %655] : memref<16x8xi32, #tpu.memory_space<smem>>
    %657 = arith.index_cast %656 : i32 to index
    %c0_430 = arith.constant 0 : index
    %c0_431 = arith.constant 0 : index
    %658 = vector.load %arg2[%657, %c0_430, %c0_431] : memref<3x8x8xf32, #tpu.memory_space<vmem>>, vector<1x8x8xf32>
    %659 = vector.shape_cast %658 : vector<1x8x8xf32> to vector<8x8xf32>
    %c0_432 = arith.constant 0 : index
    %c0_433 = arith.constant 0 : index
    %660 = vector.load %arg4[%c0_432, %c0_433] : memref<128x128xf32, #tpu.memory_space<vmem>>, vector<8x8xf32>
    tpu.vector_store %arg4[%c0_432, %c0_433], %659 {strides = array<i32>} : memref<128x128xf32, #tpu.memory_space<vmem>>, vector<8x8xf32>,
    %c1_i32_434 = arith.constant 1 : i32
    %661 = arith.addi %0, %c1_i32_434 : i32
    %662 = arith.index_cast %661 : i32 to index
    %663 = arith.index_cast %652 : i32 to index
    %664 = memref.load %arg1[%662, %663] : memref<16x8xi32, #tpu.memory_space<smem>>
    %665 = arith.index_cast %664 : i32 to index
    %c0_435 = arith.constant 0 : index
    %c0_436 = arith.constant 0 : index
    %666 = vector.load %arg2[%665, %c0_435, %c0_436] : memref<3x8x8xf32, #tpu.memory_space<vmem>>, vector<1x8x8xf32>
    %667 = vector.shape_cast %666 : vector<1x8x8xf32> to vector<8x8xf32>
    %c8_437 = arith.constant 8 : index
    %c8_438 = arith.constant 8 : index
    %668 = vector.load %arg4[%c8_437, %c8_438] : memref<128x128xf32, #tpu.memory_space<vmem>>, vector<8x8xf32>
    tpu.vector_store %arg4[%c8_437, %c8_438], %667 {strides = array<i32>} : memref<128x128xf32, #tpu.memory_space<vmem>>, vector<8x8xf32>,
    %c2_i32_439 = arith.constant 2 : i32
    %669 = arith.addi %0, %c2_i32_439 : i32
    %670 = arith.index_cast %669 : i32 to index
    %671 = arith.index_cast %652 : i32 to index
    %672 = memref.load %arg1[%670, %671] : memref<16x8xi32, #tpu.memory_space<smem>>
    %673 = arith.index_cast %672 : i32 to index
    %c0_440 = arith.constant 0 : index
    %c0_441 = arith.constant 0 : index
    %674 = vector.load %arg2[%673, %c0_440, %c0_441] : memref<3x8x8xf32, #tpu.memory_space<vmem>>, vector<1x8x8xf32>
    %675 = vector.shape_cast %674 : vector<1x8x8xf32> to vector<8x8xf32>
    %c16_442 = arith.constant 16 : index
    %c16_443 = arith.constant 16 : index
    %676 = vector.load %arg4[%c16_442, %c16_443] : memref<128x128xf32, #tpu.memory_space<vmem>>, vector<8x8xf32>
    tpu.vector_store %arg4[%c16_442, %c16_443], %675 {strides = array<i32>} : memref<128x128xf32, #tpu.memory_space<vmem>>, vector<8x8xf32>,
    %c3_i32_444 = arith.constant 3 : i32
    %677 = arith.addi %0, %c3_i32_444 : i32
    %678 = arith.index_cast %677 : i32 to index
    %679 = arith.index_cast %652 : i32 to index
    %680 = memref.load %arg1[%678, %679] : memref<16x8xi32, #tpu.memory_space<smem>>
    %681 = arith.index_cast %680 : i32 to index
    %c0_445 = arith.constant 0 : index
    %c0_446 = arith.constant 0 : index
    %682 = vector.load %arg2[%681, %c0_445, %c0_446] : memref<3x8x8xf32, #tpu.memory_space<vmem>>, vector<1x8x8xf32>
    %683 = vector.shape_cast %682 : vector<1x8x8xf32> to vector<8x8xf32>
    %c24_447 = arith.constant 24 : index
    %c24_448 = arith.constant 24 : index
    %684 = vector.load %arg4[%c24_447, %c24_448] : memref<128x128xf32, #tpu.memory_space<vmem>>, vector<8x8xf32>
    tpu.vector_store %arg4[%c24_447, %c24_448], %683 {strides = array<i32>} : memref<128x128xf32, #tpu.memory_space<vmem>>, vector<8x8xf32>,
    %c4_i32_449 = arith.constant 4 : i32
    %685 = arith.addi %0, %c4_i32_449 : i32
    %686 = arith.index_cast %685 : i32 to index
    %687 = arith.index_cast %652 : i32 to index
    %688 = memref.load %arg1[%686, %687] : memref<16x8xi32, #tpu.memory_space<smem>>
    %689 = arith.index_cast %688 : i32 to index
    %c0_450 = arith.constant 0 : index
    %c0_451 = arith.constant 0 : index
    %690 = vector.load %arg2[%689, %c0_450, %c0_451] : memref<3x8x8xf32, #tpu.memory_space<vmem>>, vector<1x8x8xf32>
    %691 = vector.shape_cast %690 : vector<1x8x8xf32> to vector<8x8xf32>
    %c32_452 = arith.constant 32 : index
    %c32_453 = arith.constant 32 : index
    %692 = vector.load %arg4[%c32_452, %c32_453] : memref<128x128xf32, #tpu.memory_space<vmem>>, vector<8x8xf32>
    tpu.vector_store %arg4[%c32_452, %c32_453], %691 {strides = array<i32>} : memref<128x128xf32, #tpu.memory_space<vmem>>, vector<8x8xf32>,
    %c5_i32_454 = arith.constant 5 : i32
    %693 = arith.addi %0, %c5_i32_454 : i32
    %694 = arith.index_cast %693 : i32 to index
    %695 = arith.index_cast %652 : i32 to index
    %696 = memref.load %arg1[%694, %695] : memref<16x8xi32, #tpu.memory_space<smem>>
    %697 = arith.index_cast %696 : i32 to index
    %c0_455 = arith.constant 0 : index
    %c0_456 = arith.constant 0 : index
    %698 = vector.load %arg2[%697, %c0_455, %c0_456] : memref<3x8x8xf32, #tpu.memory_space<vmem>>, vector<1x8x8xf32>
    %699 = vector.shape_cast %698 : vector<1x8x8xf32> to vector<8x8xf32>
    %c40_457 = arith.constant 40 : index
    %c40_458 = arith.constant 40 : index
    %700 = vector.load %arg4[%c40_457, %c40_458] : memref<128x128xf32, #tpu.memory_space<vmem>>, vector<8x8xf32>
    tpu.vector_store %arg4[%c40_457, %c40_458], %699 {strides = array<i32>} : memref<128x128xf32, #tpu.memory_space<vmem>>, vector<8x8xf32>,
    %c6_i32_459 = arith.constant 6 : i32
    %701 = arith.addi %0, %c6_i32_459 : i32
    %702 = arith.index_cast %701 : i32 to index
    %703 = arith.index_cast %652 : i32 to index
    %704 = memref.load %arg1[%702, %703] : memref<16x8xi32, #tpu.memory_space<smem>>
    %705 = arith.index_cast %704 : i32 to index
    %c0_460 = arith.constant 0 : index
    %c0_461 = arith.constant 0 : index
    %706 = vector.load %arg2[%705, %c0_460, %c0_461] : memref<3x8x8xf32, #tpu.memory_space<vmem>>, vector<1x8x8xf32>
    %707 = vector.shape_cast %706 : vector<1x8x8xf32> to vector<8x8xf32>
    %c48_462 = arith.constant 48 : index
    %c48_463 = arith.constant 48 : index
    %708 = vector.load %arg4[%c48_462, %c48_463] : memref<128x128xf32, #tpu.memory_space<vmem>>, vector<8x8xf32>
    tpu.vector_store %arg4[%c48_462, %c48_463], %707 {strides = array<i32>} : memref<128x128xf32, #tpu.memory_space<vmem>>, vector<8x8xf32>,
    %c7_i32_464 = arith.constant 7 : i32
    %709 = arith.addi %0, %c7_i32_464 : i32
    %710 = arith.index_cast %709 : i32 to index
    %711 = arith.index_cast %652 : i32 to index
    %712 = memref.load %arg1[%710, %711] : memref<16x8xi32, #tpu.memory_space<smem>>
    %713 = arith.index_cast %712 : i32 to index
    %c0_465 = arith.constant 0 : index
    %c0_466 = arith.constant 0 : index
    %714 = vector.load %arg2[%713, %c0_465, %c0_466] : memref<3x8x8xf32, #tpu.memory_space<vmem>>, vector<1x8x8xf32>
    %715 = vector.shape_cast %714 : vector<1x8x8xf32> to vector<8x8xf32>
    %c56_467 = arith.constant 56 : index
    %c56_468 = arith.constant 56 : index
    %716 = vector.load %arg4[%c56_467, %c56_468] : memref<128x128xf32, #tpu.memory_space<vmem>>, vector<8x8xf32>
    tpu.vector_store %arg4[%c56_467, %c56_468], %715 {strides = array<i32>} : memref<128x128xf32, #tpu.memory_space<vmem>>, vector<8x8xf32>,
    %c8_i32_469 = arith.constant 8 : i32
    %717 = arith.addi %0, %c8_i32_469 : i32
    %718 = arith.index_cast %717 : i32 to index
    %719 = arith.index_cast %652 : i32 to index
    %720 = memref.load %arg1[%718, %719] : memref<16x8xi32, #tpu.memory_space<smem>>
    %721 = arith.index_cast %720 : i32 to index
    %c0_470 = arith.constant 0 : index
    %c0_471 = arith.constant 0 : index
    %722 = vector.load %arg2[%721, %c0_470, %c0_471] : memref<3x8x8xf32, #tpu.memory_space<vmem>>, vector<1x8x8xf32>
    %723 = vector.shape_cast %722 : vector<1x8x8xf32> to vector<8x8xf32>
    %c64_472 = arith.constant 64 : index
    %c64_473 = arith.constant 64 : index
    %724 = vector.load %arg4[%c64_472, %c64_473] : memref<128x128xf32, #tpu.memory_space<vmem>>, vector<8x8xf32>
    tpu.vector_store %arg4[%c64_472, %c64_473], %723 {strides = array<i32>} : memref<128x128xf32, #tpu.memory_space<vmem>>, vector<8x8xf32>,
    %c9_i32_474 = arith.constant 9 : i32
    %725 = arith.addi %0, %c9_i32_474 : i32
    %726 = arith.index_cast %725 : i32 to index
    %727 = arith.index_cast %652 : i32 to index
    %728 = memref.load %arg1[%726, %727] : memref<16x8xi32, #tpu.memory_space<smem>>
    %729 = arith.index_cast %728 : i32 to index
    %c0_475 = arith.constant 0 : index
    %c0_476 = arith.constant 0 : index
    %730 = vector.load %arg2[%729, %c0_475, %c0_476] : memref<3x8x8xf32, #tpu.memory_space<vmem>>, vector<1x8x8xf32>
    %731 = vector.shape_cast %730 : vector<1x8x8xf32> to vector<8x8xf32>
    %c72_477 = arith.constant 72 : index
    %c72_478 = arith.constant 72 : index
    %732 = vector.load %arg4[%c72_477, %c72_478] : memref<128x128xf32, #tpu.memory_space<vmem>>, vector<8x8xf32>
    tpu.vector_store %arg4[%c72_477, %c72_478], %731 {strides = array<i32>} : memref<128x128xf32, #tpu.memory_space<vmem>>, vector<8x8xf32>,
    %c10_i32_479 = arith.constant 10 : i32
    %733 = arith.addi %0, %c10_i32_479 : i32
    %734 = arith.index_cast %733 : i32 to index
    %735 = arith.index_cast %652 : i32 to index
    %736 = memref.load %arg1[%734, %735] : memref<16x8xi32, #tpu.memory_space<smem>>
    %737 = arith.index_cast %736 : i32 to index
    %c0_480 = arith.constant 0 : index
    %c0_481 = arith.constant 0 : index
    %738 = vector.load %arg2[%737, %c0_480, %c0_481] : memref<3x8x8xf32, #tpu.memory_space<vmem>>, vector<1x8x8xf32>
    %739 = vector.shape_cast %738 : vector<1x8x8xf32> to vector<8x8xf32>
    %c80_482 = arith.constant 80 : index
    %c80_483 = arith.constant 80 : index
    %740 = vector.load %arg4[%c80_482, %c80_483] : memref<128x128xf32, #tpu.memory_space<vmem>>, vector<8x8xf32>
    tpu.vector_store %arg4[%c80_482, %c80_483], %739 {strides = array<i32>} : memref<128x128xf32, #tpu.memory_space<vmem>>, vector<8x8xf32>,
    %c11_i32_484 = arith.constant 11 : i32
    %741 = arith.addi %0, %c11_i32_484 : i32
    %742 = arith.index_cast %741 : i32 to index
    %743 = arith.index_cast %652 : i32 to index
    %744 = memref.load %arg1[%742, %743] : memref<16x8xi32, #tpu.memory_space<smem>>
    %745 = arith.index_cast %744 : i32 to index
    %c0_485 = arith.constant 0 : index
    %c0_486 = arith.constant 0 : index
    %746 = vector.load %arg2[%745, %c0_485, %c0_486] : memref<3x8x8xf32, #tpu.memory_space<vmem>>, vector<1x8x8xf32>
    %747 = vector.shape_cast %746 : vector<1x8x8xf32> to vector<8x8xf32>
    %c88_487 = arith.constant 88 : index
    %c88_488 = arith.constant 88 : index
    %748 = vector.load %arg4[%c88_487, %c88_488] : memref<128x128xf32, #tpu.memory_space<vmem>>, vector<8x8xf32>
    tpu.vector_store %arg4[%c88_487, %c88_488], %747 {strides = array<i32>} : memref<128x128xf32, #tpu.memory_space<vmem>>, vector<8x8xf32>,
    %c12_i32_489 = arith.constant 12 : i32
    %749 = arith.addi %0, %c12_i32_489 : i32
    %750 = arith.index_cast %749 : i32 to index
    %751 = arith.index_cast %652 : i32 to index
    %752 = memref.load %arg1[%750, %751] : memref<16x8xi32, #tpu.memory_space<smem>>
    %753 = arith.index_cast %752 : i32 to index
    %c0_490 = arith.constant 0 : index
    %c0_491 = arith.constant 0 : index
    %754 = vector.load %arg2[%753, %c0_490, %c0_491] : memref<3x8x8xf32, #tpu.memory_space<vmem>>, vector<1x8x8xf32>
    %755 = vector.shape_cast %754 : vector<1x8x8xf32> to vector<8x8xf32>
    %c96_492 = arith.constant 96 : index
    %c96_493 = arith.constant 96 : index
    %756 = vector.load %arg4[%c96_492, %c96_493] : memref<128x128xf32, #tpu.memory_space<vmem>>, vector<8x8xf32>
    tpu.vector_store %arg4[%c96_492, %c96_493], %755 {strides = array<i32>} : memref<128x128xf32, #tpu.memory_space<vmem>>, vector<8x8xf32>,
    %c13_i32_494 = arith.constant 13 : i32
    %757 = arith.addi %0, %c13_i32_494 : i32
    %758 = arith.index_cast %757 : i32 to index
    %759 = arith.index_cast %652 : i32 to index
    %760 = memref.load %arg1[%758, %759] : memref<16x8xi32, #tpu.memory_space<smem>>
    %761 = arith.index_cast %760 : i32 to index
    %c0_495 = arith.constant 0 : index
    %c0_496 = arith.constant 0 : index
    %762 = vector.load %arg2[%761, %c0_495, %c0_496] : memref<3x8x8xf32, #tpu.memory_space<vmem>>, vector<1x8x8xf32>
    %763 = vector.shape_cast %762 : vector<1x8x8xf32> to vector<8x8xf32>
    %c104_497 = arith.constant 104 : index
    %c104_498 = arith.constant 104 : index
    %764 = vector.load %arg4[%c104_497, %c104_498] : memref<128x128xf32, #tpu.memory_space<vmem>>, vector<8x8xf32>
    tpu.vector_store %arg4[%c104_497, %c104_498], %763 {strides = array<i32>} : memref<128x128xf32, #tpu.memory_space<vmem>>, vector<8x8xf32>,
    %c14_i32_499 = arith.constant 14 : i32
    %765 = arith.addi %0, %c14_i32_499 : i32
    %766 = arith.index_cast %765 : i32 to index
    %767 = arith.index_cast %652 : i32 to index
    %768 = memref.load %arg1[%766, %767] : memref<16x8xi32, #tpu.memory_space<smem>>
    %769 = arith.index_cast %768 : i32 to index
    %c0_500 = arith.constant 0 : index
    %c0_501 = arith.constant 0 : index
    %770 = vector.load %arg2[%769, %c0_500, %c0_501] : memref<3x8x8xf32, #tpu.memory_space<vmem>>, vector<1x8x8xf32>
    %771 = vector.shape_cast %770 : vector<1x8x8xf32> to vector<8x8xf32>
    %c112_502 = arith.constant 112 : index
    %c112_503 = arith.constant 112 : index
    %772 = vector.load %arg4[%c112_502, %c112_503] : memref<128x128xf32, #tpu.memory_space<vmem>>, vector<8x8xf32>
    tpu.vector_store %arg4[%c112_502, %c112_503], %771 {strides = array<i32>} : memref<128x128xf32, #tpu.memory_space<vmem>>, vector<8x8xf32>,
    %c15_i32_504 = arith.constant 15 : i32
    %773 = arith.addi %0, %c15_i32_504 : i32
    %774 = arith.index_cast %773 : i32 to index
    %775 = arith.index_cast %652 : i32 to index
    %776 = memref.load %arg1[%774, %775] : memref<16x8xi32, #tpu.memory_space<smem>>
    %777 = arith.index_cast %776 : i32 to index
    %c0_505 = arith.constant 0 : index
    %c0_506 = arith.constant 0 : index
    %778 = vector.load %arg2[%777, %c0_505, %c0_506] : memref<3x8x8xf32, #tpu.memory_space<vmem>>, vector<1x8x8xf32>
    %779 = vector.shape_cast %778 : vector<1x8x8xf32> to vector<8x8xf32>
    %c120_507 = arith.constant 120 : index
    %c120_508 = arith.constant 120 : index
    %780 = vector.load %arg4[%c120_507, %c120_508] : memref<128x128xf32, #tpu.memory_space<vmem>>, vector<8x8xf32>
    tpu.vector_store %arg4[%c120_507, %c120_508], %779 {strides = array<i32>} : memref<128x128xf32, #tpu.memory_space<vmem>>, vector<8x8xf32>,
    %c0_509 = arith.constant 0 : index
    %c0_510 = arith.constant 0 : index
    %781 = vector.load %arg5[%c0_509, %c0_510] : memref<8x128xf32, #tpu.memory_space<vmem>>, vector<8x128xf32>
    %c0_511 = arith.constant 0 : index
    %c0_512 = arith.constant 0 : index
    %782 = vector.load %arg4[%c0_511, %c0_512] : memref<128x128xf32, #tpu.memory_space<vmem>>, vector<128x128xf32>
    %cst_513 = arith.constant dense<0.000000e+00> : vector<8x128xf32>
    %783 = tpu.matmul %781, %782, %cst_513 {dimension_numbers = #tpu.dot_dimension_numbers<[1], [0], [0], [1], [0, 0, 1, 1], [], []>} : vector<8x128xf32>, vector<128x128xf32>, vector<8x128xf32> -> vector<8x128xf32>
    %c0_514 = arith.constant 0 : index
    %c0_515 = arith.constant 0 : index
    %784 = vector.load %arg5[%c0_514, %c0_515] : memref<8x128xf32, #tpu.memory_space<vmem>>, vector<8x128xf32>
    tpu.vector_store %arg5[%c0_514, %c0_515], %783 {strides = array<i32>} : memref<8x128xf32, #tpu.memory_space<vmem>>, vector<8x128xf32>,
    %c5_i32_516 = arith.constant 5 : i32
    %c1_i32_517 = arith.constant 1 : i32
    %785 = arith.muli %c5_i32_516, %c1_i32_517 : i32
    %c1_i32_518 = arith.constant 1 : i32
    %786 = arith.addi %c1_i32_518, %785 : i32
    %c0_i32_519 = arith.constant 0 : i32
    %787 = arith.addi %0, %c0_i32_519 : i32
    %788 = arith.index_cast %787 : i32 to index
    %789 = arith.index_cast %786 : i32 to index
    %790 = memref.load %arg1[%788, %789] : memref<16x8xi32, #tpu.memory_space<smem>>
    %791 = arith.index_cast %790 : i32 to index
    %c0_520 = arith.constant 0 : index
    %c0_521 = arith.constant 0 : index
    %792 = vector.load %arg2[%791, %c0_520, %c0_521] : memref<3x8x8xf32, #tpu.memory_space<vmem>>, vector<1x8x8xf32>
    %793 = vector.shape_cast %792 : vector<1x8x8xf32> to vector<8x8xf32>
    %c0_522 = arith.constant 0 : index
    %c0_523 = arith.constant 0 : index
    %794 = vector.load %arg4[%c0_522, %c0_523] : memref<128x128xf32, #tpu.memory_space<vmem>>, vector<8x8xf32>
    tpu.vector_store %arg4[%c0_522, %c0_523], %793 {strides = array<i32>} : memref<128x128xf32, #tpu.memory_space<vmem>>, vector<8x8xf32>,
    %c1_i32_524 = arith.constant 1 : i32
    %795 = arith.addi %0, %c1_i32_524 : i32
    %796 = arith.index_cast %795 : i32 to index
    %797 = arith.index_cast %786 : i32 to index
    %798 = memref.load %arg1[%796, %797] : memref<16x8xi32, #tpu.memory_space<smem>>
    %799 = arith.index_cast %798 : i32 to index
    %c0_525 = arith.constant 0 : index
    %c0_526 = arith.constant 0 : index
    %800 = vector.load %arg2[%799, %c0_525, %c0_526] : memref<3x8x8xf32, #tpu.memory_space<vmem>>, vector<1x8x8xf32>
    %801 = vector.shape_cast %800 : vector<1x8x8xf32> to vector<8x8xf32>
    %c8_527 = arith.constant 8 : index
    %c8_528 = arith.constant 8 : index
    %802 = vector.load %arg4[%c8_527, %c8_528] : memref<128x128xf32, #tpu.memory_space<vmem>>, vector<8x8xf32>
    tpu.vector_store %arg4[%c8_527, %c8_528], %801 {strides = array<i32>} : memref<128x128xf32, #tpu.memory_space<vmem>>, vector<8x8xf32>,
    %c2_i32_529 = arith.constant 2 : i32
    %803 = arith.addi %0, %c2_i32_529 : i32
    %804 = arith.index_cast %803 : i32 to index
    %805 = arith.index_cast %786 : i32 to index
    %806 = memref.load %arg1[%804, %805] : memref<16x8xi32, #tpu.memory_space<smem>>
    %807 = arith.index_cast %806 : i32 to index
    %c0_530 = arith.constant 0 : index
    %c0_531 = arith.constant 0 : index
    %808 = vector.load %arg2[%807, %c0_530, %c0_531] : memref<3x8x8xf32, #tpu.memory_space<vmem>>, vector<1x8x8xf32>
    %809 = vector.shape_cast %808 : vector<1x8x8xf32> to vector<8x8xf32>
    %c16_532 = arith.constant 16 : index
    %c16_533 = arith.constant 16 : index
    %810 = vector.load %arg4[%c16_532, %c16_533] : memref<128x128xf32, #tpu.memory_space<vmem>>, vector<8x8xf32>
    tpu.vector_store %arg4[%c16_532, %c16_533], %809 {strides = array<i32>} : memref<128x128xf32, #tpu.memory_space<vmem>>, vector<8x8xf32>,
    %c3_i32_534 = arith.constant 3 : i32
    %811 = arith.addi %0, %c3_i32_534 : i32
    %812 = arith.index_cast %811 : i32 to index
    %813 = arith.index_cast %786 : i32 to index
    %814 = memref.load %arg1[%812, %813] : memref<16x8xi32, #tpu.memory_space<smem>>
    %815 = arith.index_cast %814 : i32 to index
    %c0_535 = arith.constant 0 : index
    %c0_536 = arith.constant 0 : index
    %816 = vector.load %arg2[%815, %c0_535, %c0_536] : memref<3x8x8xf32, #tpu.memory_space<vmem>>, vector<1x8x8xf32>
    %817 = vector.shape_cast %816 : vector<1x8x8xf32> to vector<8x8xf32>
    %c24_537 = arith.constant 24 : index
    %c24_538 = arith.constant 24 : index
    %818 = vector.load %arg4[%c24_537, %c24_538] : memref<128x128xf32, #tpu.memory_space<vmem>>, vector<8x8xf32>
    tpu.vector_store %arg4[%c24_537, %c24_538], %817 {strides = array<i32>} : memref<128x128xf32, #tpu.memory_space<vmem>>, vector<8x8xf32>,
    %c4_i32_539 = arith.constant 4 : i32
    %819 = arith.addi %0, %c4_i32_539 : i32
    %820 = arith.index_cast %819 : i32 to index
    %821 = arith.index_cast %786 : i32 to index
    %822 = memref.load %arg1[%820, %821] : memref<16x8xi32, #tpu.memory_space<smem>>
    %823 = arith.index_cast %822 : i32 to index
    %c0_540 = arith.constant 0 : index
    %c0_541 = arith.constant 0 : index
    %824 = vector.load %arg2[%823, %c0_540, %c0_541] : memref<3x8x8xf32, #tpu.memory_space<vmem>>, vector<1x8x8xf32>
    %825 = vector.shape_cast %824 : vector<1x8x8xf32> to vector<8x8xf32>
    %c32_542 = arith.constant 32 : index
    %c32_543 = arith.constant 32 : index
    %826 = vector.load %arg4[%c32_542, %c32_543] : memref<128x128xf32, #tpu.memory_space<vmem>>, vector<8x8xf32>
    tpu.vector_store %arg4[%c32_542, %c32_543], %825 {strides = array<i32>} : memref<128x128xf32, #tpu.memory_space<vmem>>, vector<8x8xf32>,
    %c5_i32_544 = arith.constant 5 : i32
    %827 = arith.addi %0, %c5_i32_544 : i32
    %828 = arith.index_cast %827 : i32 to index
    %829 = arith.index_cast %786 : i32 to index
    %830 = memref.load %arg1[%828, %829] : memref<16x8xi32, #tpu.memory_space<smem>>
    %831 = arith.index_cast %830 : i32 to index
    %c0_545 = arith.constant 0 : index
    %c0_546 = arith.constant 0 : index
    %832 = vector.load %arg2[%831, %c0_545, %c0_546] : memref<3x8x8xf32, #tpu.memory_space<vmem>>, vector<1x8x8xf32>
    %833 = vector.shape_cast %832 : vector<1x8x8xf32> to vector<8x8xf32>
    %c40_547 = arith.constant 40 : index
    %c40_548 = arith.constant 40 : index
    %834 = vector.load %arg4[%c40_547, %c40_548] : memref<128x128xf32, #tpu.memory_space<vmem>>, vector<8x8xf32>
    tpu.vector_store %arg4[%c40_547, %c40_548], %833 {strides = array<i32>} : memref<128x128xf32, #tpu.memory_space<vmem>>, vector<8x8xf32>,
    %c6_i32_549 = arith.constant 6 : i32
    %835 = arith.addi %0, %c6_i32_549 : i32
    %836 = arith.index_cast %835 : i32 to index
    %837 = arith.index_cast %786 : i32 to index
    %838 = memref.load %arg1[%836, %837] : memref<16x8xi32, #tpu.memory_space<smem>>
    %839 = arith.index_cast %838 : i32 to index
    %c0_550 = arith.constant 0 : index
    %c0_551 = arith.constant 0 : index
    %840 = vector.load %arg2[%839, %c0_550, %c0_551] : memref<3x8x8xf32, #tpu.memory_space<vmem>>, vector<1x8x8xf32>
    %841 = vector.shape_cast %840 : vector<1x8x8xf32> to vector<8x8xf32>
    %c48_552 = arith.constant 48 : index
    %c48_553 = arith.constant 48 : index
    %842 = vector.load %arg4[%c48_552, %c48_553] : memref<128x128xf32, #tpu.memory_space<vmem>>, vector<8x8xf32>
    tpu.vector_store %arg4[%c48_552, %c48_553], %841 {strides = array<i32>} : memref<128x128xf32, #tpu.memory_space<vmem>>, vector<8x8xf32>,
    %c7_i32_554 = arith.constant 7 : i32
    %843 = arith.addi %0, %c7_i32_554 : i32
    %844 = arith.index_cast %843 : i32 to index
    %845 = arith.index_cast %786 : i32 to index
    %846 = memref.load %arg1[%844, %845] : memref<16x8xi32, #tpu.memory_space<smem>>
    %847 = arith.index_cast %846 : i32 to index
    %c0_555 = arith.constant 0 : index
    %c0_556 = arith.constant 0 : index
    %848 = vector.load %arg2[%847, %c0_555, %c0_556] : memref<3x8x8xf32, #tpu.memory_space<vmem>>, vector<1x8x8xf32>
    %849 = vector.shape_cast %848 : vector<1x8x8xf32> to vector<8x8xf32>
    %c56_557 = arith.constant 56 : index
    %c56_558 = arith.constant 56 : index
    %850 = vector.load %arg4[%c56_557, %c56_558] : memref<128x128xf32, #tpu.memory_space<vmem>>, vector<8x8xf32>
    tpu.vector_store %arg4[%c56_557, %c56_558], %849 {strides = array<i32>} : memref<128x128xf32, #tpu.memory_space<vmem>>, vector<8x8xf32>,
    %c8_i32_559 = arith.constant 8 : i32
    %851 = arith.addi %0, %c8_i32_559 : i32
    %852 = arith.index_cast %851 : i32 to index
    %853 = arith.index_cast %786 : i32 to index
    %854 = memref.load %arg1[%852, %853] : memref<16x8xi32, #tpu.memory_space<smem>>
    %855 = arith.index_cast %854 : i32 to index
    %c0_560 = arith.constant 0 : index
    %c0_561 = arith.constant 0 : index
    %856 = vector.load %arg2[%855, %c0_560, %c0_561] : memref<3x8x8xf32, #tpu.memory_space<vmem>>, vector<1x8x8xf32>
    %857 = vector.shape_cast %856 : vector<1x8x8xf32> to vector<8x8xf32>
    %c64_562 = arith.constant 64 : index
    %c64_563 = arith.constant 64 : index
    %858 = vector.load %arg4[%c64_562, %c64_563] : memref<128x128xf32, #tpu.memory_space<vmem>>, vector<8x8xf32>
    tpu.vector_store %arg4[%c64_562, %c64_563], %857 {strides = array<i32>} : memref<128x128xf32, #tpu.memory_space<vmem>>, vector<8x8xf32>,
    %c9_i32_564 = arith.constant 9 : i32
    %859 = arith.addi %0, %c9_i32_564 : i32
    %860 = arith.index_cast %859 : i32 to index
    %861 = arith.index_cast %786 : i32 to index
    %862 = memref.load %arg1[%860, %861] : memref<16x8xi32, #tpu.memory_space<smem>>
    %863 = arith.index_cast %862 : i32 to index
    %c0_565 = arith.constant 0 : index
    %c0_566 = arith.constant 0 : index
    %864 = vector.load %arg2[%863, %c0_565, %c0_566] : memref<3x8x8xf32, #tpu.memory_space<vmem>>, vector<1x8x8xf32>
    %865 = vector.shape_cast %864 : vector<1x8x8xf32> to vector<8x8xf32>
    %c72_567 = arith.constant 72 : index
    %c72_568 = arith.constant 72 : index
    %866 = vector.load %arg4[%c72_567, %c72_568] : memref<128x128xf32, #tpu.memory_space<vmem>>, vector<8x8xf32>
    tpu.vector_store %arg4[%c72_567, %c72_568], %865 {strides = array<i32>} : memref<128x128xf32, #tpu.memory_space<vmem>>, vector<8x8xf32>,
    %c10_i32_569 = arith.constant 10 : i32
    %867 = arith.addi %0, %c10_i32_569 : i32
    %868 = arith.index_cast %867 : i32 to index
    %869 = arith.index_cast %786 : i32 to index
    %870 = memref.load %arg1[%868, %869] : memref<16x8xi32, #tpu.memory_space<smem>>
    %871 = arith.index_cast %870 : i32 to index
    %c0_570 = arith.constant 0 : index
    %c0_571 = arith.constant 0 : index
    %872 = vector.load %arg2[%871, %c0_570, %c0_571] : memref<3x8x8xf32, #tpu.memory_space<vmem>>, vector<1x8x8xf32>
    %873 = vector.shape_cast %872 : vector<1x8x8xf32> to vector<8x8xf32>
    %c80_572 = arith.constant 80 : index
    %c80_573 = arith.constant 80 : index
    %874 = vector.load %arg4[%c80_572, %c80_573] : memref<128x128xf32, #tpu.memory_space<vmem>>, vector<8x8xf32>
    tpu.vector_store %arg4[%c80_572, %c80_573], %873 {strides = array<i32>} : memref<128x128xf32, #tpu.memory_space<vmem>>, vector<8x8xf32>,
    %c11_i32_574 = arith.constant 11 : i32
    %875 = arith.addi %0, %c11_i32_574 : i32
    %876 = arith.index_cast %875 : i32 to index
    %877 = arith.index_cast %786 : i32 to index
    %878 = memref.load %arg1[%876, %877] : memref<16x8xi32, #tpu.memory_space<smem>>
    %879 = arith.index_cast %878 : i32 to index
    %c0_575 = arith.constant 0 : index
    %c0_576 = arith.constant 0 : index
    %880 = vector.load %arg2[%879, %c0_575, %c0_576] : memref<3x8x8xf32, #tpu.memory_space<vmem>>, vector<1x8x8xf32>
    %881 = vector.shape_cast %880 : vector<1x8x8xf32> to vector<8x8xf32>
    %c88_577 = arith.constant 88 : index
    %c88_578 = arith.constant 88 : index
    %882 = vector.load %arg4[%c88_577, %c88_578] : memref<128x128xf32, #tpu.memory_space<vmem>>, vector<8x8xf32>
    tpu.vector_store %arg4[%c88_577, %c88_578], %881 {strides = array<i32>} : memref<128x128xf32, #tpu.memory_space<vmem>>, vector<8x8xf32>,
    %c12_i32_579 = arith.constant 12 : i32
    %883 = arith.addi %0, %c12_i32_579 : i32
    %884 = arith.index_cast %883 : i32 to index
    %885 = arith.index_cast %786 : i32 to index
    %886 = memref.load %arg1[%884, %885] : memref<16x8xi32, #tpu.memory_space<smem>>
    %887 = arith.index_cast %886 : i32 to index
    %c0_580 = arith.constant 0 : index
    %c0_581 = arith.constant 0 : index
    %888 = vector.load %arg2[%887, %c0_580, %c0_581] : memref<3x8x8xf32, #tpu.memory_space<vmem>>, vector<1x8x8xf32>
    %889 = vector.shape_cast %888 : vector<1x8x8xf32> to vector<8x8xf32>
    %c96_582 = arith.constant 96 : index
    %c96_583 = arith.constant 96 : index
    %890 = vector.load %arg4[%c96_582, %c96_583] : memref<128x128xf32, #tpu.memory_space<vmem>>, vector<8x8xf32>
    tpu.vector_store %arg4[%c96_582, %c96_583], %889 {strides = array<i32>} : memref<128x128xf32, #tpu.memory_space<vmem>>, vector<8x8xf32>,
    %c13_i32_584 = arith.constant 13 : i32
    %891 = arith.addi %0, %c13_i32_584 : i32
    %892 = arith.index_cast %891 : i32 to index
    %893 = arith.index_cast %786 : i32 to index
    %894 = memref.load %arg1[%892, %893] : memref<16x8xi32, #tpu.memory_space<smem>>
    %895 = arith.index_cast %894 : i32 to index
    %c0_585 = arith.constant 0 : index
    %c0_586 = arith.constant 0 : index
    %896 = vector.load %arg2[%895, %c0_585, %c0_586] : memref<3x8x8xf32, #tpu.memory_space<vmem>>, vector<1x8x8xf32>
    %897 = vector.shape_cast %896 : vector<1x8x8xf32> to vector<8x8xf32>
    %c104_587 = arith.constant 104 : index
    %c104_588 = arith.constant 104 : index
    %898 = vector.load %arg4[%c104_587, %c104_588] : memref<128x128xf32, #tpu.memory_space<vmem>>, vector<8x8xf32>
    tpu.vector_store %arg4[%c104_587, %c104_588], %897 {strides = array<i32>} : memref<128x128xf32, #tpu.memory_space<vmem>>, vector<8x8xf32>,
    %c14_i32_589 = arith.constant 14 : i32
    %899 = arith.addi %0, %c14_i32_589 : i32
    %900 = arith.index_cast %899 : i32 to index
    %901 = arith.index_cast %786 : i32 to index
    %902 = memref.load %arg1[%900, %901] : memref<16x8xi32, #tpu.memory_space<smem>>
    %903 = arith.index_cast %902 : i32 to index
    %c0_590 = arith.constant 0 : index
    %c0_591 = arith.constant 0 : index
    %904 = vector.load %arg2[%903, %c0_590, %c0_591] : memref<3x8x8xf32, #tpu.memory_space<vmem>>, vector<1x8x8xf32>
    %905 = vector.shape_cast %904 : vector<1x8x8xf32> to vector<8x8xf32>
    %c112_592 = arith.constant 112 : index
    %c112_593 = arith.constant 112 : index
    %906 = vector.load %arg4[%c112_592, %c112_593] : memref<128x128xf32, #tpu.memory_space<vmem>>, vector<8x8xf32>
    tpu.vector_store %arg4[%c112_592, %c112_593], %905 {strides = array<i32>} : memref<128x128xf32, #tpu.memory_space<vmem>>, vector<8x8xf32>,
    %c15_i32_594 = arith.constant 15 : i32
    %907 = arith.addi %0, %c15_i32_594 : i32
    %908 = arith.index_cast %907 : i32 to index
    %909 = arith.index_cast %786 : i32 to index
    %910 = memref.load %arg1[%908, %909] : memref<16x8xi32, #tpu.memory_space<smem>>
    %911 = arith.index_cast %910 : i32 to index
    %c0_595 = arith.constant 0 : index
    %c0_596 = arith.constant 0 : index
    %912 = vector.load %arg2[%911, %c0_595, %c0_596] : memref<3x8x8xf32, #tpu.memory_space<vmem>>, vector<1x8x8xf32>
    %913 = vector.shape_cast %912 : vector<1x8x8xf32> to vector<8x8xf32>
    %c120_597 = arith.constant 120 : index
    %c120_598 = arith.constant 120 : index
    %914 = vector.load %arg4[%c120_597, %c120_598] : memref<128x128xf32, #tpu.memory_space<vmem>>, vector<8x8xf32>
    tpu.vector_store %arg4[%c120_597, %c120_598], %913 {strides = array<i32>} : memref<128x128xf32, #tpu.memory_space<vmem>>, vector<8x8xf32>,
    %c0_599 = arith.constant 0 : index
    %c0_600 = arith.constant 0 : index
    %915 = vector.load %arg5[%c0_599, %c0_600] : memref<8x128xf32, #tpu.memory_space<vmem>>, vector<8x128xf32>
    %c0_601 = arith.constant 0 : index
    %c0_602 = arith.constant 0 : index
    %916 = vector.load %arg4[%c0_601, %c0_602] : memref<128x128xf32, #tpu.memory_space<vmem>>, vector<128x128xf32>
    %cst_603 = arith.constant dense<0.000000e+00> : vector<8x128xf32>
    %917 = tpu.matmul %915, %916, %cst_603 {dimension_numbers = #tpu.dot_dimension_numbers<[1], [0], [0], [1], [0, 0, 1, 1], [], []>} : vector<8x128xf32>, vector<128x128xf32>, vector<8x128xf32> -> vector<8x128xf32>
    %c0_604 = arith.constant 0 : index
    %c0_605 = arith.constant 0 : index
    %918 = vector.load %arg5[%c0_604, %c0_605] : memref<8x128xf32, #tpu.memory_space<vmem>>, vector<8x128xf32>
    tpu.vector_store %arg5[%c0_604, %c0_605], %917 {strides = array<i32>} : memref<8x128xf32, #tpu.memory_space<vmem>>, vector<8x128xf32>,
    %c6_i32_606 = arith.constant 6 : i32
    %c1_i32_607 = arith.constant 1 : i32
    %919 = arith.muli %c6_i32_606, %c1_i32_607 : i32
    %c1_i32_608 = arith.constant 1 : i32
    %920 = arith.addi %c1_i32_608, %919 : i32
    %c0_i32_609 = arith.constant 0 : i32
    %921 = arith.addi %0, %c0_i32_609 : i32
    %922 = arith.index_cast %921 : i32 to index
    %923 = arith.index_cast %920 : i32 to index
    %924 = memref.load %arg1[%922, %923] : memref<16x8xi32, #tpu.memory_space<smem>>
    %925 = arith.index_cast %924 : i32 to index
    %c0_610 = arith.constant 0 : index
    %c0_611 = arith.constant 0 : index
    %926 = vector.load %arg2[%925, %c0_610, %c0_611] : memref<3x8x8xf32, #tpu.memory_space<vmem>>, vector<1x8x8xf32>
    %927 = vector.shape_cast %926 : vector<1x8x8xf32> to vector<8x8xf32>
    %c0_612 = arith.constant 0 : index
    %c0_613 = arith.constant 0 : index
    %928 = vector.load %arg4[%c0_612, %c0_613] : memref<128x128xf32, #tpu.memory_space<vmem>>, vector<8x8xf32>
    tpu.vector_store %arg4[%c0_612, %c0_613], %927 {strides = array<i32>} : memref<128x128xf32, #tpu.memory_space<vmem>>, vector<8x8xf32>,
    %c1_i32_614 = arith.constant 1 : i32
    %929 = arith.addi %0, %c1_i32_614 : i32
    %930 = arith.index_cast %929 : i32 to index
    %931 = arith.index_cast %920 : i32 to index
    %932 = memref.load %arg1[%930, %931] : memref<16x8xi32, #tpu.memory_space<smem>>
    %933 = arith.index_cast %932 : i32 to index
    %c0_615 = arith.constant 0 : index
    %c0_616 = arith.constant 0 : index
    %934 = vector.load %arg2[%933, %c0_615, %c0_616] : memref<3x8x8xf32, #tpu.memory_space<vmem>>, vector<1x8x8xf32>
    %935 = vector.shape_cast %934 : vector<1x8x8xf32> to vector<8x8xf32>
    %c8_617 = arith.constant 8 : index
    %c8_618 = arith.constant 8 : index
    %936 = vector.load %arg4[%c8_617, %c8_618] : memref<128x128xf32, #tpu.memory_space<vmem>>, vector<8x8xf32>
    tpu.vector_store %arg4[%c8_617, %c8_618], %935 {strides = array<i32>} : memref<128x128xf32, #tpu.memory_space<vmem>>, vector<8x8xf32>,
    %c2_i32_619 = arith.constant 2 : i32
    %937 = arith.addi %0, %c2_i32_619 : i32
    %938 = arith.index_cast %937 : i32 to index
    %939 = arith.index_cast %920 : i32 to index
    %940 = memref.load %arg1[%938, %939] : memref<16x8xi32, #tpu.memory_space<smem>>
    %941 = arith.index_cast %940 : i32 to index
    %c0_620 = arith.constant 0 : index
    %c0_621 = arith.constant 0 : index
    %942 = vector.load %arg2[%941, %c0_620, %c0_621] : memref<3x8x8xf32, #tpu.memory_space<vmem>>, vector<1x8x8xf32>
    %943 = vector.shape_cast %942 : vector<1x8x8xf32> to vector<8x8xf32>
    %c16_622 = arith.constant 16 : index
    %c16_623 = arith.constant 16 : index
    %944 = vector.load %arg4[%c16_622, %c16_623] : memref<128x128xf32, #tpu.memory_space<vmem>>, vector<8x8xf32>
    tpu.vector_store %arg4[%c16_622, %c16_623], %943 {strides = array<i32>} : memref<128x128xf32, #tpu.memory_space<vmem>>, vector<8x8xf32>,
    %c3_i32_624 = arith.constant 3 : i32
    %945 = arith.addi %0, %c3_i32_624 : i32
    %946 = arith.index_cast %945 : i32 to index
    %947 = arith.index_cast %920 : i32 to index
    %948 = memref.load %arg1[%946, %947] : memref<16x8xi32, #tpu.memory_space<smem>>
    %949 = arith.index_cast %948 : i32 to index
    %c0_625 = arith.constant 0 : index
    %c0_626 = arith.constant 0 : index
    %950 = vector.load %arg2[%949, %c0_625, %c0_626] : memref<3x8x8xf32, #tpu.memory_space<vmem>>, vector<1x8x8xf32>
    %951 = vector.shape_cast %950 : vector<1x8x8xf32> to vector<8x8xf32>
    %c24_627 = arith.constant 24 : index
    %c24_628 = arith.constant 24 : index
    %952 = vector.load %arg4[%c24_627, %c24_628] : memref<128x128xf32, #tpu.memory_space<vmem>>, vector<8x8xf32>
    tpu.vector_store %arg4[%c24_627, %c24_628], %951 {strides = array<i32>} : memref<128x128xf32, #tpu.memory_space<vmem>>, vector<8x8xf32>,
    %c4_i32_629 = arith.constant 4 : i32
    %953 = arith.addi %0, %c4_i32_629 : i32
    %954 = arith.index_cast %953 : i32 to index
    %955 = arith.index_cast %920 : i32 to index
    %956 = memref.load %arg1[%954, %955] : memref<16x8xi32, #tpu.memory_space<smem>>
    %957 = arith.index_cast %956 : i32 to index
    %c0_630 = arith.constant 0 : index
    %c0_631 = arith.constant 0 : index
    %958 = vector.load %arg2[%957, %c0_630, %c0_631] : memref<3x8x8xf32, #tpu.memory_space<vmem>>, vector<1x8x8xf32>
    %959 = vector.shape_cast %958 : vector<1x8x8xf32> to vector<8x8xf32>
    %c32_632 = arith.constant 32 : index
    %c32_633 = arith.constant 32 : index
    %960 = vector.load %arg4[%c32_632, %c32_633] : memref<128x128xf32, #tpu.memory_space<vmem>>, vector<8x8xf32>
    tpu.vector_store %arg4[%c32_632, %c32_633], %959 {strides = array<i32>} : memref<128x128xf32, #tpu.memory_space<vmem>>, vector<8x8xf32>,
    %c5_i32_634 = arith.constant 5 : i32
    %961 = arith.addi %0, %c5_i32_634 : i32
    %962 = arith.index_cast %961 : i32 to index
    %963 = arith.index_cast %920 : i32 to index
    %964 = memref.load %arg1[%962, %963] : memref<16x8xi32, #tpu.memory_space<smem>>
    %965 = arith.index_cast %964 : i32 to index
    %c0_635 = arith.constant 0 : index
    %c0_636 = arith.constant 0 : index
    %966 = vector.load %arg2[%965, %c0_635, %c0_636] : memref<3x8x8xf32, #tpu.memory_space<vmem>>, vector<1x8x8xf32>
    %967 = vector.shape_cast %966 : vector<1x8x8xf32> to vector<8x8xf32>
    %c40_637 = arith.constant 40 : index
    %c40_638 = arith.constant 40 : index
    %968 = vector.load %arg4[%c40_637, %c40_638] : memref<128x128xf32, #tpu.memory_space<vmem>>, vector<8x8xf32>
    tpu.vector_store %arg4[%c40_637, %c40_638], %967 {strides = array<i32>} : memref<128x128xf32, #tpu.memory_space<vmem>>, vector<8x8xf32>,
    %c6_i32_639 = arith.constant 6 : i32
    %969 = arith.addi %0, %c6_i32_639 : i32
    %970 = arith.index_cast %969 : i32 to index
    %971 = arith.index_cast %920 : i32 to index
    %972 = memref.load %arg1[%970, %971] : memref<16x8xi32, #tpu.memory_space<smem>>
    %973 = arith.index_cast %972 : i32 to index
    %c0_640 = arith.constant 0 : index
    %c0_641 = arith.constant 0 : index
    %974 = vector.load %arg2[%973, %c0_640, %c0_641] : memref<3x8x8xf32, #tpu.memory_space<vmem>>, vector<1x8x8xf32>
    %975 = vector.shape_cast %974 : vector<1x8x8xf32> to vector<8x8xf32>
    %c48_642 = arith.constant 48 : index
    %c48_643 = arith.constant 48 : index
    %976 = vector.load %arg4[%c48_642, %c48_643] : memref<128x128xf32, #tpu.memory_space<vmem>>, vector<8x8xf32>
    tpu.vector_store %arg4[%c48_642, %c48_643], %975 {strides = array<i32>} : memref<128x128xf32, #tpu.memory_space<vmem>>, vector<8x8xf32>,
    %c7_i32_644 = arith.constant 7 : i32
    %977 = arith.addi %0, %c7_i32_644 : i32
    %978 = arith.index_cast %977 : i32 to index
    %979 = arith.index_cast %920 : i32 to index
    %980 = memref.load %arg1[%978, %979] : memref<16x8xi32, #tpu.memory_space<smem>>
    %981 = arith.index_cast %980 : i32 to index
    %c0_645 = arith.constant 0 : index
    %c0_646 = arith.constant 0 : index
    %982 = vector.load %arg2[%981, %c0_645, %c0_646] : memref<3x8x8xf32, #tpu.memory_space<vmem>>, vector<1x8x8xf32>
    %983 = vector.shape_cast %982 : vector<1x8x8xf32> to vector<8x8xf32>
    %c56_647 = arith.constant 56 : index
    %c56_648 = arith.constant 56 : index
    %984 = vector.load %arg4[%c56_647, %c56_648] : memref<128x128xf32, #tpu.memory_space<vmem>>, vector<8x8xf32>
    tpu.vector_store %arg4[%c56_647, %c56_648], %983 {strides = array<i32>} : memref<128x128xf32, #tpu.memory_space<vmem>>, vector<8x8xf32>,
    %c8_i32_649 = arith.constant 8 : i32
    %985 = arith.addi %0, %c8_i32_649 : i32
    %986 = arith.index_cast %985 : i32 to index
    %987 = arith.index_cast %920 : i32 to index
    %988 = memref.load %arg1[%986, %987] : memref<16x8xi32, #tpu.memory_space<smem>>
    %989 = arith.index_cast %988 : i32 to index
    %c0_650 = arith.constant 0 : index
    %c0_651 = arith.constant 0 : index
    %990 = vector.load %arg2[%989, %c0_650, %c0_651] : memref<3x8x8xf32, #tpu.memory_space<vmem>>, vector<1x8x8xf32>
    %991 = vector.shape_cast %990 : vector<1x8x8xf32> to vector<8x8xf32>
    %c64_652 = arith.constant 64 : index
    %c64_653 = arith.constant 64 : index
    %992 = vector.load %arg4[%c64_652, %c64_653] : memref<128x128xf32, #tpu.memory_space<vmem>>, vector<8x8xf32>
    tpu.vector_store %arg4[%c64_652, %c64_653], %991 {strides = array<i32>} : memref<128x128xf32, #tpu.memory_space<vmem>>, vector<8x8xf32>,
    %c9_i32_654 = arith.constant 9 : i32
    %993 = arith.addi %0, %c9_i32_654 : i32
    %994 = arith.index_cast %993 : i32 to index
    %995 = arith.index_cast %920 : i32 to index
    %996 = memref.load %arg1[%994, %995] : memref<16x8xi32, #tpu.memory_space<smem>>
    %997 = arith.index_cast %996 : i32 to index
    %c0_655 = arith.constant 0 : index
    %c0_656 = arith.constant 0 : index
    %998 = vector.load %arg2[%997, %c0_655, %c0_656] : memref<3x8x8xf32, #tpu.memory_space<vmem>>, vector<1x8x8xf32>
    %999 = vector.shape_cast %998 : vector<1x8x8xf32> to vector<8x8xf32>
    %c72_657 = arith.constant 72 : index
    %c72_658 = arith.constant 72 : index
    %1000 = vector.load %arg4[%c72_657, %c72_658] : memref<128x128xf32, #tpu.memory_space<vmem>>, vector<8x8xf32>
    tpu.vector_store %arg4[%c72_657, %c72_658], %999 {strides = array<i32>} : memref<128x128xf32, #tpu.memory_space<vmem>>, vector<8x8xf32>,
    %c10_i32_659 = arith.constant 10 : i32
    %1001 = arith.addi %0, %c10_i32_659 : i32
    %1002 = arith.index_cast %1001 : i32 to index
    %1003 = arith.index_cast %920 : i32 to index
    %1004 = memref.load %arg1[%1002, %1003] : memref<16x8xi32, #tpu.memory_space<smem>>
    %1005 = arith.index_cast %1004 : i32 to index
    %c0_660 = arith.constant 0 : index
    %c0_661 = arith.constant 0 : index
    %1006 = vector.load %arg2[%1005, %c0_660, %c0_661] : memref<3x8x8xf32, #tpu.memory_space<vmem>>, vector<1x8x8xf32>
    %1007 = vector.shape_cast %1006 : vector<1x8x8xf32> to vector<8x8xf32>
    %c80_662 = arith.constant 80 : index
    %c80_663 = arith.constant 80 : index
    %1008 = vector.load %arg4[%c80_662, %c80_663] : memref<128x128xf32, #tpu.memory_space<vmem>>, vector<8x8xf32>
    tpu.vector_store %arg4[%c80_662, %c80_663], %1007 {strides = array<i32>} : memref<128x128xf32, #tpu.memory_space<vmem>>, vector<8x8xf32>,
    %c11_i32_664 = arith.constant 11 : i32
    %1009 = arith.addi %0, %c11_i32_664 : i32
    %1010 = arith.index_cast %1009 : i32 to index
    %1011 = arith.index_cast %920 : i32 to index
    %1012 = memref.load %arg1[%1010, %1011] : memref<16x8xi32, #tpu.memory_space<smem>>
    %1013 = arith.index_cast %1012 : i32 to index
    %c0_665 = arith.constant 0 : index
    %c0_666 = arith.constant 0 : index
    %1014 = vector.load %arg2[%1013, %c0_665, %c0_666] : memref<3x8x8xf32, #tpu.memory_space<vmem>>, vector<1x8x8xf32>
    %1015 = vector.shape_cast %1014 : vector<1x8x8xf32> to vector<8x8xf32>
    %c88_667 = arith.constant 88 : index
    %c88_668 = arith.constant 88 : index
    %1016 = vector.load %arg4[%c88_667, %c88_668] : memref<128x128xf32, #tpu.memory_space<vmem>>, vector<8x8xf32>
    tpu.vector_store %arg4[%c88_667, %c88_668], %1015 {strides = array<i32>} : memref<128x128xf32, #tpu.memory_space<vmem>>, vector<8x8xf32>,
    %c12_i32_669 = arith.constant 12 : i32
    %1017 = arith.addi %0, %c12_i32_669 : i32
    %1018 = arith.index_cast %1017 : i32 to index
    %1019 = arith.index_cast %920 : i32 to index
    %1020 = memref.load %arg1[%1018, %1019] : memref<16x8xi32, #tpu.memory_space<smem>>
    %1021 = arith.index_cast %1020 : i32 to index
    %c0_670 = arith.constant 0 : index
    %c0_671 = arith.constant 0 : index
    %1022 = vector.load %arg2[%1021, %c0_670, %c0_671] : memref<3x8x8xf32, #tpu.memory_space<vmem>>, vector<1x8x8xf32>
    %1023 = vector.shape_cast %1022 : vector<1x8x8xf32> to vector<8x8xf32>
    %c96_672 = arith.constant 96 : index
    %c96_673 = arith.constant 96 : index
    %1024 = vector.load %arg4[%c96_672, %c96_673] : memref<128x128xf32, #tpu.memory_space<vmem>>, vector<8x8xf32>
    tpu.vector_store %arg4[%c96_672, %c96_673], %1023 {strides = array<i32>} : memref<128x128xf32, #tpu.memory_space<vmem>>, vector<8x8xf32>,
    %c13_i32_674 = arith.constant 13 : i32
    %1025 = arith.addi %0, %c13_i32_674 : i32
    %1026 = arith.index_cast %1025 : i32 to index
    %1027 = arith.index_cast %920 : i32 to index
    %1028 = memref.load %arg1[%1026, %1027] : memref<16x8xi32, #tpu.memory_space<smem>>
    %1029 = arith.index_cast %1028 : i32 to index
    %c0_675 = arith.constant 0 : index
    %c0_676 = arith.constant 0 : index
    %1030 = vector.load %arg2[%1029, %c0_675, %c0_676] : memref<3x8x8xf32, #tpu.memory_space<vmem>>, vector<1x8x8xf32>
    %1031 = vector.shape_cast %1030 : vector<1x8x8xf32> to vector<8x8xf32>
    %c104_677 = arith.constant 104 : index
    %c104_678 = arith.constant 104 : index
    %1032 = vector.load %arg4[%c104_677, %c104_678] : memref<128x128xf32, #tpu.memory_space<vmem>>, vector<8x8xf32>
    tpu.vector_store %arg4[%c104_677, %c104_678], %1031 {strides = array<i32>} : memref<128x128xf32, #tpu.memory_space<vmem>>, vector<8x8xf32>,
    %c14_i32_679 = arith.constant 14 : i32
    %1033 = arith.addi %0, %c14_i32_679 : i32
    %1034 = arith.index_cast %1033 : i32 to index
    %1035 = arith.index_cast %920 : i32 to index
    %1036 = memref.load %arg1[%1034, %1035] : memref<16x8xi32, #tpu.memory_space<smem>>
    %1037 = arith.index_cast %1036 : i32 to index
    %c0_680 = arith.constant 0 : index
    %c0_681 = arith.constant 0 : index
    %1038 = vector.load %arg2[%1037, %c0_680, %c0_681] : memref<3x8x8xf32, #tpu.memory_space<vmem>>, vector<1x8x8xf32>
    %1039 = vector.shape_cast %1038 : vector<1x8x8xf32> to vector<8x8xf32>
    %c112_682 = arith.constant 112 : index
    %c112_683 = arith.constant 112 : index
    %1040 = vector.load %arg4[%c112_682, %c112_683] : memref<128x128xf32, #tpu.memory_space<vmem>>, vector<8x8xf32>
    tpu.vector_store %arg4[%c112_682, %c112_683], %1039 {strides = array<i32>} : memref<128x128xf32, #tpu.memory_space<vmem>>, vector<8x8xf32>,
    %c15_i32_684 = arith.constant 15 : i32
    %1041 = arith.addi %0, %c15_i32_684 : i32
    %1042 = arith.index_cast %1041 : i32 to index
    %1043 = arith.index_cast %920 : i32 to index
    %1044 = memref.load %arg1[%1042, %1043] : memref<16x8xi32, #tpu.memory_space<smem>>
    %1045 = arith.index_cast %1044 : i32 to index
    %c0_685 = arith.constant 0 : index
    %c0_686 = arith.constant 0 : index
    %1046 = vector.load %arg2[%1045, %c0_685, %c0_686] : memref<3x8x8xf32, #tpu.memory_space<vmem>>, vector<1x8x8xf32>
    %1047 = vector.shape_cast %1046 : vector<1x8x8xf32> to vector<8x8xf32>
    %c120_687 = arith.constant 120 : index
    %c120_688 = arith.constant 120 : index
    %1048 = vector.load %arg4[%c120_687, %c120_688] : memref<128x128xf32, #tpu.memory_space<vmem>>, vector<8x8xf32>
    tpu.vector_store %arg4[%c120_687, %c120_688], %1047 {strides = array<i32>} : memref<128x128xf32, #tpu.memory_space<vmem>>, vector<8x8xf32>,
    %c0_689 = arith.constant 0 : index
    %c0_690 = arith.constant 0 : index
    %1049 = vector.load %arg5[%c0_689, %c0_690] : memref<8x128xf32, #tpu.memory_space<vmem>>, vector<8x128xf32>
    %c0_691 = arith.constant 0 : index
    %c0_692 = arith.constant 0 : index
    %1050 = vector.load %arg4[%c0_691, %c0_692] : memref<128x128xf32, #tpu.memory_space<vmem>>, vector<128x128xf32>
    %cst_693 = arith.constant dense<0.000000e+00> : vector<8x128xf32>
    %1051 = tpu.matmul %1049, %1050, %cst_693 {dimension_numbers = #tpu.dot_dimension_numbers<[1], [0], [0], [1], [0, 0, 1, 1], [], []>} : vector<8x128xf32>, vector<128x128xf32>, vector<8x128xf32> -> vector<8x128xf32>
    %c0_694 = arith.constant 0 : index
    %c0_695 = arith.constant 0 : index
    %1052 = vector.load %arg5[%c0_694, %c0_695] : memref<8x128xf32, #tpu.memory_space<vmem>>, vector<8x128xf32>
    tpu.vector_store %arg5[%c0_694, %c0_695], %1051 {strides = array<i32>} : memref<8x128xf32, #tpu.memory_space<vmem>>, vector<8x128xf32>,
    %c7_i32_696 = arith.constant 7 : i32
    %c0_697 = arith.constant 0 : index
    %c0_698 = arith.constant 0 : index
    %1053 = vector.load %arg5[%c0_697, %c0_698] : memref<8x128xf32, #tpu.memory_space<vmem>>, vector<8x128xf32>
    %c0_699 = arith.constant 0 : index
    %c0_700 = arith.constant 0 : index
    %c0_701 = arith.constant 0 : index
    %1054 = vector.load %arg3[%c0_699, %c0_700, %c0_701] : memref<1x8x128xf32, #tpu.memory_space<vmem>>, vector<1x8x128xf32>
    %1055 = vector.shape_cast %1054 : vector<1x8x128xf32> to vector<8x128xf32>
    %1056 = vector.shape_cast %1053 : vector<8x128xf32> to vector<1x8x128xf32>
    tpu.vector_store %arg3[%c0_699, %c0_700, %c0_701], %1056 {strides = array<i32>} : memref<1x8x128xf32, #tpu.memory_space<vmem>>, vector<1x8x128xf32>,
    return
  }
  func.func @transform_0(%arg0: i32, %arg1: memref<16x8xi32, #tpu.memory_space<smem>>) -> (i32, i32, i32) {
    %c0_i32 = arith.constant 0 : i32
    %c0_i32_0 = arith.constant 0 : i32
    %c0_i32_1 = arith.constant 0 : i32
    %c0_i32_2 = arith.constant 0 : i32
    return %c0_i32, %c0_i32_0, %c0_i32_1 : i32, i32, i32
  }
  func.func @transform_1(%arg0: i32, %arg1: memref<16x8xi32, #tpu.memory_space<smem>>) -> (i32, i32, i32) {
    %c0_i32 = arith.constant 0 : i32
    %c0_i32_0 = arith.constant 0 : i32
    %c0_i32_1 = arith.constant 0 : i32
    return %arg0, %c0_i32, %c0_i32_0 : i32, i32, i32
  }
}

</mosaic_0001>

<llo_original>
// kernel: _batched_chain_call.1
$region0: #{_batched_chain_call.1}
  #allocation0 [shape = 'u32[]', space=smem, size = 0x4, offset = 0x4, fixed_abs, tag = 'smem constant byte address 0x4 - core index']
  #allocation1 [shape = 'u32[144,128]{1,0:T(1,128)}', space=vmem, size = 0x12000, scoped, tag = 'internal scratch']
  #allocation2 [shape = 'f32[128,128]{1,0:T(8,128)}', space=vmem, size = 0x10000, scoped, tag = 'scratch operand']
  #allocation3 [shape = 'f32[8,128]{1,0:T(8,128)}', space=vmem, size = 0x1000, scoped, tag = 'scratch operand']
  #allocation4 [shape = 's32[1]{0}', space=sflag, size = 0x4, scoped, tag = 'scoped memory for _batched_chain_call.1']
  #allocation5 [shape = 'u8[8192]{0}', space=smem, size = 0x2000, scoped, tag = 'prefetched SMEM operand 0']
  %s0 = inlined_call_operand.vmem [shape: s32[16,8], index: 0, kind: input, shape index: {}]
  %s1 = inlined_call_operand.vmem [shape: f32[3,8,8], index: 1, kind: input, shape index: {}]
  %s2 = inlined_call_operand.vmem [shape: f32[1,8,128], index: 2, kind: output, shape index: {}]
  %s3 = sld [smem:[#allocation0]]
  $region14: #{_batched_chain_call.1} parent=0
    _
  %s5 = ssub.s32 1, %s3
  %s6 = scalar_select 0, %s5, %s3
  %s7 = sshll.u32 %s0, 4
  %s8 = int_to_ptr.vmem [resolvable:$true] %s7
  %10 = dma.vmem_to_smem %s8, 256, [#allocation5], [#allocation4]
  %11 = dma.done [#allocation4], 256
  %12 = sfence
  // Predicated region
  $region2: #{_batched_chain_call.1} parent=0 // pred_check
    _
  $region3: #{_batched_chain_call.1} parent=0 // pred_check_branch
    %14 = sbr.rel (0) target = $region5
  $region4: #{_batched_chain_call.1} parent=0 // pred_region
    _
  $region5: #{_batched_chain_call.1} parent=0 // pred_fallthru
    _
  %s15 = smul.u32 0, 16
  %16 = vst [vmem:[#allocation2] sm:$0xff] 0.0
  %17 = vst [vmem:[#allocation2 + $0x8] sm:$0xff] 0.0
  %18 = vst [vmem:[#allocation2 + $0x10] sm:$0xff] 0.0
  %19 = vst [vmem:[#allocation2 + $0x18] sm:$0xff] 0.0
  %20 = vst [vmem:[#allocation2 + $0x20] sm:$0xff] 0.0
  %21 = vst [vmem:[#allocation2 + $0x28] sm:$0xff] 0.0
  %22 = vst [vmem:[#allocation2 + $0x30] sm:$0xff] 0.0
  %23 = vst [vmem:[#allocation2 + $0x38] sm:$0xff] 0.0
  %24 = vst [vmem:[#allocation2 + $0x40] sm:$0xff] 0.0
  %25 = vst [vmem:[#allocation2 + $0x48] sm:$0xff] 0.0
  %26 = vst [vmem:[#allocation2 + $0x50] sm:$0xff] 0.0
  %27 = vst [vmem:[#allocation2 + $0x58] sm:$0xff] 0.0
  %28 = vst [vmem:[#allocation2 + $0x60] sm:$0xff] 0.0
  %29 = vst [vmem:[#allocation2 + $0x68] sm:$0xff] 0.0
  %30 = vst [vmem:[#allocation2 + $0x70] sm:$0xff] 0.0
  %31 = vst [vmem:[#allocation2 + $0x78] sm:$0xff] 0.0
  %s32 = smul.u32 %s15, 128
  %s33 = sld [smem:[#allocation5 + %s32]]
  %s34 = smul.u32 %s33, 8
  %s35 = scalar_lea.vmem %s1, %s34
  %v36 = vld [vmem:[%s35] sm:$0xff]
  %vm37 = vcmask 64512
  %38 = vst.msk [vmem:[#allocation3] sm:$0xff] %vm37, %v36
  %s39 = sadd.s32 %s15, 1
  %s40 = smul.u32 %s39, 128
  %s41 = sld [smem:[#allocation5 + %s40]]
  %s42 = smul.u32 %s41, 8
  %s43 = scalar_lea.vmem %s1, %s42
  %v44 = vld [vmem:[%s43] sm:$0xff]
  %46 = vrot.lane.b32.xlu0 %v44, 8
  %v47 = vpop.permute.xlu0 %46
  %vm49 = vcmask 130112
  %50 = vst.msk [vmem:[#allocation3] sm:$0xff] %vm49, %v47
  %s51 = sadd.s32 %s15, 2
  %s52 = smul.u32 %s51, 128
  %s53 = sld [smem:[#allocation5 + %s52]]
  %s54 = smul.u32 %s53, 8
  %s55 = scalar_lea.vmem %s1, %s54
  %v56 = vld [vmem:[%s55] sm:$0xff]
  %58 = vrot.lane.b32.xlu0 %v56, 16
  %v59 = vpop.permute.xlu0 %58
  %vm61 = vcmask 195712
  %62 = vst.msk [vmem:[#allocation3] sm:$0xff] %vm61, %v59
  %s63 = sadd.s32 %s15, 3
  %s64 = smul.u32 %s63, 128
  %s65 = sld [smem:[#allocation5 + %s64]]
  %s66 = smul.u32 %s65, 8
  %s67 = scalar_lea.vmem %s1, %s66
  %v68 = vld [vmem:[%s67] sm:$0xff]
  %70 = vrot.lane.b32.xlu0 %v68, 24
  %v71 = vpop.permute.xlu0 %70
  %vm73 = vcmask 261312
  %74 = vst.msk [vmem:[#allocation3] sm:$0xff] %vm73, %v71
  %s75 = sadd.s32 %s15, 4
  %s76 = smul.u32 %s75, 128
  %s77 = sld [smem:[#allocation5 + %s76]]
  %s78 = smul.u32 %s77, 8
  %s79 = scalar_lea.vmem %s1, %s78
  %v80 = vld [vmem:[%s79] sm:$0xff]
  %82 = vrot.lane.b32.xlu0 %v80, 32
  %v83 = vpop.permute.xlu0 %82
  %vm85 = vcmask 326912
  %86 = vst.msk [vmem:[#allocation3] sm:$0xff] %vm85, %v83
  %s87 = sadd.s32 %s15, 5
  %s88 = smul.u32 %s87, 128
  %s89 = sld [smem:[#allocation5 + %s88]]
  %s90 = smul.u32 %s89, 8
  %s91 = scalar_lea.vmem %s1, %s90
  %v92 = vld [vmem:[%s91] sm:$0xff]
  %94 = vrot.lane.b32.xlu0 %v92, 40
  %v95 = vpop.permute.xlu0 %94
  %vm97 = vcmask 392512
  %98 = vst.msk [vmem:[#allocation3] sm:$0xff] %vm97, %v95
  %s99 = sadd.s32 %s15, 6
  %s100 = smul.u32 %s99, 128
  %s101 = sld [smem:[#allocation5 + %s100]]
  %s102 = smul.u32 %s101, 8
  %s103 = scalar_lea.vmem %s1, %s102
  %v104 = vld [vmem:[%s103] sm:$0xff]
  %106 = vrot.lane.b32.xlu0 %v104, 48
  %v107 = vpop.permute.xlu0 %106
  %vm109 = vcmask 458112
  %110 = vst.msk [vmem:[#allocation3] sm:$0xff] %vm109, %v107
  %s111 = sadd.s32 %s15, 7
  %s112 = smul.u32 %s111, 128
  %s113 = sld [smem:[#allocation5 + %s112]]
  %s114 = smul.u32 %s113, 8
  %s115 = scalar_lea.vmem %s1, %s114
  %v116 = vld [vmem:[%s115] sm:$0xff]
  %118 = vrot.lane.b32.xlu0 %v116, 56
  %v119 = vpop.permute.xlu0 %118
  %vm121 = vcmask 523712
  %122 = vst.msk [vmem:[#allocation3] sm:$0xff] %vm121, %v119
  %s123 = sadd.s32 %s15, 8
  %s124 = smul.u32 %s123, 128
  %s125 = sld [smem:[#allocation5 + %s124]]
  %s126 = smul.u32 %s125, 8
  %s127 = scalar_lea.vmem %s1, %s126
  %v128 = vld [vmem:[%s127] sm:$0xff]
  %130 = vrot.lane.b32.xlu0 %v128, 64
  %v131 = vpop.permute.xlu0 %130
  %vm133 = vcmask 589312
  %134 = vst.msk [vmem:[#allocation3] sm:$0xff] %vm133, %v131
  %s135 = sadd.s32 %s15, 9
  %s136 = smul.u32 %s135, 128
  %s137 = sld [smem:[#allocation5 + %s136]]
  %s138 = smul.u32 %s137, 8
  %s139 = scalar_lea.vmem %s1, %s138
  %v140 = vld [vmem:[%s139] sm:$0xff]
  %142 = vrot.lane.b32.xlu0 %v140, 72
  %v143 = vpop.permute.xlu0 %142
  %vm145 = vcmask 654912
  %146 = vst.msk [vmem:[#allocation3] sm:$0xff] %vm145, %v143
  %s147 = sadd.s32 %s15, 10
  %s148 = smul.u32 %s147, 128
  %s149 = sld [smem:[#allocation5 + %s148]]
  %s150 = smul.u32 %s149, 8
  %s151 = scalar_lea.vmem %s1, %s150
  %v152 = vld [vmem:[%s151] sm:$0xff]
  %154 = vrot.lane.b32.xlu0 %v152, 80
  %v155 = vpop.permute.xlu0 %154
  %vm157 = vcmask 720512
  %158 = vst.msk [vmem:[#allocation3] sm:$0xff] %vm157, %v155
  %s159 = sadd.s32 %s15, 11
  %s160 = smul.u32 %s159, 128
  %s161 = sld [smem:[#allocation5 + %s160]]
  %s162 = smul.u32 %s161, 8
  %s163 = scalar_lea.vmem %s1, %s162
  %v164 = vld [vmem:[%s163] sm:$0xff]
  %166 = vrot.lane.b32.xlu0 %v164, 88
  %v167 = vpop.permute.xlu0 %166
  %vm169 = vcmask 786112
  %170 = vst.msk [vmem:[#allocation3] sm:$0xff] %vm169, %v167
  %s171 = sadd.s32 %s15, 12
  %s172 = smul.u32 %s171, 128
  %s173 = sld [smem:[#allocation5 + %s172]]
  %s174 = smul.u32 %s173, 8
  %s175 = scalar_lea.vmem %s1, %s174
  %v176 = vld [vmem:[%s175] sm:$0xff]
  %178 = vrot.lane.b32.xlu0 %v176, 96
  %v179 = vpop.permute.xlu0 %178
  %vm181 = vcmask 851712
  %182 = vst.msk [vmem:[#allocation3] sm:$0xff] %vm181, %v179
  %s183 = sadd.s32 %s15, 13
  %s184 = smul.u32 %s183, 128
  %s185 = sld [smem:[#allocation5 + %s184]]
  %s186 = smul.u32 %s185, 8
  %s187 = scalar_lea.vmem %s1, %s186
  %v188 = vld [vmem:[%s187] sm:$0xff]
  %190 = vrot.lane.b32.xlu0 %v188, 104
  %v191 = vpop.permute.xlu0 %190
  %vm193 = vcmask 917312
  %194 = vst.msk [vmem:[#allocation3] sm:$0xff] %vm193, %v191
  %s195 = sadd.s32 %s15, 14
  %s196 = smul.u32 %s195, 128
  %s197 = sld [smem:[#allocation5 + %s196]]
  %s198 = smul.u32 %s197, 8
  %s199 = scalar_lea.vmem %s1, %s198
  %v200 = vld [vmem:[%s199] sm:$0xff]
  %202 = vrot.lane.b32.xlu0 %v200, 112
  %v203 = vpop.permute.xlu0 %202
  %vm205 = vcmask 982912
  %206 = vst.msk [vmem:[#allocation3] sm:$0xff] %vm205, %v203
  %s207 = sadd.s32 %s15, 15
  %s208 = smul.u32 %s207, 128
  %s209 = sld [smem:[#allocation5 + %s208]]
  %s210 = smul.u32 %s209, 8
  %s211 = scalar_lea.vmem %s1, %s210
  %v212 = vld [vmem:[%s211] sm:$0xff]
  %214 = vrot.lane.b32.xlu0 %v212, 120
  %v215 = vpop.permute.xlu0 %214
  %vm217 = vcmask 1048512
  %218 = vst.msk [vmem:[#allocation3] sm:$0xff] %vm217, %v215
  %s219 = sadd.s32 %s32, 1
  %s220 = sld [smem:[#allocation5 + %s219]]
  %s221 = smul.u32 %s220, 8
  %s222 = scalar_lea.vmem %s1, %s221
  %v223 = vld [vmem:[%s222] sm:$0xff]
  %224 = vst.msk [vmem:[#allocation2] sm:$0xff] %vm37, %v223
  %s225 = sadd.s32 %s40, 1
  %s226 = sld [smem:[#allocation5 + %s225]]
  %s227 = smul.u32 %s226, 8
  %s228 = scalar_lea.vmem %s1, %s227
  %v229 = vld [vmem:[%s228] sm:$0xff]
  %231 = vrot.lane.b32.xlu0 %v229, 8
  %v232 = vpop.permute.xlu0 %231
  %234 = vst.msk [vmem:[#allocation2 + $0x8] sm:$0xff] %vm49, %v232
  %s235 = sadd.s32 %s52, 1
  %s236 = sld [smem:[#allocation5 + %s235]]
  %s237 = smul.u32 %s236, 8
  %s238 = scalar_lea.vmem %s1, %s237
  %v239 = vld [vmem:[%s238] sm:$0xff]
  %241 = vrot.lane.b32.xlu0 %v239, 16
  %v242 = vpop.permute.xlu0 %241
  %244 = vst.msk [vmem:[#allocation2 + $0x10] sm:$0xff] %vm61, %v242
  %s245 = sadd.s32 %s64, 1
  %s246 = sld [smem:[#allocation5 + %s245]]
  %s247 = smul.u32 %s246, 8
  %s248 = scalar_lea.vmem %s1, %s247
  %v249 = vld [vmem:[%s248] sm:$0xff]
  %251 = vrot.lane.b32.xlu0 %v249, 24
  %v252 = vpop.permute.xlu0 %251
  %254 = vst.msk [vmem:[#allocation2 + $0x18] sm:$0xff] %vm73, %v252
  %s255 = sadd.s32 %s76, 1
  %s256 = sld [smem:[#allocation5 + %s255]]
  %s257 = smul.u32 %s256, 8
  %s258 = scalar_lea.vmem %s1, %s257
  %v259 = vld [vmem:[%s258] sm:$0xff]
  %261 = vrot.lane.b32.xlu0 %v259, 32
  %v262 = vpop.permute.xlu0 %261
  %264 = vst.msk [vmem:[#allocation2 + $0x20] sm:$0xff] %vm85, %v262
  %s265 = sadd.s32 %s88, 1
  %s266 = sld [smem:[#allocation5 + %s265]]
  %s267 = smul.u32 %s266, 8
  %s268 = scalar_lea.vmem %s1, %s267
  %v269 = vld [vmem:[%s268] sm:$0xff]
  %271 = vrot.lane.b32.xlu0 %v269, 40
  %v272 = vpop.permute.xlu0 %271
  %274 = vst.msk [vmem:[#allocation2 + $0x28] sm:$0xff] %vm97, %v272
  %s275 = sadd.s32 %s100, 1
  %s276 = sld [smem:[#allocation5 + %s275]]
  %s277 = smul.u32 %s276, 8
  %s278 = scalar_lea.vmem %s1, %s277
  %v279 = vld [vmem:[%s278] sm:$0xff]
  %281 = vrot.lane.b32.xlu0 %v279, 48
  %v282 = vpop.permute.xlu0 %281
  %284 = vst.msk [vmem:[#allocation2 + $0x30] sm:$0xff] %vm109, %v282
  %s285 = sadd.s32 %s112, 1
  %s286 = sld [smem:[#allocation5 + %s285]]
  %s287 = smul.u32 %s286, 8
  %s288 = scalar_lea.vmem %s1, %s287
  %v289 = vld [vmem:[%s288] sm:$0xff]
  %291 = vrot.lane.b32.xlu0 %v289, 56
  %v292 = vpop.permute.xlu0 %291
  %294 = vst.msk [vmem:[#allocation2 + $0x38] sm:$0xff] %vm121, %v292
  %s295 = sadd.s32 %s124, 1
  %s296 = sld [smem:[#allocation5 + %s295]]
  %s297 = smul.u32 %s296, 8
  %s298 = scalar_lea.vmem %s1, %s297
  %v299 = vld [vmem:[%s298] sm:$0xff]
  %301 = vrot.lane.b32.xlu0 %v299, 64
  %v302 = vpop.permute.xlu0 %301
  %304 = vst.msk [vmem:[#allocation2 + $0x40] sm:$0xff] %vm133, %v302
  %s305 = sadd.s32 %s136, 1
  %s306 = sld [smem:[#allocation5 + %s305]]
  %s307 = smul.u32 %s306, 8
  %s308 = scalar_lea.vmem %s1, %s307
  %v309 = vld [vmem:[%s308] sm:$0xff]
  %311 = vrot.lane.b32.xlu0 %v309, 72
  %v312 = vpop.permute.xlu0 %311
  %314 = vst.msk [vmem:[#allocation2 + $0x48] sm:$0xff] %vm145, %v312
  %s315 = sadd.s32 %s148, 1
  %s316 = sld [smem:[#allocation5 + %s315]]
  %s317 = smul.u32 %s316, 8
  %s318 = scalar_lea.vmem %s1, %s317
  %v319 = vld [vmem:[%s318] sm:$0xff]
  %321 = vrot.lane.b32.xlu0 %v319, 80
  %v322 = vpop.permute.xlu0 %321
  %324 = vst.msk [vmem:[#allocation2 + $0x50] sm:$0xff] %vm157, %v322
  %s325 = sadd.s32 %s160, 1
  %s326 = sld [smem:[#allocation5 + %s325]]
  %s327 = smul.u32 %s326, 8
  %s328 = scalar_lea.vmem %s1, %s327
  %v329 = vld [vmem:[%s328] sm:$0xff]
  %331 = vrot.lane.b32.xlu0 %v329, 88
  %v332 = vpop.permute.xlu0 %331
  %334 = vst.msk [vmem:[#allocation2 + $0x58] sm:$0xff] %vm169, %v332
  %s335 = sadd.s32 %s172, 1
  %s336 = sld [smem:[#allocation5 + %s335]]
  %s337 = smul.u32 %s336, 8
  %s338 = scalar_lea.vmem %s1, %s337
  %v339 = vld [vmem:[%s338] sm:$0xff]
  %341 = vrot.lane.b32.xlu0 %v339, 96
  %v342 = vpop.permute.xlu0 %341
  %344 = vst.msk [vmem:[#allocation2 + $0x60] sm:$0xff] %vm181, %v342
  %s345 = sadd.s32 %s184, 1
  %s346 = sld [smem:[#allocation5 + %s345]]
  %s347 = smul.u32 %s346, 8
  %s348 = scalar_lea.vmem %s1, %s347
  %v349 = vld [vmem:[%s348] sm:$0xff]
  %351 = vrot.lane.b32.xlu0 %v349, 104
  %v352 = vpop.permute.xlu0 %351
  %354 = vst.msk [vmem:[#allocation2 + $0x68] sm:$0xff] %vm193, %v352
  %s355 = sadd.s32 %s196, 1
  %s356 = sld [smem:[#allocation5 + %s355]]
  %s357 = smul.u32 %s356, 8
  %s358 = scalar_lea.vmem %s1, %s357
  %v359 = vld [vmem:[%s358] sm:$0xff]
  %361 = vrot.lane.b32.xlu0 %v359, 112
  %v362 = vpop.permute.xlu0 %361
  %364 = vst.msk [vmem:[#allocation2 + $0x70] sm:$0xff] %vm205, %v362
  %s365 = sadd.s32 %s208, 1
  %s366 = sld [smem:[#allocation5 + %s365]]
  %s367 = smul.u32 %s366, 8
  %s368 = scalar_lea.vmem %s1, %s367
  %v369 = vld [vmem:[%s368] sm:$0xff]
  %371 = vrot.lane.b32.xlu0 %v369, 120
  %v372 = vpop.permute.xlu0 %371
  %374 = vst.msk [vmem:[#allocation2 + $0x78] sm:$0xff] %vm217, %v372
  %v375 = vld [vmem:[#allocation3] sm:$0xff]
  %v376 = vld [vmem:[#allocation2] sm:$0xff]
  %v377 = vld [vmem:[#allocation2 + $0x8] sm:$0xff]
  %v378 = vld [vmem:[#allocation2 + $0x10] sm:$0xff]
  %v379 = vld [vmem:[#allocation2 + $0x18] sm:$0xff]
  %v380 = vld [vmem:[#allocation2 + $0x20] sm:$0xff]
  %v381 = vld [vmem:[#allocation2 + $0x28] sm:$0xff]
  %v382 = vld [vmem:[#allocation2 + $0x30] sm:$0xff]
  %v383 = vld [vmem:[#allocation2 + $0x38] sm:$0xff]
  %v384 = vld [vmem:[#allocation2 + $0x40] sm:$0xff]
  %v385 = vld [vmem:[#allocation2 + $0x48] sm:$0xff]
  %v386 = vld [vmem:[#allocation2 + $0x50] sm:$0xff]
  %v387 = vld [vmem:[#allocation2 + $0x58] sm:$0xff]
  %v388 = vld [vmem:[#allocation2 + $0x60] sm:$0xff]
  %v389 = vld [vmem:[#allocation2 + $0x68] sm:$0xff]
  %v390 = vld [vmem:[#allocation2 + $0x70] sm:$0xff]
  %v391 = vld [vmem:[#allocation2 + $0x78] sm:$0xff]
  %392 = vmatprep.subr.mxu0 0.0
  %393 = vmatpush1.msra.mxu0 %v391
  %394 = vmatprep.subr.mxu0 0.0
  %395 = vmatpush1.msra.mxu0 %v390
  %396 = vmatprep.subr.mxu0 0.0
  %397 = vmatpush1.msra.mxu0 %v389
  %398 = vmatprep.subr.mxu0 0.0
  %399 = vmatpush1.msra.mxu0 %v388
  %400 = vmatprep.subr.mxu0 0.0
  %401 = vmatpush1.msra.mxu0 %v387
  %402 = vmatprep.subr.mxu0 0.0
  %403 = vmatpush1.msra.mxu0 %v386
  %404 = vmatprep.subr.mxu0 0.0
  %405 = vmatpush1.msra.mxu0 %v385
  %406 = vmatprep.subr.mxu0 0.0
  %407 = vmatpush1.msra.mxu0 %v384
  %408 = vmatprep.subr.mxu0 0.0
  %409 = vmatpush1.msra.mxu0 %v383
  %410 = vmatprep.subr.mxu0 0.0
  %411 = vmatpush1.msra.mxu0 %v382
  %412 = vmatprep.subr.mxu0 0.0
  %413 = vmatpush1.msra.mxu0 %v381
  %414 = vmatprep.subr.mxu0 0.0
  %415 = vmatpush1.msra.mxu0 %v380
  %416 = vmatprep.subr.mxu0 0.0
  %417 = vmatpush1.msra.mxu0 %v379
  %418 = vmatprep.subr.mxu0 0.0
  %419 = vmatpush1.msra.mxu0 %v378
  %420 = vmatprep.subr.mxu0 0.0
  %421 = vmatpush1.msra.mxu0 %v377
  %422 = vmatprep.subr.mxu0 0.0
  %423 = vmatpush1.msra.mxu0 %v376
  %424 = vmatprep.subr.mxu0 0.0
  %425 = vmatpush2.msra.mxu0 0.0
  %426 = vmatprep.subr.mxu0 0.0
  %427 = vmatpush2.msra.mxu0 0.0
  %428 = vmatprep.subr.mxu0 0.0
  %429 = vmatpush2.msra.mxu0 0.0
  %430 = vmatprep.subr.mxu0 0.0
  %431 = vmatpush2.msra.mxu0 0.0
  %432 = vmatprep.subr.mxu0 0.0
  %433 = vmatpush2.msra.mxu0 0.0
  %434 = vmatprep.subr.mxu0 0.0
  %435 = vmatpush2.msra.mxu0 0.0
  %436 = vmatprep.subr.mxu0 0.0
  %437 = vmatpush2.msra.mxu0 0.0
  %438 = vmatprep.subr.mxu0 0.0
  %439 = vmatpush2.msra.mxu0 0.0
  %440 = vmatprep.subr.mxu0 0.0
  %441 = vmatpush2.msra.mxu0 0.0
  %442 = vmatprep.subr.mxu0 0.0
  %443 = vmatpush2.msra.mxu0 0.0
  %444 = vmatprep.subr.mxu0 0.0
  %445 = vmatpush2.msra.mxu0 0.0
  %446 = vmatprep.subr.mxu0 0.0
  %447 = vmatpush2.msra.mxu0 0.0
  %448 = vmatprep.subr.mxu0 0.0
  %449 = vmatpush2.msra.mxu0 0.0
  %450 = vmatprep.subr.mxu0 0.0
  %451 = vmatpush2.msra.mxu0 0.0
  %452 = vmatprep.subr.mxu0 0.0
  %453 = vmatpush2.msra.mxu0 0.0
  %454 = vmatprep.subr.mxu0 0.0
  %455 = vmatpush2.msra.mxu0 0.0
  %456 = vmatprep.mubr.f32.mxu0 0.0
  %457 = vmatmul.mubr.f32.gmra.mxu0 %v375
  %v458 = vpop.f32.mrf.mxu0
  %v459 = vadd.f32 0.0, %v458
  %v460 = vpop.f32.mrf.mxu0
  %461 = vdwg.mxu0
  %462 = vst [vmem:[#allocation3] sm:$0xff] %v459
  %s463 = sadd.s32 %s32, 2
  %s464 = sld [smem:[#allocation5 + %s463]]
  %s465 = smul.u32 %s464, 8
  %s466 = scalar_lea.vmem %s1, %s465
  %v467 = vld [vmem:[%s466] sm:$0xff]
  %468 = vst.msk [vmem:[#allocation2] sm:$0xff] %vm37, %v467
  %s469 = sadd.s32 %s40, 2
  %s470 = sld [smem:[#allocation5 + %s469]]
  %s471 = smul.u32 %s470, 8
  %s472 = scalar_lea.vmem %s1, %s471
  %v473 = vld [vmem:[%s472] sm:$0xff]
  %475 = vrot.lane.b32.xlu0 %v473, 8
  %v476 = vpop.permute.xlu0 %475
  %478 = vst.msk [vmem:[#allocation2 + $0x8] sm:$0xff] %vm49, %v476
  %s479 = sadd.s32 %s52, 2
  %s480 = sld [smem:[#allocation5 + %s479]]
  %s481 = smul.u32 %s480, 8
  %s482 = scalar_lea.vmem %s1, %s481
  %v483 = vld [vmem:[%s482] sm:$0xff]
  %485 = vrot.lane.b32.xlu0 %v483, 16
  %v486 = vpop.permute.xlu0 %485
  %488 = vst.msk [vmem:[#allocation2 + $0x10] sm:$0xff] %vm61, %v486
  %s489 = sadd.s32 %s64, 2
  %s490 = sld [smem:[#allocation5 + %s489]]
  %s491 = smul.u32 %s490, 8
  %s492 = scalar_lea.vmem %s1, %s491
  %v493 = vld [vmem:[%s492] sm:$0xff]
  %495 = vrot.lane.b32.xlu0 %v493, 24
  %v496 = vpop.permute.xlu0 %495
  %498 = vst.msk [vmem:[#allocation2 + $0x18] sm:$0xff] %vm73, %v496
  %s499 = sadd.s32 %s76, 2
  %s500 = sld [smem:[#allocation5 + %s499]]
  %s501 = smul.u32 %s500, 8
  %s502 = scalar_lea.vmem %s1, %s501
  %v503 = vld [vmem:[%s502] sm:$0xff]
  %505 = vrot.lane.b32.xlu0 %v503, 32
  %v506 = vpop.permute.xlu0 %505
  %508 = vst.msk [vmem:[#allocation2 + $0x20] sm:$0xff] %vm85, %v506
  %s509 = sadd.s32 %s88, 2
  %s510 = sld [smem:[#allocation5 + %s509]]
  %s511 = smul.u32 %s510, 8
  %s512 = scalar_lea.vmem %s1, %s511
  %v513 = vld [vmem:[%s512] sm:$0xff]
  %515 = vrot.lane.b32.xlu0 %v513, 40
  %v516 = vpop.permute.xlu0 %515
  %518 = vst.msk [vmem:[#allocation2 + $0x28] sm:$0xff] %vm97, %v516
  %s519 = sadd.s32 %s100, 2
  %s520 = sld [smem:[#allocation5 + %s519]]
  %s521 = smul.u32 %s520, 8
  %s522 = scalar_lea.vmem %s1, %s521
  %v523 = vld [vmem:[%s522] sm:$0xff]
  %525 = vrot.lane.b32.xlu0 %v523, 48
  %v526 = vpop.permute.xlu0 %525
  %528 = vst.msk [vmem:[#allocation2 + $0x30] sm:$0xff] %vm109, %v526
  %s529 = sadd.s32 %s112, 2
  %s530 = sld [smem:[#allocation5 + %s529]]
  %s531 = smul.u32 %s530, 8
  %s532 = scalar_lea.vmem %s1, %s531
  %v533 = vld [vmem:[%s532] sm:$0xff]
  %535 = vrot.lane.b32.xlu0 %v533, 56
  %v536 = vpop.permute.xlu0 %535
  %538 = vst.msk [vmem:[#allocation2 + $0x38] sm:$0xff] %vm121, %v536
  %s539 = sadd.s32 %s124, 2
  %s540 = sld [smem:[#allocation5 + %s539]]
  %s541 = smul.u32 %s540, 8
  %s542 = scalar_lea.vmem %s1, %s541
  %v543 = vld [vmem:[%s542] sm:$0xff]
  %545 = vrot.lane.b32.xlu0 %v543, 64
  %v546 = vpop.permute.xlu0 %545
  %548 = vst.msk [vmem:[#allocation2 + $0x40] sm:$0xff] %vm133, %v546
  %s549 = sadd.s32 %s136, 2
  %s550 = sld [smem:[#allocation5 + %s549]]
  %s551 = smul.u32 %s550, 8
  %s552 = scalar_lea.vmem %s1, %s551
  %v553 = vld [vmem:[%s552] sm:$0xff]
  %555 = vrot.lane.b32.xlu0 %v553, 72
  %v556 = vpop.permute.xlu0 %555
  %558 = vst.msk [vmem:[#allocation2 + $0x48] sm:$0xff] %vm145, %v556
  %s559 = sadd.s32 %s148, 2
  %s560 = sld [smem:[#allocation5 + %s559]]
  %s561 = smul.u32 %s560, 8
  %s562 = scalar_lea.vmem %s1, %s561
  %v563 = vld [vmem:[%s562] sm:$0xff]
  %565 = vrot.lane.b32.xlu0 %v563, 80
  %v566 = vpop.permute.xlu0 %565
  %568 = vst.msk [vmem:[#allocation2 + $0x50] sm:$0xff] %vm157, %v566
  %s569 = sadd.s32 %s160, 2
  %s570 = sld [smem:[#allocation5 + %s569]]
  %s571 = smul.u32 %s570, 8
  %s572 = scalar_lea.vmem %s1, %s571
  %v573 = vld [vmem:[%s572] sm:$0xff]
  %575 = vrot.lane.b32.xlu0 %v573, 88
  %v576 = vpop.permute.xlu0 %575
  %578 = vst.msk [vmem:[#allocation2 + $0x58] sm:$0xff] %vm169, %v576
  %s579 = sadd.s32 %s172, 2
  %s580 = sld [smem:[#allocation5 + %s579]]
  %s581 = smul.u32 %s580, 8
  %s582 = scalar_lea.vmem %s1, %s581
  %v583 = vld [vmem:[%s582] sm:$0xff]
  %585 = vrot.lane.b32.xlu0 %v583, 96
  %v586 = vpop.permute.xlu0 %585
  %588 = vst.msk [vmem:[#allocation2 + $0x60] sm:$0xff] %vm181, %v586
  %s589 = sadd.s32 %s184, 2
  %s590 = sld [smem:[#allocation5 + %s589]]
  %s591 = smul.u32 %s590, 8
  %s592 = scalar_lea.vmem %s1, %s591
  %v593 = vld [vmem:[%s592] sm:$0xff]
  %595 = vrot.lane.b32.xlu0 %v593, 104
  %v596 = vpop.permute.xlu0 %595
  %598 = vst.msk [vmem:[#allocation2 + $0x68] sm:$0xff] %vm193, %v596
  %s599 = sadd.s32 %s196, 2
  %s600 = sld [smem:[#allocation5 + %s599]]
  %s601 = smul.u32 %s600, 8
  %s602 = scalar_lea.vmem %s1, %s601
  %v603 = vld [vmem:[%s602] sm:$0xff]
  %605 = vrot.lane.b32.xlu0 %v603, 112
  %v606 = vpop.permute.xlu0 %605
  %608 = vst.msk [vmem:[#allocation2 + $0x70] sm:$0xff] %vm205, %v606
  %s609 = sadd.s32 %s208, 2
  %s610 = sld [smem:[#allocation5 + %s609]]
  %s611 = smul.u32 %s610, 8
  %s612 = scalar_lea.vmem %s1, %s611
  %v613 = vld [vmem:[%s612] sm:$0xff]
  %615 = vrot.lane.b32.xlu0 %v613, 120
  %v616 = vpop.permute.xlu0 %615
  %618 = vst.msk [vmem:[#allocation2 + $0x78] sm:$0xff] %vm217, %v616
  %v619 = vld [vmem:[#allocation3] sm:$0xff]
  %v620 = vld [vmem:[#allocation2] sm:$0xff]
  %v621 = vld [vmem:[#allocation2 + $0x8] sm:$0xff]
  %v622 = vld [vmem:[#allocation2 + $0x10] sm:$0xff]
  %v623 = vld [vmem:[#allocation2 + $0x18] sm:$0xff]
  %v624 = vld [vmem:[#allocation2 + $0x20] sm:$0xff]
  %v625 = vld [vmem:[#allocation2 + $0x28] sm:$0xff]
  %v626 = vld [vmem:[#allocation2 + $0x30] sm:$0xff]
  %v627 = vld [vmem:[#allocation2 + $0x38] sm:$0xff]
  %v628 = vld [vmem:[#allocation2 + $0x40] sm:$0xff]
  %v629 = vld [vmem:[#allocation2 + $0x48] sm:$0xff]
  %v630 = vld [vmem:[#allocation2 + $0x50] sm:$0xff]
  %v631 = vld [vmem:[#allocation2 + $0x58] sm:$0xff]
  %v632 = vld [vmem:[#allocation2 + $0x60] sm:$0xff]
  %v633 = vld [vmem:[#allocation2 + $0x68] sm:$0xff]
  %v634 = vld [vmem:[#allocation2 + $0x70] sm:$0xff]
  %v635 = vld [vmem:[#allocation2 + $0x78] sm:$0xff]
  %636 = vmatprep.subr.mxu0 0.0
  %637 = vmatpush1.msra.mxu0 %v635
  %638 = vmatprep.subr.mxu0 0.0
  %639 = vmatpush1.msra.mxu0 %v634
  %640 = vmatprep.subr.mxu0 0.0
  %641 = vmatpush1.msra.mxu0 %v633
  %642 = vmatprep.subr.mxu0 0.0
  %643 = vmatpush1.msra.mxu0 %v632
  %644 = vmatprep.subr.mxu0 0.0
  %645 = vmatpush1.msra.mxu0 %v631
  %646 = vmatprep.subr.mxu0 0.0
  %647 = vmatpush1.msra.mxu0 %v630
  %648 = vmatprep.subr.mxu0 0.0
  %649 = vmatpush1.msra.mxu0 %v629
  %650 = vmatprep.subr.mxu0 0.0
  %651 = vmatpush1.msra.mxu0 %v628
  %652 = vmatprep.subr.mxu0 0.0
  %653 = vmatpush1.msra.mxu0 %v627
  %654 = vmatprep.subr.mxu0 0.0
  %655 = vmatpush1.msra.mxu0 %v626
  %656 = vmatprep.subr.mxu0 0.0
  %657 = vmatpush1.msra.mxu0 %v625
  %658 = vmatprep.subr.mxu0 0.0
  %659 = vmatpush1.msra.mxu0 %v624
  %660 = vmatprep.subr.mxu0 0.0
  %661 = vmatpush1.msra.mxu0 %v623
  %662 = vmatprep.subr.mxu0 0.0
  %663 = vmatpush1.msra.mxu0 %v622
  %664 = vmatprep.subr.mxu0 0.0
  %665 = vmatpush1.msra.mxu0 %v621
  %666 = vmatprep.subr.mxu0 0.0
  %667 = vmatpush1.msra.mxu0 %v620
  %668 = vmatprep.subr.mxu0 0.0
  %669 = vmatpush2.msra.mxu0 0.0
  %670 = vmatprep.subr.mxu0 0.0
  %671 = vmatpush2.msra.mxu0 0.0
  %672 = vmatprep.subr.mxu0 0.0
  %673 = vmatpush2.msra.mxu0 0.0
  %674 = vmatprep.subr.mxu0 0.0
  %675 = vmatpush2.msra.mxu0 0.0
  %676 = vmatprep.subr.mxu0 0.0
  %677 = vmatpush2.msra.mxu0 0.0
  %678 = vmatprep.subr.mxu0 0.0
  %679 = vmatpush2.msra.mxu0 0.0
  %680 = vmatprep.subr.mxu0 0.0
  %681 = vmatpush2.msra.mxu0 0.0
  %682 = vmatprep.subr.mxu0 0.0
  %683 = vmatpush2.msra.mxu0 0.0
  %684 = vmatprep.subr.mxu0 0.0
  %685 = vmatpush2.msra.mxu0 0.0
  %686 = vmatprep.subr.mxu0 0.0
  %687 = vmatpush2.msra.mxu0 0.0
  %688 = vmatprep.subr.mxu0 0.0
  %689 = vmatpush2.msra.mxu0 0.0
  %690 = vmatprep.subr.mxu0 0.0
  %691 = vmatpush2.msra.mxu0 0.0
  %692 = vmatprep.subr.mxu0 0.0
  %693 = vmatpush2.msra.mxu0 0.0
  %694 = vmatprep.subr.mxu0 0.0
  %695 = vmatpush2.msra.mxu0 0.0
  %696 = vmatprep.subr.mxu0 0.0
  %697 = vmatpush2.msra.mxu0 0.0
  %698 = vmatprep.subr.mxu0 0.0
  %699 = vmatpush2.msra.mxu0 0.0
  %700 = vmatprep.mubr.f32.mxu0 0.0
  %701 = vmatmul.mubr.f32.gmra.mxu0 %v619
  %v702 = vpop.f32.mrf.mxu0
  %v703 = vadd.f32 0.0, %v702
  %v704 = vpop.f32.mrf.mxu0
  %705 = vdwg.mxu0
  %706 = vst [vmem:[#allocation3] sm:$0xff] %v703
  %s707 = sadd.s32 %s32, 3
  %s708 = sld [smem:[#allocation5 + %s707]]
  %s709 = smul.u32 %s708, 8
  %s710 = scalar_lea.vmem %s1, %s709
  %v711 = vld [vmem:[%s710] sm:$0xff]
  %712 = vst.msk [vmem:[#allocation2] sm:$0xff] %vm37, %v711
  %s713 = sadd.s32 %s40, 3
  %s714 = sld [smem:[#allocation5 + %s713]]
  %s715 = smul.u32 %s714, 8
  %s716 = scalar_lea.vmem %s1, %s715
  %v717 = vld [vmem:[%s716] sm:$0xff]
  %719 = vrot.lane.b32.xlu0 %v717, 8
  %v720 = vpop.permute.xlu0 %719
  %722 = vst.msk [vmem:[#allocation2 + $0x8] sm:$0xff] %vm49, %v720
  %s723 = sadd.s32 %s52, 3
  %s724 = sld [smem:[#allocation5 + %s723]]
  %s725 = smul.u32 %s724, 8
  %s726 = scalar_lea.vmem %s1, %s725
  %v727 = vld [vmem:[%s726] sm:$0xff]
  %729 = vrot.lane.b32.xlu0 %v727, 16
  %v730 = vpop.permute.xlu0 %729
  %732 = vst.msk [vmem:[#allocation2 + $0x10] sm:$0xff] %vm61, %v730
  %s733 = sadd.s32 %s64, 3
  %s734 = sld [smem:[#allocation5 + %s733]]
  %s735 = smul.u32 %s734, 8
  %s736 = scalar_lea.vmem %s1, %s735
  %v737 = vld [vmem:[%s736] sm:$0xff]
  %739 = vrot.lane.b32.xlu0 %v737, 24
  %v740 = vpop.permute.xlu0 %739
  %742 = vst.msk [vmem:[#allocation2 + $0x18] sm:$0xff] %vm73, %v740
  %s743 = sadd.s32 %s76, 3
  %s744 = sld [smem:[#allocation5 + %s743]]
  %s745 = smul.u32 %s744, 8
  %s746 = scalar_lea.vmem %s1, %s745
  %v747 = vld [vmem:[%s746] sm:$0xff]
  %749 = vrot.lane.b32.xlu0 %v747, 32
  %v750 = vpop.permute.xlu0 %749
  %752 = vst.msk [vmem:[#allocation2 + $0x20] sm:$0xff] %vm85, %v750
  %s753 = sadd.s32 %s88, 3
  %s754 = sld [smem:[#allocation5 + %s753]]
  %s755 = smul.u32 %s754, 8
  %s756 = scalar_lea.vmem %s1, %s755
  %v757 = vld [vmem:[%s756] sm:$0xff]
  %759 = vrot.lane.b32.xlu0 %v757, 40
  %v760 = vpop.permute.xlu0 %759
  %762 = vst.msk [vmem:[#allocation2 + $0x28] sm:$0xff] %vm97, %v760
  %s763 = sadd.s32 %s100, 3
  %s764 = sld [smem:[#allocation5 + %s763]]
  %s765 = smul.u32 %s764, 8
  %s766 = scalar_lea.vmem %s1, %s765
  %v767 = vld [vmem:[%s766] sm:$0xff]
  %769 = vrot.lane.b32.xlu0 %v767, 48
  %v770 = vpop.permute.xlu0 %769
  %772 = vst.msk [vmem:[#allocation2 + $0x30] sm:$0xff] %vm109, %v770
  %s773 = sadd.s32 %s112, 3
  %s774 = sld [smem:[#allocation5 + %s773]]
  %s775 = smul.u32 %s774, 8
  %s776 = scalar_lea.vmem %s1, %s775
  %v777 = vld [vmem:[%s776] sm:$0xff]
  %779 = vrot.lane.b32.xlu0 %v777, 56
  %v780 = vpop.permute.xlu0 %779
  %782 = vst.msk [vmem:[#allocation2 + $0x38] sm:$0xff] %vm121, %v780
  %s783 = sadd.s32 %s124, 3
  %s784 = sld [smem:[#allocation5 + %s783]]
  %s785 = smul.u32 %s784, 8
  %s786 = scalar_lea.vmem %s1, %s785
  %v787 = vld [vmem:[%s786] sm:$0xff]
  %789 = vrot.lane.b32.xlu0 %v787, 64
  %v790 = vpop.permute.xlu0 %789
  %792 = vst.msk [vmem:[#allocation2 + $0x40] sm:$0xff] %vm133, %v790
  %s793 = sadd.s32 %s136, 3
  %s794 = sld [smem:[#allocation5 + %s793]]
  %s795 = smul.u32 %s794, 8
  %s796 = scalar_lea.vmem %s1, %s795
  %v797 = vld [vmem:[%s796] sm:$0xff]
  %799 = vrot.lane.b32.xlu0 %v797, 72
  %v800 = vpop.permute.xlu0 %799
  %802 = vst.msk [vmem:[#allocation2 + $0x48] sm:$0xff] %vm145, %v800
  %s803 = sadd.s32 %s148, 3
  %s804 = sld [smem:[#allocation5 + %s803]]
  %s805 = smul.u32 %s804, 8
  %s806 = scalar_lea.vmem %s1, %s805
  %v807 = vld [vmem:[%s806] sm:$0xff]
  %809 = vrot.lane.b32.xlu0 %v807, 80
  %v810 = vpop.permute.xlu0 %809
  %812 = vst.msk [vmem:[#allocation2 + $0x50] sm:$0xff] %vm157, %v810
  %s813 = sadd.s32 %s160, 3
  %s814 = sld [smem:[#allocation5 + %s813]]
  %s815 = smul.u32 %s814, 8
  %s816 = scalar_lea.vmem %s1, %s815
  %v817 = vld [vmem:[%s816] sm:$0xff]
  %819 = vrot.lane.b32.xlu0 %v817, 88
  %v820 = vpop.permute.xlu0 %819
  %822 = vst.msk [vmem:[#allocation2 + $0x58] sm:$0xff] %vm169, %v820
  %s823 = sadd.s32 %s172, 3
  %s824 = sld [smem:[#allocation5 + %s823]]
  %s825 = smul.u32 %s824, 8
  %s826 = scalar_lea.vmem %s1, %s825
  %v827 = vld [vmem:[%s826] sm:$0xff]
  %829 = vrot.lane.b32.xlu0 %v827, 96
  %v830 = vpop.permute.xlu0 %829
  %832 = vst.msk [vmem:[#allocation2 + $0x60] sm:$0xff] %vm181, %v830
  %s833 = sadd.s32 %s184, 3
  %s834 = sld [smem:[#allocation5 + %s833]]
  %s835 = smul.u32 %s834, 8
  %s836 = scalar_lea.vmem %s1, %s835
  %v837 = vld [vmem:[%s836] sm:$0xff]
  %839 = vrot.lane.b32.xlu0 %v837, 104
  %v840 = vpop.permute.xlu0 %839
  %842 = vst.msk [vmem:[#allocation2 + $0x68] sm:$0xff] %vm193, %v840
  %s843 = sadd.s32 %s196, 3
  %s844 = sld [smem:[#allocation5 + %s843]]
  %s845 = smul.u32 %s844, 8
  %s846 = scalar_lea.vmem %s1, %s845
  %v847 = vld [vmem:[%s846] sm:$0xff]
  %849 = vrot.lane.b32.xlu0 %v847, 112
  %v850 = vpop.permute.xlu0 %849
  %852 = vst.msk [vmem:[#allocation2 + $0x70] sm:$0xff] %vm205, %v850
  %s853 = sadd.s32 %s208, 3
  %s854 = sld [smem:[#allocation5 + %s853]]
  %s855 = smul.u32 %s854, 8
  %s856 = scalar_lea.vmem %s1, %s855
  %v857 = vld [vmem:[%s856] sm:$0xff]
  %859 = vrot.lane.b32.xlu0 %v857, 120
  %v860 = vpop.permute.xlu0 %859
  %862 = vst.msk [vmem:[#allocation2 + $0x78] sm:$0xff] %vm217, %v860
  %v863 = vld [vmem:[#allocation3] sm:$0xff]
  %v864 = vld [vmem:[#allocation2] sm:$0xff]
  %v865 = vld [vmem:[#allocation2 + $0x8] sm:$0xff]
  %v866 = vld [vmem:[#allocation2 + $0x10] sm:$0xff]
  %v867 = vld [vmem:[#allocation2 + $0x18] sm:$0xff]
  %v868 = vld [vmem:[#allocation2 + $0x20] sm:$0xff]
  %v869 = vld [vmem:[#allocation2 + $0x28] sm:$0xff]
  %v870 = vld [vmem:[#allocation2 + $0x30] sm:$0xff]
  %v871 = vld [vmem:[#allocation2 + $0x38] sm:$0xff]
  %v872 = vld [vmem:[#allocation2 + $0x40] sm:$0xff]
  %v873 = vld [vmem:[#allocation2 + $0x48] sm:$0xff]
  %v874 = vld [vmem:[#allocation2 + $0x50] sm:$0xff]
  %v875 = vld [vmem:[#allocation2 + $0x58] sm:$0xff]
  %v876 = vld [vmem:[#allocation2 + $0x60] sm:$0xff]
  %v877 = vld [vmem:[#allocation2 + $0x68] sm:$0xff]
  %v878 = vld [vmem:[#allocation2 + $0x70] sm:$0xff]
  %v879 = vld [vmem:[#allocation2 + $0x78] sm:$0xff]
  %880 = vmatprep.subr.mxu0 0.0
  %881 = vmatpush1.msra.mxu0 %v879
  %882 = vmatprep.subr.mxu0 0.0
  %883 = vmatpush1.msra.mxu0 %v878
  %884 = vmatprep.subr.mxu0 0.0
  %885 = vmatpush1.msra.mxu0 %v877
  %886 = vmatprep.subr.mxu0 0.0
  %887 = vmatpush1.msra.mxu0 %v876
  %888 = vmatprep.subr.mxu0 0.0
  %889 = vmatpush1.msra.mxu0 %v875
  %890 = vmatprep.subr.mxu0 0.0
  %891 = vmatpush1.msra.mxu0 %v874
  %892 = vmatprep.subr.mxu0 0.0
  %893 = vmatpush1.msra.mxu0 %v873
  %894 = vmatprep.subr.mxu0 0.0
  %895 = vmatpush1.msra.mxu0 %v872
  %896 = vmatprep.subr.mxu0 0.0
  %897 = vmatpush1.msra.mxu0 %v871
  %898 = vmatprep.subr.mxu0 0.0
  %899 = vmatpush1.msra.mxu0 %v870
  %900 = vmatprep.subr.mxu0 0.0
  %901 = vmatpush1.msra.mxu0 %v869
  %902 = vmatprep.subr.mxu0 0.0
  %903 = vmatpush1.msra.mxu0 %v868
  %904 = vmatprep.subr.mxu0 0.0
  %905 = vmatpush1.msra.mxu0 %v867
  %906 = vmatprep.subr.mxu0 0.0
  %907 = vmatpush1.msra.mxu0 %v866
  %908 = vmatprep.subr.mxu0 0.0
  %909 = vmatpush1.msra.mxu0 %v865
  %910 = vmatprep.subr.mxu0 0.0
  %911 = vmatpush1.msra.mxu0 %v864
  %912 = vmatprep.subr.mxu0 0.0
  %913 = vmatpush2.msra.mxu0 0.0
  %914 = vmatprep.subr.mxu0 0.0
  %915 = vmatpush2.msra.mxu0 0.0
  %916 = vmatprep.subr.mxu0 0.0
  %917 = vmatpush2.msra.mxu0 0.0
  %918 = vmatprep.subr.mxu0 0.0
  %919 = vmatpush2.msra.mxu0 0.0
  %920 = vmatprep.subr.mxu0 0.0
  %921 = vmatpush2.msra.mxu0 0.0
  %922 = vmatprep.subr.mxu0 0.0
  %923 = vmatpush2.msra.mxu0 0.0
  %924 = vmatprep.subr.mxu0 0.0
  %925 = vmatpush2.msra.mxu0 0.0
  %926 = vmatprep.subr.mxu0 0.0
  %927 = vmatpush2.msra.mxu0 0.0
  %928 = vmatprep.subr.mxu0 0.0
  %929 = vmatpush2.msra.mxu0 0.0
  %930 = vmatprep.subr.mxu0 0.0
  %931 = vmatpush2.msra.mxu0 0.0
  %932 = vmatprep.subr.mxu0 0.0
  %933 = vmatpush2.msra.mxu0 0.0
  %934 = vmatprep.subr.mxu0 0.0
  %935 = vmatpush2.msra.mxu0 0.0
  %936 = vmatprep.subr.mxu0 0.0
  %937 = vmatpush2.msra.mxu0 0.0
  %938 = vmatprep.subr.mxu0 0.0
  %939 = vmatpush2.msra.mxu0 0.0
  %940 = vmatprep.subr.mxu0 0.0
  %941 = vmatpush2.msra.mxu0 0.0
  %942 = vmatprep.subr.mxu0 0.0
  %943 = vmatpush2.msra.mxu0 0.0
  %944 = vmatprep.mubr.f32.mxu0 0.0
  %945 = vmatmul.mubr.f32.gmra.mxu0 %v863
  %v946 = vpop.f32.mrf.mxu0
  %v947 = vadd.f32 0.0, %v946
  %v948 = vpop.f32.mrf.mxu0
  %949 = vdwg.mxu0
  %950 = vst [vmem:[#allocation3] sm:$0xff] %v947
  %s951 = sadd.s32 %s32, 4
  %s952 = sld [smem:[#allocation5 + %s951]]
  %s953 = smul.u32 %s952, 8
  %s954 = scalar_lea.vmem %s1, %s953
  %v955 = vld [vmem:[%s954] sm:$0xff]
  %956 = vst.msk [vmem:[#allocation2] sm:$0xff] %vm37, %v955
  %s957 = sadd.s32 %s40, 4
  %s958 = sld [smem:[#allocation5 + %s957]]
  %s959 = smul.u32 %s958, 8
  %s960 = scalar_lea.vmem %s1, %s959
  %v961 = vld [vmem:[%s960] sm:$0xff]
  %963 = vrot.lane.b32.xlu0 %v961, 8
  %v964 = vpop.permute.xlu0 %963
  %966 = vst.msk [vmem:[#allocation2 + $0x8] sm:$0xff] %vm49, %v964
  %s967 = sadd.s32 %s52, 4
  %s968 = sld [smem:[#allocation5 + %s967]]
  %s969 = smul.u32 %s968, 8
  %s970 = scalar_lea.vmem %s1, %s969
  %v971 = vld [vmem:[%s970] sm:$0xff]
  %973 = vrot.lane.b32.xlu0 %v971, 16
  %v974 = vpop.permute.xlu0 %973
  %976 = vst.msk [vmem:[#allocation2 + $0x10] sm:$0xff] %vm61, %v974
  %s977 = sadd.s32 %s64, 4
  %s978 = sld [smem:[#allocation5 + %s977]]
  %s979 = smul.u32 %s978, 8
  %s980 = scalar_lea.vmem %s1, %s979
  %v981 = vld [vmem:[%s980] sm:$0xff]
  %983 = vrot.lane.b32.xlu0 %v981, 24
  %v984 = vpop.permute.xlu0 %983
  %986 = vst.msk [vmem:[#allocation2 + $0x18] sm:$0xff] %vm73, %v984
  %s987 = sadd.s32 %s76, 4
  %s988 = sld [smem:[#allocation5 + %s987]]
  %s989 = smul.u32 %s988, 8
  %s990 = scalar_lea.vmem %s1, %s989
  %v991 = vld [vmem:[%s990] sm:$0xff]
  %993 = vrot.lane.b32.xlu0 %v991, 32
  %v994 = vpop.permute.xlu0 %993
  %996 = vst.msk [vmem:[#allocation2 + $0x20] sm:$0xff] %vm85, %v994
  %s997 = sadd.s32 %s88, 4
  %s998 = sld [smem:[#allocation5 + %s997]]
  %s999 = smul.u32 %s998, 8
  %s1000 = scalar_lea.vmem %s1, %s999
  %v1001 = vld [vmem:[%s1000] sm:$0xff]
  %1003 = vrot.lane.b32.xlu0 %v1001, 40
  %v1004 = vpop.permute.xlu0 %1003
  %1006 = vst.msk [vmem:[#allocation2 + $0x28] sm:$0xff] %vm97, %v1004
  %s1007 = sadd.s32 %s100, 4
  %s1008 = sld [smem:[#allocation5 + %s1007]]
  %s1009 = smul.u32 %s1008, 8
  %s1010 = scalar_lea.vmem %s1, %s1009
  %v1011 = vld [vmem:[%s1010] sm:$0xff]
  %1013 = vrot.lane.b32.xlu0 %v1011, 48
  %v1014 = vpop.permute.xlu0 %1013
  %1016 = vst.msk [vmem:[#allocation2 + $0x30] sm:$0xff] %vm109, %v1014
  %s1017 = sadd.s32 %s112, 4
  %s1018 = sld [smem:[#allocation5 + %s1017]]
  %s1019 = smul.u32 %s1018, 8
  %s1020 = scalar_lea.vmem %s1, %s1019
  %v1021 = vld [vmem:[%s1020] sm:$0xff]
  %1023 = vrot.lane.b32.xlu0 %v1021, 56
  %v1024 = vpop.permute.xlu0 %1023
  %1026 = vst.msk [vmem:[#allocation2 + $0x38] sm:$0xff] %vm121, %v1024
  %s1027 = sadd.s32 %s124, 4
  %s1028 = sld [smem:[#allocation5 + %s1027]]
  %s1029 = smul.u32 %s1028, 8
  %s1030 = scalar_lea.vmem %s1, %s1029
  %v1031 = vld [vmem:[%s1030] sm:$0xff]
  %1033 = vrot.lane.b32.xlu0 %v1031, 64
  %v1034 = vpop.permute.xlu0 %1033
  %1036 = vst.msk [vmem:[#allocation2 + $0x40] sm:$0xff] %vm133, %v1034
  %s1037 = sadd.s32 %s136, 4
  %s1038 = sld [smem:[#allocation5 + %s1037]]
  %s1039 = smul.u32 %s1038, 8
  %s1040 = scalar_lea.vmem %s1, %s1039
  %v1041 = vld [vmem:[%s1040] sm:$0xff]
  %1043 = vrot.lane.b32.xlu0 %v1041, 72
  %v1044 = vpop.permute.xlu0 %1043
  %1046 = vst.msk [vmem:[#allocation2 + $0x48] sm:$0xff] %vm145, %v1044
  %s1047 = sadd.s32 %s148, 4
  %s1048 = sld [smem:[#allocation5 + %s1047]]
  %s1049 = smul.u32 %s1048, 8
  %s1050 = scalar_lea.vmem %s1, %s1049
  %v1051 = vld [vmem:[%s1050] sm:$0xff]
  %1053 = vrot.lane.b32.xlu0 %v1051, 80
  %v1054 = vpop.permute.xlu0 %1053
  %1056 = vst.msk [vmem:[#allocation2 + $0x50] sm:$0xff] %vm157, %v1054
  %s1057 = sadd.s32 %s160, 4
  %s1058 = sld [smem:[#allocation5 + %s1057]]
  %s1059 = smul.u32 %s1058, 8
  %s1060 = scalar_lea.vmem %s1, %s1059
  %v1061 = vld [vmem:[%s1060] sm:$0xff]
  %1063 = vrot.lane.b32.xlu0 %v1061, 88
  %v1064 = vpop.permute.xlu0 %1063
  %1066 = vst.msk [vmem:[#allocation2 + $0x58] sm:$0xff] %vm169, %v1064
  %s1067 = sadd.s32 %s172, 4
  %s1068 = sld [smem:[#allocation5 + %s1067]]
  %s1069 = smul.u32 %s1068, 8
  %s1070 = scalar_lea.vmem %s1, %s1069
  %v1071 = vld [vmem:[%s1070] sm:$0xff]
  %1073 = vrot.lane.b32.xlu0 %v1071, 96
  %v1074 = vpop.permute.xlu0 %1073
  %1076 = vst.msk [vmem:[#allocation2 + $0x60] sm:$0xff] %vm181, %v1074
  %s1077 = sadd.s32 %s184, 4
  %s1078 = sld [smem:[#allocation5 + %s1077]]
  %s1079 = smul.u32 %s1078, 8
  %s1080 = scalar_lea.vmem %s1, %s1079
  %v1081 = vld [vmem:[%s1080] sm:$0xff]
  %1083 = vrot.lane.b32.xlu0 %v1081, 104
  %v1084 = vpop.permute.xlu0 %1083
  %1086 = vst.msk [vmem:[#allocation2 + $0x68] sm:$0xff] %vm193, %v1084
  %s1087 = sadd.s32 %s196, 4
  %s1088 = sld [smem:[#allocation5 + %s1087]]
  %s1089 = smul.u32 %s1088, 8
  %s1090 = scalar_lea.vmem %s1, %s1089
  %v1091 = vld [vmem:[%s1090] sm:$0xff]
  %1093 = vrot.lane.b32.xlu0 %v1091, 112
  %v1094 = vpop.permute.xlu0 %1093
  %1096 = vst.msk [vmem:[#allocation2 + $0x70] sm:$0xff] %vm205, %v1094
  %s1097 = sadd.s32 %s208, 4
  %s1098 = sld [smem:[#allocation5 + %s1097]]
  %s1099 = smul.u32 %s1098, 8
  %s1100 = scalar_lea.vmem %s1, %s1099
  %v1101 = vld [vmem:[%s1100] sm:$0xff]
  %1103 = vrot.lane.b32.xlu0 %v1101, 120
  %v1104 = vpop.permute.xlu0 %1103
  %1106 = vst.msk [vmem:[#allocation2 + $0x78] sm:$0xff] %vm217, %v1104
  %v1107 = vld [vmem:[#allocation3] sm:$0xff]
  %v1108 = vld [vmem:[#allocation2] sm:$0xff]
  %v1109 = vld [vmem:[#allocation2 + $0x8] sm:$0xff]
  %v1110 = vld [vmem:[#allocation2 + $0x10] sm:$0xff]
  %v1111 = vld [vmem:[#allocation2 + $0x18] sm:$0xff]
  %v1112 = vld [vmem:[#allocation2 + $0x20] sm:$0xff]
  %v1113 = vld [vmem:[#allocation2 + $0x28] sm:$0xff]
  %v1114 = vld [vmem:[#allocation2 + $0x30] sm:$0xff]
  %v1115 = vld [vmem:[#allocation2 + $0x38] sm:$0xff]
  %v1116 = vld [vmem:[#allocation2 + $0x40] sm:$0xff]
  %v1117 = vld [vmem:[#allocation2 + $0x48] sm:$0xff]
  %v1118 = vld [vmem:[#allocation2 + $0x50] sm:$0xff]
  %v1119 = vld [vmem:[#allocation2 + $0x58] sm:$0xff]
  %v1120 = vld [vmem:[#allocation2 + $0x60] sm:$0xff]
  %v1121 = vld [vmem:[#allocation2 + $0x68] sm:$0xff]
  %v1122 = vld [vmem:[#allocation2 + $0x70] sm:$0xff]
  %v1123 = vld [vmem:[#allocation2 + $0x78] sm:$0xff]
  %1124 = vmatprep.subr.mxu0 0.0
  %1125 = vmatpush1.msra.mxu0 %v1123
  %1126 = vmatprep.subr.mxu0 0.0
  %1127 = vmatpush1.msra.mxu0 %v1122
  %1128 = vmatprep.subr.mxu0 0.0
  %1129 = vmatpush1.msra.mxu0 %v1121
  %1130 = vmatprep.subr.mxu0 0.0
  %1131 = vmatpush1.msra.mxu0 %v1120
  %1132 = vmatprep.subr.mxu0 0.0
  %1133 = vmatpush1.msra.mxu0 %v1119
  %1134 = vmatprep.subr.mxu0 0.0
  %1135 = vmatpush1.msra.mxu0 %v1118
  %1136 = vmatprep.subr.mxu0 0.0
  %1137 = vmatpush1.msra.mxu0 %v1117
  %1138 = vmatprep.subr.mxu0 0.0
  %1139 = vmatpush1.msra.mxu0 %v1116
  %1140 = vmatprep.subr.mxu0 0.0
  %1141 = vmatpush1.msra.mxu0 %v1115
  %1142 = vmatprep.subr.mxu0 0.0
  %1143 = vmatpush1.msra.mxu0 %v1114
  %1144 = vmatprep.subr.mxu0 0.0
  %1145 = vmatpush1.msra.mxu0 %v1113
  %1146 = vmatprep.subr.mxu0 0.0
  %1147 = vmatpush1.msra.mxu0 %v1112
  %1148 = vmatprep.subr.mxu0 0.0
  %1149 = vmatpush1.msra.mxu0 %v1111
  %1150 = vmatprep.subr.mxu0 0.0
  %1151 = vmatpush1.msra.mxu0 %v1110
  %1152 = vmatprep.subr.mxu0 0.0
  %1153 = vmatpush1.msra.mxu0 %v1109
  %1154 = vmatprep.subr.mxu0 0.0
  %1155 = vmatpush1.msra.mxu0 %v1108
  %1156 = vmatprep.subr.mxu0 0.0
  %1157 = vmatpush2.msra.mxu0 0.0
  %1158 = vmatprep.subr.mxu0 0.0
  %1159 = vmatpush2.msra.mxu0 0.0
  %1160 = vmatprep.subr.mxu0 0.0
  %1161 = vmatpush2.msra.mxu0 0.0
  %1162 = vmatprep.subr.mxu0 0.0
  %1163 = vmatpush2.msra.mxu0 0.0
  %1164 = vmatprep.subr.mxu0 0.0
  %1165 = vmatpush2.msra.mxu0 0.0
  %1166 = vmatprep.subr.mxu0 0.0
  %1167 = vmatpush2.msra.mxu0 0.0
  %1168 = vmatprep.subr.mxu0 0.0
  %1169 = vmatpush2.msra.mxu0 0.0
  %1170 = vmatprep.subr.mxu0 0.0
  %1171 = vmatpush2.msra.mxu0 0.0
  %1172 = vmatprep.subr.mxu0 0.0
  %1173 = vmatpush2.msra.mxu0 0.0
  %1174 = vmatprep.subr.mxu0 0.0
  %1175 = vmatpush2.msra.mxu0 0.0
  %1176 = vmatprep.subr.mxu0 0.0
  %1177 = vmatpush2.msra.mxu0 0.0
  %1178 = vmatprep.subr.mxu0 0.0
  %1179 = vmatpush2.msra.mxu0 0.0
  %1180 = vmatprep.subr.mxu0 0.0
  %1181 = vmatpush2.msra.mxu0 0.0
  %1182 = vmatprep.subr.mxu0 0.0
  %1183 = vmatpush2.msra.mxu0 0.0
  %1184 = vmatprep.subr.mxu0 0.0
  %1185 = vmatpush2.msra.mxu0 0.0
  %1186 = vmatprep.subr.mxu0 0.0
  %1187 = vmatpush2.msra.mxu0 0.0
  %1188 = vmatprep.mubr.f32.mxu0 0.0
  %1189 = vmatmul.mubr.f32.gmra.mxu0 %v1107
  %v1190 = vpop.f32.mrf.mxu0
  %v1191 = vadd.f32 0.0, %v1190
  %v1192 = vpop.f32.mrf.mxu0
  %1193 = vdwg.mxu0
  %1194 = vst [vmem:[#allocation3] sm:$0xff] %v1191
  %s1195 = sadd.s32 %s32, 5
  %s1196 = sld [smem:[#allocation5 + %s1195]]
  %s1197 = smul.u32 %s1196, 8
  %s1198 = scalar_lea.vmem %s1, %s1197
  %v1199 = vld [vmem:[%s1198] sm:$0xff]
  %1200 = vst.msk [vmem:[#allocation2] sm:$0xff] %vm37, %v1199
  %s1201 = sadd.s32 %s40, 5
  %s1202 = sld [smem:[#allocation5 + %s1201]]
  %s1203 = smul.u32 %s1202, 8
  %s1204 = scalar_lea.vmem %s1, %s1203
  %v1205 = vld [vmem:[%s1204] sm:$0xff]
  %1207 = vrot.lane.b32.xlu0 %v1205, 8
  %v1208 = vpop.permute.xlu0 %1207
  %1210 = vst.msk [vmem:[#allocation2 + $0x8] sm:$0xff] %vm49, %v1208
  %s1211 = sadd.s32 %s52, 5
  %s1212 = sld [smem:[#allocation5 + %s1211]]
  %s1213 = smul.u32 %s1212, 8
  %s1214 = scalar_lea.vmem %s1, %s1213
  %v1215 = vld [vmem:[%s1214] sm:$0xff]
  %1217 = vrot.lane.b32.xlu0 %v1215, 16
  %v1218 = vpop.permute.xlu0 %1217
  %1220 = vst.msk [vmem:[#allocation2 + $0x10] sm:$0xff] %vm61, %v1218
  %s1221 = sadd.s32 %s64, 5
  %s1222 = sld [smem:[#allocation5 + %s1221]]
  %s1223 = smul.u32 %s1222, 8
  %s1224 = scalar_lea.vmem %s1, %s1223
  %v1225 = vld [vmem:[%s1224] sm:$0xff]
  %1227 = vrot.lane.b32.xlu0 %v1225, 24
  %v1228 = vpop.permute.xlu0 %1227
  %1230 = vst.msk [vmem:[#allocation2 + $0x18] sm:$0xff] %vm73, %v1228
  %s1231 = sadd.s32 %s76, 5
  %s1232 = sld [smem:[#allocation5 + %s1231]]
  %s1233 = smul.u32 %s1232, 8
  %s1234 = scalar_lea.vmem %s1, %s1233
  %v1235 = vld [vmem:[%s1234] sm:$0xff]
  %1237 = vrot.lane.b32.xlu0 %v1235, 32
  %v1238 = vpop.permute.xlu0 %1237
  %1240 = vst.msk [vmem:[#allocation2 + $0x20] sm:$0xff] %vm85, %v1238
  %s1241 = sadd.s32 %s88, 5
  %s1242 = sld [smem:[#allocation5 + %s1241]]
  %s1243 = smul.u32 %s1242, 8
  %s1244 = scalar_lea.vmem %s1, %s1243
  %v1245 = vld [vmem:[%s1244] sm:$0xff]
  %1247 = vrot.lane.b32.xlu0 %v1245, 40
  %v1248 = vpop.permute.xlu0 %1247
  %1250 = vst.msk [vmem:[#allocation2 + $0x28] sm:$0xff] %vm97, %v1248
  %s1251 = sadd.s32 %s100, 5
  %s1252 = sld [smem:[#allocation5 + %s1251]]
  %s1253 = smul.u32 %s1252, 8
  %s1254 = scalar_lea.vmem %s1, %s1253
  %v1255 = vld [vmem:[%s1254] sm:$0xff]
  %1257 = vrot.lane.b32.xlu0 %v1255, 48
  %v1258 = vpop.permute.xlu0 %1257
  %1260 = vst.msk [vmem:[#allocation2 + $0x30] sm:$0xff] %vm109, %v1258
  %s1261 = sadd.s32 %s112, 5
  %s1262 = sld [smem:[#allocation5 + %s1261]]
  %s1263 = smul.u32 %s1262, 8
  %s1264 = scalar_lea.vmem %s1, %s1263
  %v1265 = vld [vmem:[%s1264] sm:$0xff]
  %1267 = vrot.lane.b32.xlu0 %v1265, 56
  %v1268 = vpop.permute.xlu0 %1267
  %1270 = vst.msk [vmem:[#allocation2 + $0x38] sm:$0xff] %vm121, %v1268
  %s1271 = sadd.s32 %s124, 5
  %s1272 = sld [smem:[#allocation5 + %s1271]]
  %s1273 = smul.u32 %s1272, 8
  %s1274 = scalar_lea.vmem %s1, %s1273
  %v1275 = vld [vmem:[%s1274] sm:$0xff]
  %1277 = vrot.lane.b32.xlu0 %v1275, 64
  %v1278 = vpop.permute.xlu0 %1277
  %1280 = vst.msk [vmem:[#allocation2 + $0x40] sm:$0xff] %vm133, %v1278
  %s1281 = sadd.s32 %s136, 5
  %s1282 = sld [smem:[#allocation5 + %s1281]]
  %s1283 = smul.u32 %s1282, 8
  %s1284 = scalar_lea.vmem %s1, %s1283
  %v1285 = vld [vmem:[%s1284] sm:$0xff]
  %1287 = vrot.lane.b32.xlu0 %v1285, 72
  %v1288 = vpop.permute.xlu0 %1287
  %1290 = vst.msk [vmem:[#allocation2 + $0x48] sm:$0xff] %vm145, %v1288
  %s1291 = sadd.s32 %s148, 5
  %s1292 = sld [smem:[#allocation5 + %s1291]]
  %s1293 = smul.u32 %s1292, 8
  %s1294 = scalar_lea.vmem %s1, %s1293
  %v1295 = vld [vmem:[%s1294] sm:$0xff]
  %1297 = vrot.lane.b32.xlu0 %v1295, 80
  %v1298 = vpop.permute.xlu0 %1297
  %1300 = vst.msk [vmem:[#allocation2 + $0x50] sm:$0xff] %vm157, %v1298
  %s1301 = sadd.s32 %s160, 5
  %s1302 = sld [smem:[#allocation5 + %s1301]]
  %s1303 = smul.u32 %s1302, 8
  %s1304 = scalar_lea.vmem %s1, %s1303
  %v1305 = vld [vmem:[%s1304] sm:$0xff]
  %1307 = vrot.lane.b32.xlu0 %v1305, 88
  %v1308 = vpop.permute.xlu0 %1307
  %1310 = vst.msk [vmem:[#allocation2 + $0x58] sm:$0xff] %vm169, %v1308
  %s1311 = sadd.s32 %s172, 5
  %s1312 = sld [smem:[#allocation5 + %s1311]]
  %s1313 = smul.u32 %s1312, 8
  %s1314 = scalar_lea.vmem %s1, %s1313
  %v1315 = vld [vmem:[%s1314] sm:$0xff]
  %1317 = vrot.lane.b32.xlu0 %v1315, 96
  %v1318 = vpop.permute.xlu0 %1317
  %1320 = vst.msk [vmem:[#allocation2 + $0x60] sm:$0xff] %vm181, %v1318
  %s1321 = sadd.s32 %s184, 5
  %s1322 = sld [smem:[#allocation5 + %s1321]]
  %s1323 = smul.u32 %s1322, 8
  %s1324 = scalar_lea.vmem %s1, %s1323
  %v1325 = vld [vmem:[%s1324] sm:$0xff]
  %1327 = vrot.lane.b32.xlu0 %v1325, 104
  %v1328 = vpop.permute.xlu0 %1327
  %1330 = vst.msk [vmem:[#allocation2 + $0x68] sm:$0xff] %vm193, %v1328
  %s1331 = sadd.s32 %s196, 5
  %s1332 = sld [smem:[#allocation5 + %s1331]]
  %s1333 = smul.u32 %s1332, 8
  %s1334 = scalar_lea.vmem %s1, %s1333
  %v1335 = vld [vmem:[%s1334] sm:$0xff]
  %1337 = vrot.lane.b32.xlu0 %v1335, 112
  %v1338 = vpop.permute.xlu0 %1337
  %1340 = vst.msk [vmem:[#allocation2 + $0x70] sm:$0xff] %vm205, %v1338
  %s1341 = sadd.s32 %s208, 5
  %s1342 = sld [smem:[#allocation5 + %s1341]]
  %s1343 = smul.u32 %s1342, 8
  %s1344 = scalar_lea.vmem %s1, %s1343
  %v1345 = vld [vmem:[%s1344] sm:$0xff]
  %1347 = vrot.lane.b32.xlu0 %v1345, 120
  %v1348 = vpop.permute.xlu0 %1347
  %1350 = vst.msk [vmem:[#allocation2 + $0x78] sm:$0xff] %vm217, %v1348
  %v1351 = vld [vmem:[#allocation3] sm:$0xff]
  %v1352 = vld [vmem:[#allocation2] sm:$0xff]
  %v1353 = vld [vmem:[#allocation2 + $0x8] sm:$0xff]
  %v1354 = vld [vmem:[#allocation2 + $0x10] sm:$0xff]
  %v1355 = vld [vmem:[#allocation2 + $0x18] sm:$0xff]
  %v1356 = vld [vmem:[#allocation2 + $0x20] sm:$0xff]
  %v1357 = vld [vmem:[#allocation2 + $0x28] sm:$0xff]
  %v1358 = vld [vmem:[#allocation2 + $0x30] sm:$0xff]
  %v1359 = vld [vmem:[#allocation2 + $0x38] sm:$0xff]
  %v1360 = vld [vmem:[#allocation2 + $0x40] sm:$0xff]
  %v1361 = vld [vmem:[#allocation2 + $0x48] sm:$0xff]
  %v1362 = vld [vmem:[#allocation2 + $0x50] sm:$0xff]
  %v1363 = vld [vmem:[#allocation2 + $0x58] sm:$0xff]
  %v1364 = vld [vmem:[#allocation2 + $0x60] sm:$0xff]
  %v1365 = vld [vmem:[#allocation2 + $0x68] sm:$0xff]
  %v1366 = vld [vmem:[#allocation2 + $0x70] sm:$0xff]
  %v1367 = vld [vmem:[#allocation2 + $0x78] sm:$0xff]
  %1368 = vmatprep.subr.mxu0 0.0
  %1369 = vmatpush1.msra.mxu0 %v1367
  %1370 = vmatprep.subr.mxu0 0.0
  %1371 = vmatpush1.msra.mxu0 %v1366
  %1372 = vmatprep.subr.mxu0 0.0
  %1373 = vmatpush1.msra.mxu0 %v1365
  %1374 = vmatprep.subr.mxu0 0.0
  %1375 = vmatpush1.msra.mxu0 %v1364
  %1376 = vmatprep.subr.mxu0 0.0
  %1377 = vmatpush1.msra.mxu0 %v1363
  %1378 = vmatprep.subr.mxu0 0.0
  %1379 = vmatpush1.msra.mxu0 %v1362
  %1380 = vmatprep.subr.mxu0 0.0
  %1381 = vmatpush1.msra.mxu0 %v1361
  %1382 = vmatprep.subr.mxu0 0.0
  %1383 = vmatpush1.msra.mxu0 %v1360
  %1384 = vmatprep.subr.mxu0 0.0
  %1385 = vmatpush1.msra.mxu0 %v1359
  %1386 = vmatprep.subr.mxu0 0.0
  %1387 = vmatpush1.msra.mxu0 %v1358
  %1388 = vmatprep.subr.mxu0 0.0
  %1389 = vmatpush1.msra.mxu0 %v1357
  %1390 = vmatprep.subr.mxu0 0.0
  %1391 = vmatpush1.msra.mxu0 %v1356
  %1392 = vmatprep.subr.mxu0 0.0
  %1393 = vmatpush1.msra.mxu0 %v1355
  %1394 = vmatprep.subr.mxu0 0.0
  %1395 = vmatpush1.msra.mxu0 %v1354
  %1396 = vmatprep.subr.mxu0 0.0
  %1397 = vmatpush1.msra.mxu0 %v1353
  %1398 = vmatprep.subr.mxu0 0.0
  %1399 = vmatpush1.msra.mxu0 %v1352
  %1400 = vmatprep.subr.mxu0 0.0
  %1401 = vmatpush2.msra.mxu0 0.0
  %1402 = vmatprep.subr.mxu0 0.0
  %1403 = vmatpush2.msra.mxu0 0.0
  %1404 = vmatprep.subr.mxu0 0.0
  %1405 = vmatpush2.msra.mxu0 0.0
  %1406 = vmatprep.subr.mxu0 0.0
  %1407 = vmatpush2.msra.mxu0 0.0
  %1408 = vmatprep.subr.mxu0 0.0
  %1409 = vmatpush2.msra.mxu0 0.0
  %1410 = vmatprep.subr.mxu0 0.0
  %1411 = vmatpush2.msra.mxu0 0.0
  %1412 = vmatprep.subr.mxu0 0.0
  %1413 = vmatpush2.msra.mxu0 0.0
  %1414 = vmatprep.subr.mxu0 0.0
  %1415 = vmatpush2.msra.mxu0 0.0
  %1416 = vmatprep.subr.mxu0 0.0
  %1417 = vmatpush2.msra.mxu0 0.0
  %1418 = vmatprep.subr.mxu0 0.0
  %1419 = vmatpush2.msra.mxu0 0.0
  %1420 = vmatprep.subr.mxu0 0.0
  %1421 = vmatpush2.msra.mxu0 0.0
  %1422 = vmatprep.subr.mxu0 0.0
  %1423 = vmatpush2.msra.mxu0 0.0
  %1424 = vmatprep.subr.mxu0 0.0
  %1425 = vmatpush2.msra.mxu0 0.0
  %1426 = vmatprep.subr.mxu0 0.0
  %1427 = vmatpush2.msra.mxu0 0.0
  %1428 = vmatprep.subr.mxu0 0.0
  %1429 = vmatpush2.msra.mxu0 0.0
  %1430 = vmatprep.subr.mxu0 0.0
  %1431 = vmatpush2.msra.mxu0 0.0
  %1432 = vmatprep.mubr.f32.mxu0 0.0
  %1433 = vmatmul.mubr.f32.gmra.mxu0 %v1351
  %v1434 = vpop.f32.mrf.mxu0
  %v1435 = vadd.f32 0.0, %v1434
  %v1436 = vpop.f32.mrf.mxu0
  %1437 = vdwg.mxu0
  %1438 = vst [vmem:[#allocation3] sm:$0xff] %v1435
  %s1439 = sadd.s32 %s32, 6
  %s1440 = sld [smem:[#allocation5 + %s1439]]
  %s1441 = smul.u32 %s1440, 8
  %s1442 = scalar_lea.vmem %s1, %s1441
  %v1443 = vld [vmem:[%s1442] sm:$0xff]
  %1444 = vst.msk [vmem:[#allocation2] sm:$0xff] %vm37, %v1443
  %s1445 = sadd.s32 %s40, 6
  %s1446 = sld [smem:[#allocation5 + %s1445]]
  %s1447 = smul.u32 %s1446, 8
  %s1448 = scalar_lea.vmem %s1, %s1447
  %v1449 = vld [vmem:[%s1448] sm:$0xff]
  %1451 = vrot.lane.b32.xlu0 %v1449, 8
  %v1452 = vpop.permute.xlu0 %1451
  %1454 = vst.msk [vmem:[#allocation2 + $0x8] sm:$0xff] %vm49, %v1452
  %s1455 = sadd.s32 %s52, 6
  %s1456 = sld [smem:[#allocation5 + %s1455]]
  %s1457 = smul.u32 %s1456, 8
  %s1458 = scalar_lea.vmem %s1, %s1457
  %v1459 = vld [vmem:[%s1458] sm:$0xff]
  %1461 = vrot.lane.b32.xlu0 %v1459, 16
  %v1462 = vpop.permute.xlu0 %1461
  %1464 = vst.msk [vmem:[#allocation2 + $0x10] sm:$0xff] %vm61, %v1462
  %s1465 = sadd.s32 %s64, 6
  %s1466 = sld [smem:[#allocation5 + %s1465]]
  %s1467 = smul.u32 %s1466, 8
  %s1468 = scalar_lea.vmem %s1, %s1467
  %v1469 = vld [vmem:[%s1468] sm:$0xff]
  %1471 = vrot.lane.b32.xlu0 %v1469, 24
  %v1472 = vpop.permute.xlu0 %1471
  %1474 = vst.msk [vmem:[#allocation2 + $0x18] sm:$0xff] %vm73, %v1472
  %s1475 = sadd.s32 %s76, 6
  %s1476 = sld [smem:[#allocation5 + %s1475]]
  %s1477 = smul.u32 %s1476, 8
  %s1478 = scalar_lea.vmem %s1, %s1477
  %v1479 = vld [vmem:[%s1478] sm:$0xff]
  %1481 = vrot.lane.b32.xlu0 %v1479, 32
  %v1482 = vpop.permute.xlu0 %1481
  %1484 = vst.msk [vmem:[#allocation2 + $0x20] sm:$0xff] %vm85, %v1482
  %s1485 = sadd.s32 %s88, 6
  %s1486 = sld [smem:[#allocation5 + %s1485]]
  %s1487 = smul.u32 %s1486, 8
  %s1488 = scalar_lea.vmem %s1, %s1487
  %v1489 = vld [vmem:[%s1488] sm:$0xff]
  %1491 = vrot.lane.b32.xlu0 %v1489, 40
  %v1492 = vpop.permute.xlu0 %1491
  %1494 = vst.msk [vmem:[#allocation2 + $0x28] sm:$0xff] %vm97, %v1492
  %s1495 = sadd.s32 %s100, 6
  %s1496 = sld [smem:[#allocation5 + %s1495]]
  %s1497 = smul.u32 %s1496, 8
  %s1498 = scalar_lea.vmem %s1, %s1497
  %v1499 = vld [vmem:[%s1498] sm:$0xff]
  %1501 = vrot.lane.b32.xlu0 %v1499, 48
  %v1502 = vpop.permute.xlu0 %1501
  %1504 = vst.msk [vmem:[#allocation2 + $0x30] sm:$0xff] %vm109, %v1502
  %s1505 = sadd.s32 %s112, 6
  %s1506 = sld [smem:[#allocation5 + %s1505]]
  %s1507 = smul.u32 %s1506, 8
  %s1508 = scalar_lea.vmem %s1, %s1507
  %v1509 = vld [vmem:[%s1508] sm:$0xff]
  %1511 = vrot.lane.b32.xlu0 %v1509, 56
  %v1512 = vpop.permute.xlu0 %1511
  %1514 = vst.msk [vmem:[#allocation2 + $0x38] sm:$0xff] %vm121, %v1512
  %s1515 = sadd.s32 %s124, 6
  %s1516 = sld [smem:[#allocation5 + %s1515]]
  %s1517 = smul.u32 %s1516, 8
  %s1518 = scalar_lea.vmem %s1, %s1517
  %v1519 = vld [vmem:[%s1518] sm:$0xff]
  %1521 = vrot.lane.b32.xlu0 %v1519, 64
  %v1522 = vpop.permute.xlu0 %1521
  %1524 = vst.msk [vmem:[#allocation2 + $0x40] sm:$0xff] %vm133, %v1522
  %s1525 = sadd.s32 %s136, 6
  %s1526 = sld [smem:[#allocation5 + %s1525]]
  %s1527 = smul.u32 %s1526, 8
  %s1528 = scalar_lea.vmem %s1, %s1527
  %v1529 = vld [vmem:[%s1528] sm:$0xff]
  %1531 = vrot.lane.b32.xlu0 %v1529, 72
  %v1532 = vpop.permute.xlu0 %1531
  %1534 = vst.msk [vmem:[#allocation2 + $0x48] sm:$0xff] %vm145, %v1532
  %s1535 = sadd.s32 %s148, 6
  %s1536 = sld [smem:[#allocation5 + %s1535]]
  %s1537 = smul.u32 %s1536, 8
  %s1538 = scalar_lea.vmem %s1, %s1537
  %v1539 = vld [vmem:[%s1538] sm:$0xff]
  %1541 = vrot.lane.b32.xlu0 %v1539, 80
  %v1542 = vpop.permute.xlu0 %1541
  %1544 = vst.msk [vmem:[#allocation2 + $0x50] sm:$0xff] %vm157, %v1542
  %s1545 = sadd.s32 %s160, 6
  %s1546 = sld [smem:[#allocation5 + %s1545]]
  %s1547 = smul.u32 %s1546, 8
  %s1548 = scalar_lea.vmem %s1, %s1547
  %v1549 = vld [vmem:[%s1548] sm:$0xff]
  %1551 = vrot.lane.b32.xlu0 %v1549, 88
  %v1552 = vpop.permute.xlu0 %1551
  %1554 = vst.msk [vmem:[#allocation2 + $0x58] sm:$0xff] %vm169, %v1552
  %s1555 = sadd.s32 %s172, 6
  %s1556 = sld [smem:[#allocation5 + %s1555]]
  %s1557 = smul.u32 %s1556, 8
  %s1558 = scalar_lea.vmem %s1, %s1557
  %v1559 = vld [vmem:[%s1558] sm:$0xff]
  %1561 = vrot.lane.b32.xlu0 %v1559, 96
  %v1562 = vpop.permute.xlu0 %1561
  %1564 = vst.msk [vmem:[#allocation2 + $0x60] sm:$0xff] %vm181, %v1562
  %s1565 = sadd.s32 %s184, 6
  %s1566 = sld [smem:[#allocation5 + %s1565]]
  %s1567 = smul.u32 %s1566, 8
  %s1568 = scalar_lea.vmem %s1, %s1567
  %v1569 = vld [vmem:[%s1568] sm:$0xff]
  %1571 = vrot.lane.b32.xlu0 %v1569, 104
  %v1572 = vpop.permute.xlu0 %1571
  %1574 = vst.msk [vmem:[#allocation2 + $0x68] sm:$0xff] %vm193, %v1572
  %s1575 = sadd.s32 %s196, 6
  %s1576 = sld [smem:[#allocation5 + %s1575]]
  %s1577 = smul.u32 %s1576, 8
  %s1578 = scalar_lea.vmem %s1, %s1577
  %v1579 = vld [vmem:[%s1578] sm:$0xff]
  %1581 = vrot.lane.b32.xlu0 %v1579, 112
  %v1582 = vpop.permute.xlu0 %1581
  %1584 = vst.msk [vmem:[#allocation2 + $0x70] sm:$0xff] %vm205, %v1582
  %s1585 = sadd.s32 %s208, 6
  %s1586 = sld [smem:[#allocation5 + %s1585]]
  %s1587 = smul.u32 %s1586, 8
  %s1588 = scalar_lea.vmem %s1, %s1587
  %v1589 = vld [vmem:[%s1588] sm:$0xff]
  %1591 = vrot.lane.b32.xlu0 %v1589, 120
  %v1592 = vpop.permute.xlu0 %1591
  %1594 = vst.msk [vmem:[#allocation2 + $0x78] sm:$0xff] %vm217, %v1592
  %v1595 = vld [vmem:[#allocation3] sm:$0xff]
  %v1596 = vld [vmem:[#allocation2] sm:$0xff]
  %v1597 = vld [vmem:[#allocation2 + $0x8] sm:$0xff]
  %v1598 = vld [vmem:[#allocation2 + $0x10] sm:$0xff]
  %v1599 = vld [vmem:[#allocation2 + $0x18] sm:$0xff]
  %v1600 = vld [vmem:[#allocation2 + $0x20] sm:$0xff]
  %v1601 = vld [vmem:[#allocation2 + $0x28] sm:$0xff]
  %v1602 = vld [vmem:[#allocation2 + $0x30] sm:$0xff]
  %v1603 = vld [vmem:[#allocation2 + $0x38] sm:$0xff]
  %v1604 = vld [vmem:[#allocation2 + $0x40] sm:$0xff]
  %v1605 = vld [vmem:[#allocation2 + $0x48] sm:$0xff]
  %v1606 = vld [vmem:[#allocation2 + $0x50] sm:$0xff]
  %v1607 = vld [vmem:[#allocation2 + $0x58] sm:$0xff]
  %v1608 = vld [vmem:[#allocation2 + $0x60] sm:$0xff]
  %v1609 = vld [vmem:[#allocation2 + $0x68] sm:$0xff]
  %v1610 = vld [vmem:[#allocation2 + $0x70] sm:$0xff]
  %v1611 = vld [vmem:[#allocation2 + $0x78] sm:$0xff]
  %1612 = vmatprep.subr.mxu0 0.0
  %1613 = vmatpush1.msra.mxu0 %v1611
  %1614 = vmatprep.subr.mxu0 0.0
  %1615 = vmatpush1.msra.mxu0 %v1610
  %1616 = vmatprep.subr.mxu0 0.0
  %1617 = vmatpush1.msra.mxu0 %v1609
  %1618 = vmatprep.subr.mxu0 0.0
  %1619 = vmatpush1.msra.mxu0 %v1608
  %1620 = vmatprep.subr.mxu0 0.0
  %1621 = vmatpush1.msra.mxu0 %v1607
  %1622 = vmatprep.subr.mxu0 0.0
  %1623 = vmatpush1.msra.mxu0 %v1606
  %1624 = vmatprep.subr.mxu0 0.0
  %1625 = vmatpush1.msra.mxu0 %v1605
  %1626 = vmatprep.subr.mxu0 0.0
  %1627 = vmatpush1.msra.mxu0 %v1604
  %1628 = vmatprep.subr.mxu0 0.0
  %1629 = vmatpush1.msra.mxu0 %v1603
  %1630 = vmatprep.subr.mxu0 0.0
  %1631 = vmatpush1.msra.mxu0 %v1602
  %1632 = vmatprep.subr.mxu0 0.0
  %1633 = vmatpush1.msra.mxu0 %v1601
  %1634 = vmatprep.subr.mxu0 0.0
  %1635 = vmatpush1.msra.mxu0 %v1600
  %1636 = vmatprep.subr.mxu0 0.0
  %1637 = vmatpush1.msra.mxu0 %v1599
  %1638 = vmatprep.subr.mxu0 0.0
  %1639 = vmatpush1.msra.mxu0 %v1598
  %1640 = vmatprep.subr.mxu0 0.0
  %1641 = vmatpush1.msra.mxu0 %v1597
  %1642 = vmatprep.subr.mxu0 0.0
  %1643 = vmatpush1.msra.mxu0 %v1596
  %1644 = vmatprep.subr.mxu0 0.0
  %1645 = vmatpush2.msra.mxu0 0.0
  %1646 = vmatprep.subr.mxu0 0.0
  %1647 = vmatpush2.msra.mxu0 0.0
  %1648 = vmatprep.subr.mxu0 0.0
  %1649 = vmatpush2.msra.mxu0 0.0
  %1650 = vmatprep.subr.mxu0 0.0
  %1651 = vmatpush2.msra.mxu0 0.0
  %1652 = vmatprep.subr.mxu0 0.0
  %1653 = vmatpush2.msra.mxu0 0.0
  %1654 = vmatprep.subr.mxu0 0.0
  %1655 = vmatpush2.msra.mxu0 0.0
  %1656 = vmatprep.subr.mxu0 0.0
  %1657 = vmatpush2.msra.mxu0 0.0
  %1658 = vmatprep.subr.mxu0 0.0
  %1659 = vmatpush2.msra.mxu0 0.0
  %1660 = vmatprep.subr.mxu0 0.0
  %1661 = vmatpush2.msra.mxu0 0.0
  %1662 = vmatprep.subr.mxu0 0.0
  %1663 = vmatpush2.msra.mxu0 0.0
  %1664 = vmatprep.subr.mxu0 0.0
  %1665 = vmatpush2.msra.mxu0 0.0
  %1666 = vmatprep.subr.mxu0 0.0
  %1667 = vmatpush2.msra.mxu0 0.0
  %1668 = vmatprep.subr.mxu0 0.0
  %1669 = vmatpush2.msra.mxu0 0.0
  %1670 = vmatprep.subr.mxu0 0.0
  %1671 = vmatpush2.msra.mxu0 0.0
  %1672 = vmatprep.subr.mxu0 0.0
  %1673 = vmatpush2.msra.mxu0 0.0
  %1674 = vmatprep.subr.mxu0 0.0
  %1675 = vmatpush2.msra.mxu0 0.0
  %1676 = vmatprep.mubr.f32.mxu0 0.0
  %1677 = vmatmul.mubr.f32.gmra.mxu0 %v1595
  %v1678 = vpop.f32.mrf.mxu0
  %v1679 = vadd.f32 0.0, %v1678
  %v1680 = vpop.f32.mrf.mxu0
  %1681 = vdwg.mxu0
  %1682 = vst [vmem:[#allocation3] sm:$0xff] %v1679
  %s1683 = sadd.s32 %s32, 7
  %s1684 = sld [smem:[#allocation5 + %s1683]]
  %s1685 = smul.u32 %s1684, 8
  %s1686 = scalar_lea.vmem %s1, %s1685
  %v1687 = vld [vmem:[%s1686] sm:$0xff]
  %1688 = vst.msk [vmem:[#allocation2] sm:$0xff] %vm37, %v1687
  %s1689 = sadd.s32 %s40, 7
  %s1690 = sld [smem:[#allocation5 + %s1689]]
  %s1691 = smul.u32 %s1690, 8
  %s1692 = scalar_lea.vmem %s1, %s1691
  %v1693 = vld [vmem:[%s1692] sm:$0xff]
  %1695 = vrot.lane.b32.xlu0 %v1693, 8
  %v1696 = vpop.permute.xlu0 %1695
  %1698 = vst.msk [vmem:[#allocation2 + $0x8] sm:$0xff] %vm49, %v1696
  %s1699 = sadd.s32 %s52, 7
  %s1700 = sld [smem:[#allocation5 + %s1699]]
  %s1701 = smul.u32 %s1700, 8
  %s1702 = scalar_lea.vmem %s1, %s1701
  %v1703 = vld [vmem:[%s1702] sm:$0xff]
  %1705 = vrot.lane.b32.xlu0 %v1703, 16
  %v1706 = vpop.permute.xlu0 %1705
  %1708 = vst.msk [vmem:[#allocation2 + $0x10] sm:$0xff] %vm61, %v1706
  %s1709 = sadd.s32 %s64, 7
  %s1710 = sld [smem:[#allocation5 + %s1709]]
  %s1711 = smul.u32 %s1710, 8
  %s1712 = scalar_lea.vmem %s1, %s1711
  %v1713 = vld [vmem:[%s1712] sm:$0xff]
  %1715 = vrot.lane.b32.xlu0 %v1713, 24
  %v1716 = vpop.permute.xlu0 %1715
  %1718 = vst.msk [vmem:[#allocation2 + $0x18] sm:$0xff] %vm73, %v1716
  %s1719 = sadd.s32 %s76, 7
  %s1720 = sld [smem:[#allocation5 + %s1719]]
  %s1721 = smul.u32 %s1720, 8
  %s1722 = scalar_lea.vmem %s1, %s1721
  %v1723 = vld [vmem:[%s1722] sm:$0xff]
  %1725 = vrot.lane.b32.xlu0 %v1723, 32
  %v1726 = vpop.permute.xlu0 %1725
  %1728 = vst.msk [vmem:[#allocation2 + $0x20] sm:$0xff] %vm85, %v1726
  %s1729 = sadd.s32 %s88, 7
  %s1730 = sld [smem:[#allocation5 + %s1729]]
  %s1731 = smul.u32 %s1730, 8
  %s1732 = scalar_lea.vmem %s1, %s1731
  %v1733 = vld [vmem:[%s1732] sm:$0xff]
  %1735 = vrot.lane.b32.xlu0 %v1733, 40
  %v1736 = vpop.permute.xlu0 %1735
  %1738 = vst.msk [vmem:[#allocation2 + $0x28] sm:$0xff] %vm97, %v1736
  %s1739 = sadd.s32 %s100, 7
  %s1740 = sld [smem:[#allocation5 + %s1739]]
  %s1741 = smul.u32 %s1740, 8
  %s1742 = scalar_lea.vmem %s1, %s1741
  %v1743 = vld [vmem:[%s1742] sm:$0xff]
  %1745 = vrot.lane.b32.xlu0 %v1743, 48
  %v1746 = vpop.permute.xlu0 %1745
  %1748 = vst.msk [vmem:[#allocation2 + $0x30] sm:$0xff] %vm109, %v1746
  %s1749 = sadd.s32 %s112, 7
  %s1750 = sld [smem:[#allocation5 + %s1749]]
  %s1751 = smul.u32 %s1750, 8
  %s1752 = scalar_lea.vmem %s1, %s1751
  %v1753 = vld [vmem:[%s1752] sm:$0xff]
  %1755 = vrot.lane.b32.xlu0 %v1753, 56
  %v1756 = vpop.permute.xlu0 %1755
  %1758 = vst.msk [vmem:[#allocation2 + $0x38] sm:$0xff] %vm121, %v1756
  %s1759 = sadd.s32 %s124, 7
  %s1760 = sld [smem:[#allocation5 + %s1759]]
  %s1761 = smul.u32 %s1760, 8
  %s1762 = scalar_lea.vmem %s1, %s1761
  %v1763 = vld [vmem:[%s1762] sm:$0xff]
  %1765 = vrot.lane.b32.xlu0 %v1763, 64
  %v1766 = vpop.permute.xlu0 %1765
  %1768 = vst.msk [vmem:[#allocation2 + $0x40] sm:$0xff] %vm133, %v1766
  %s1769 = sadd.s32 %s136, 7
  %s1770 = sld [smem:[#allocation5 + %s1769]]
  %s1771 = smul.u32 %s1770, 8
  %s1772 = scalar_lea.vmem %s1, %s1771
  %v1773 = vld [vmem:[%s1772] sm:$0xff]
  %1775 = vrot.lane.b32.xlu0 %v1773, 72
  %v1776 = vpop.permute.xlu0 %1775
  %1778 = vst.msk [vmem:[#allocation2 + $0x48] sm:$0xff] %vm145, %v1776
  %s1779 = sadd.s32 %s148, 7
  %s1780 = sld [smem:[#allocation5 + %s1779]]
  %s1781 = smul.u32 %s1780, 8
  %s1782 = scalar_lea.vmem %s1, %s1781
  %v1783 = vld [vmem:[%s1782] sm:$0xff]
  %1785 = vrot.lane.b32.xlu0 %v1783, 80
  %v1786 = vpop.permute.xlu0 %1785
  %1788 = vst.msk [vmem:[#allocation2 + $0x50] sm:$0xff] %vm157, %v1786
  %s1789 = sadd.s32 %s160, 7
  %s1790 = sld [smem:[#allocation5 + %s1789]]
  %s1791 = smul.u32 %s1790, 8
  %s1792 = scalar_lea.vmem %s1, %s1791
  %v1793 = vld [vmem:[%s1792] sm:$0xff]
  %1795 = vrot.lane.b32.xlu0 %v1793, 88
  %v1796 = vpop.permute.xlu0 %1795
  %1798 = vst.msk [vmem:[#allocation2 + $0x58] sm:$0xff] %vm169, %v1796
  %s1799 = sadd.s32 %s172, 7
  %s1800 = sld [smem:[#allocation5 + %s1799]]
  %s1801 = smul.u32 %s1800, 8
  %s1802 = scalar_lea.vmem %s1, %s1801
  %v1803 = vld [vmem:[%s1802] sm:$0xff]
  %1805 = vrot.lane.b32.xlu0 %v1803, 96
  %v1806 = vpop.permute.xlu0 %1805
  %1808 = vst.msk [vmem:[#allocation2 + $0x60] sm:$0xff] %vm181, %v1806
  %s1809 = sadd.s32 %s184, 7
  %s1810 = sld [smem:[#allocation5 + %s1809]]
  %s1811 = smul.u32 %s1810, 8
  %s1812 = scalar_lea.vmem %s1, %s1811
  %v1813 = vld [vmem:[%s1812] sm:$0xff]
  %1815 = vrot.lane.b32.xlu0 %v1813, 104
  %v1816 = vpop.permute.xlu0 %1815
  %1818 = vst.msk [vmem:[#allocation2 + $0x68] sm:$0xff] %vm193, %v1816
  %s1819 = sadd.s32 %s196, 7
  %s1820 = sld [smem:[#allocation5 + %s1819]]
  %s1821 = smul.u32 %s1820, 8
  %s1822 = scalar_lea.vmem %s1, %s1821
  %v1823 = vld [vmem:[%s1822] sm:$0xff]
  %1825 = vrot.lane.b32.xlu0 %v1823, 112
  %v1826 = vpop.permute.xlu0 %1825
  %1828 = vst.msk [vmem:[#allocation2 + $0x70] sm:$0xff] %vm205, %v1826
  %s1829 = sadd.s32 %s208, 7
  %s1830 = sld [smem:[#allocation5 + %s1829]]
  %s1831 = smul.u32 %s1830, 8
  %s1832 = scalar_lea.vmem %s1, %s1831
  %v1833 = vld [vmem:[%s1832] sm:$0xff]
  %1835 = vrot.lane.b32.xlu0 %v1833, 120
  %v1836 = vpop.permute.xlu0 %1835
  %1838 = vst.msk [vmem:[#allocation2 + $0x78] sm:$0xff] %vm217, %v1836
  %v1839 = vld [vmem:[#allocation3] sm:$0xff]
  %v1840 = vld [vmem:[#allocation2] sm:$0xff]
  %v1841 = vld [vmem:[#allocation2 + $0x8] sm:$0xff]
  %v1842 = vld [vmem:[#allocation2 + $0x10] sm:$0xff]
  %v1843 = vld [vmem:[#allocation2 + $0x18] sm:$0xff]
  %v1844 = vld [vmem:[#allocation2 + $0x20] sm:$0xff]
  %v1845 = vld [vmem:[#allocation2 + $0x28] sm:$0xff]
  %v1846 = vld [vmem:[#allocation2 + $0x30] sm:$0xff]
  %v1847 = vld [vmem:[#allocation2 + $0x38] sm:$0xff]
  %v1848 = vld [vmem:[#allocation2 + $0x40] sm:$0xff]
  %v1849 = vld [vmem:[#allocation2 + $0x48] sm:$0xff]
  %v1850 = vld [vmem:[#allocation2 + $0x50] sm:$0xff]
  %v1851 = vld [vmem:[#allocation2 + $0x58] sm:$0xff]
  %v1852 = vld [vmem:[#allocation2 + $0x60] sm:$0xff]
  %v1853 = vld [vmem:[#allocation2 + $0x68] sm:$0xff]
  %v1854 = vld [vmem:[#allocation2 + $0x70] sm:$0xff]
  %v1855 = vld [vmem:[#allocation2 + $0x78] sm:$0xff]
  %1856 = vmatprep.subr.mxu0 0.0
  %1857 = vmatpush1.msra.mxu0 %v1855
  %1858 = vmatprep.subr.mxu0 0.0
  %1859 = vmatpush1.msra.mxu0 %v1854
  %1860 = vmatprep.subr.mxu0 0.0
  %1861 = vmatpush1.msra.mxu0 %v1853
  %1862 = vmatprep.subr.mxu0 0.0
  %1863 = vmatpush1.msra.mxu0 %v1852
  %1864 = vmatprep.subr.mxu0 0.0
  %1865 = vmatpush1.msra.mxu0 %v1851
  %1866 = vmatprep.subr.mxu0 0.0
  %1867 = vmatpush1.msra.mxu0 %v1850
  %1868 = vmatprep.subr.mxu0 0.0
  %1869 = vmatpush1.msra.mxu0 %v1849
  %1870 = vmatprep.subr.mxu0 0.0
  %1871 = vmatpush1.msra.mxu0 %v1848
  %1872 = vmatprep.subr.mxu0 0.0
  %1873 = vmatpush1.msra.mxu0 %v1847
  %1874 = vmatprep.subr.mxu0 0.0
  %1875 = vmatpush1.msra.mxu0 %v1846
  %1876 = vmatprep.subr.mxu0 0.0
  %1877 = vmatpush1.msra.mxu0 %v1845
  %1878 = vmatprep.subr.mxu0 0.0
  %1879 = vmatpush1.msra.mxu0 %v1844
  %1880 = vmatprep.subr.mxu0 0.0
  %1881 = vmatpush1.msra.mxu0 %v1843
  %1882 = vmatprep.subr.mxu0 0.0
  %1883 = vmatpush1.msra.mxu0 %v1842
  %1884 = vmatprep.subr.mxu0 0.0
  %1885 = vmatpush1.msra.mxu0 %v1841
  %1886 = vmatprep.subr.mxu0 0.0
  %1887 = vmatpush1.msra.mxu0 %v1840
  %1888 = vmatprep.subr.mxu0 0.0
  %1889 = vmatpush2.msra.mxu0 0.0
  %1890 = vmatprep.subr.mxu0 0.0
  %1891 = vmatpush2.msra.mxu0 0.0
  %1892 = vmatprep.subr.mxu0 0.0
  %1893 = vmatpush2.msra.mxu0 0.0
  %1894 = vmatprep.subr.mxu0 0.0
  %1895 = vmatpush2.msra.mxu0 0.0
  %1896 = vmatprep.subr.mxu0 0.0
  %1897 = vmatpush2.msra.mxu0 0.0
  %1898 = vmatprep.subr.mxu0 0.0
  %1899 = vmatpush2.msra.mxu0 0.0
  %1900 = vmatprep.subr.mxu0 0.0
  %1901 = vmatpush2.msra.mxu0 0.0
  %1902 = vmatprep.subr.mxu0 0.0
  %1903 = vmatpush2.msra.mxu0 0.0
  %1904 = vmatprep.subr.mxu0 0.0
  %1905 = vmatpush2.msra.mxu0 0.0
  %1906 = vmatprep.subr.mxu0 0.0
  %1907 = vmatpush2.msra.mxu0 0.0
  %1908 = vmatprep.subr.mxu0 0.0
  %1909 = vmatpush2.msra.mxu0 0.0
  %1910 = vmatprep.subr.mxu0 0.0
  %1911 = vmatpush2.msra.mxu0 0.0
  %1912 = vmatprep.subr.mxu0 0.0
  %1913 = vmatpush2.msra.mxu0 0.0
  %1914 = vmatprep.subr.mxu0 0.0
  %1915 = vmatpush2.msra.mxu0 0.0
  %1916 = vmatprep.subr.mxu0 0.0
  %1917 = vmatpush2.msra.mxu0 0.0
  %1918 = vmatprep.subr.mxu0 0.0
  %1919 = vmatpush2.msra.mxu0 0.0
  %1920 = vmatprep.mubr.f32.mxu0 0.0
  %1921 = vmatmul.mubr.f32.gmra.mxu0 %v1839
  %v1922 = vpop.f32.mrf.mxu0
  %v1923 = vadd.f32 0.0, %v1922
  %v1924 = vpop.f32.mrf.mxu0
  %1925 = vdwg.mxu0
  %1926 = vst [vmem:[#allocation3] sm:$0xff] %v1923
  %v1927 = vld [vmem:[#allocation3] sm:$0xff]
  %1928 = vst [vmem:[%s2] sm:$0xff] %v1927
  // Predicated region
  $region6: #{_batched_chain_call.1} parent=0 // pred_check
    _
  $region7: #{_batched_chain_call.1} parent=0 // pred_check_branch
    %1930 = sbr.rel (0) target = $region9
  $region8: #{_batched_chain_call.1} parent=0 // pred_region
    _
  $region9: #{_batched_chain_call.1} parent=0 // pred_fallthru
    _
  // Predicated region
  $region10: #{_batched_chain_call.1} parent=0 // pred_check
    _
  $region11: #{_batched_chain_call.1} parent=0 // pred_check_branch
    %1932 = sbr.rel (0) target = $region13
  $region12: #{_batched_chain_call.1} parent=0 // pred_region
    _
  $region13: #{_batched_chain_call.1} parent=0 // pred_fallthru
    _

</llo_original>
